<compile_context>
chip_gen: v7x
topology: tpu7x:2x2x1
jax: 0.10.0
libtpu: 0.0.40
codegen_flags: <defaults>
</compile_context>

<pallas_src>
import math
import functools

import jax
import jax.numpy as jnp
from jax.experimental import pallas as pl
from jax.experimental.pallas import tpu as pltpu


def _round_up(x, m):
    return (x + m - 1) // m * m


# ----------------------- Pallas conv (in-kernel im2col) -----------------------

def conv2d_flat(x, w_taps, cout, KH, KW, padding, compute_dtype=jnp.float32,
                max_tm=2048):
    """Stride-1 zero-padded conv, NCHW in / NCHW out.

    x       : (N, Cin, H, W)
    w_taps  : (KH*KW, Cout_pad, Cin) tap-major weights, Cout_pad multiple of 8.
    cout    : real number of output channels (<= Cout_pad); padding sliced off.
    """
    N, Cin, H, W = x.shape
    T, Cout_pad, Cin_w = w_taps.shape
    assert T == KH * KW and Cin_w == Cin and cout <= Cout_pad

    out_dtype = x.dtype
    Hp, Wp = H + 2 * padding, W + 2 * padding
    Ho, Wo = Hp - KH + 1, Wp - KW + 1
    M = Ho * Wp                                  # "wide" output columns / image
    max_off = (KH - 1) * Wp + (KW - 1)           # largest tap offset

    # Lane-dense M tiling: >=128 lanes per store; single tile when small.
    if M <= max_tm:
        TM = _round_up(M, 128)
    else:
        TM = 512
    Mpad = _round_up(M, TM)
    n_mt = Mpad // TM
    WIN = _round_up(TM + max_off, 128)           # per-tile input window (lanes)
    Lpad = (Mpad - TM) + WIN                     # flattened padded length

    # Pad spatially, flatten, tail-pad: (N, Cin, Lpad).  Every conv tap is now a
    # contiguous slice of the last axis (the extra columns it produces at
    # x' >= Wo wrap into the next row and are discarded below).
    xp = jnp.pad(x, ((0, 0), (0, 0), (padding, padding), (padding, padding)))
    xf = xp.reshape(N, Cin, Hp * Wp)
    xf = jnp.pad(xf, ((0, 0), (0, 0), (0, Lpad - Hp * Wp)))
    xf = xf.astype(compute_dtype)
    wt = w_taps.astype(compute_dtype)

    offs = tuple(kh * Wp + kw for kh in range(KH) for kw in range(KW))

    def kernel(x_ref, w_ref, o_ref):
        # x_ref: (1, Cin, Lpad) whole padded image (resident across M tiles)
        # w_ref: (T, Cout_pad, Cin) tap weights (resident)
        # o_ref: (1, Cout_pad, TM)  lane-dense output tile
        if n_mt == 1:
            win = x_ref[0]                                   # (Cin, WIN)
        else:
            base = pl.multiple_of(pl.program_id(1) * TM, 128)
            win = x_ref[0, :, pl.ds(base, WIN)]              # (Cin, WIN)
        acc = jnp.zeros((Cout_pad, TM), jnp.float32)
        for t, off in enumerate(offs):                       # unrolled, 9 taps
            acc = acc + jnp.dot(w_ref[t], win[:, off:off + TM],
                                preferred_element_type=jnp.float32)
        o_ref[0] = acc.astype(o_ref.dtype)

    cd_bytes = jnp.dtype(compute_dtype).itemsize
    od_bytes = jnp.dtype(out_dtype).itemsize
    need = (2 * (Cin * Lpad * cd_bytes + Cout_pad * TM * od_bytes)
            + T * Cout_pad * Cin * cd_bytes)
    vmem_limit = int(min(56 * 2**20, max(32 * 2**20, 3 * need)))

    out_wide = pl.pallas_call(
        kernel,
        out_shape=jax.ShapeDtypeStruct((N, Cout_pad, Mpad), out_dtype),
        grid_spec=pltpu.PrefetchScalarGridSpec(
            num_scalar_prefetch=0,
            grid=(N, n_mt),
            in_specs=[
                pl.BlockSpec((1, Cin, Lpad), lambda n, m: (n, 0, 0)),
                pl.BlockSpec((T, Cout_pad, Cin), lambda n, m: (0, 0, 0)),
            ],
            out_specs=pl.BlockSpec((1, Cout_pad, TM), lambda n, m: (n, 0, m)),
        ),
        compiler_params=pltpu.CompilerParams(
            dimension_semantics=("parallel", "parallel"),
            vmem_limit_bytes=vmem_limit),
    )(xf, wt)

    # Drop Cout padding, drop garbage (wrapped) columns, restore NCHW — all
    # cheap XLA slices / free reshapes.
    out = out_wide[:, :cout, :Ho * Wp].reshape(N, cout, Ho, Wp)[:, :, :, :Wo]
    return out


# ------------------------------ plain-JAX glue --------------------------------
# TODO(synk): fuse the nearest-upsample + add epilogue (broadcast-add of the
# low-res m2h / l2h / l2m slabs in VMEM) into the full-res kernel to remove the
# h2h HBM round trip; XLA currently fuses the repeats+adds into one pass.

def maxpool_nchw(x, k):
    # nn.MaxPool2d(kernel_size=(k,k), stride=k) on divisible H/W -> exact
    N, C, H, W = x.shape
    assert H % k == 0 and W % k == 0, "spatial dims must divide the pool size"
    return jnp.max(x.reshape(N, C, H // k, k, W // k, k), axis=(3, 5))


def upsample_nchw(x, s):
    # nn.Upsample(scale_factor=s, mode='nearest') -> exact
    return jnp.repeat(jnp.repeat(x, s, axis=2), s, axis=3)


# ------------------------------- parameters -----------------------------------

def init_params(key, in_channels, out_channels, kernel_size,
                a_l_in, a_m_in, a_h_in, a_l_out, a_m_out, a_h_out):
    """PyTorch-default-style init; weights stored HWIO per cross-frequency pair."""
    cins = {"l": int(a_l_in * in_channels),
            "m": int(a_m_in * in_channels),
            "h": int(a_h_in * in_channels)}
    couts = {"l": int(a_l_out * out_channels),
             "m": int(a_m_out * out_channels),
             "h": int(a_h_out * out_channels)}
    names = [f"{s}2{d}" for s in "lmh" for d in "lmh"]
    keys = jax.random.split(key, len(names))
    params = {}
    for k, name in zip(keys, names):
        cin, cout = cins[name[0]], couts[name[2]]
        fan_in = cin * kernel_size * kernel_size
        bound = 1.0 / math.sqrt(fan_in)
        w_oihw = jax.random.uniform(
            k, (cout, cin, kernel_size, kernel_size), jnp.float32, -bound, bound)
        params[name] = jnp.transpose(w_oihw, (2, 3, 1, 0))   # -> HWIO
    return params


def fuse_params(params):
    """Precompute (once) the fused, Cout-padded, tap-major weight tensors."""
    KH, KW, Ch, Ch_out = params["h2h"].shape
    Cm, Cm_out = params["m2m"].shape[2], params["m2m"].shape[3]
    Cl, Cl_out = params["l2l"].shape[2], params["l2l"].shape[3]
    dt = params["h2h"].dtype
    z = lambda ci, co: jnp.zeros((KH, KW, ci, co), dt)

    def pad_cout(w_hwio):
        co = w_hwio.shape[3]
        co_pad = _round_up(max(co, 8), 8)
        return jnp.pad(w_hwio, ((0, 0), (0, 0), (0, 0), (0, co_pad - co)))

    def taps(w_hwio):     # (KH,KW,Cin,Cout) -> (KH*KW, Cout, Cin)
        return jnp.transpose(w_hwio, (0, 1, 3, 2)).reshape(
            KH * KW, w_hwio.shape[3], w_hwio.shape[2])

    # mid-res conv: input [down(x_h) | x_m] -> output [out_m partial | m2h]
    w_mid = jnp.concatenate([
        jnp.concatenate([params["h2m"], z(Ch, Ch_out)], axis=3),
        jnp.concatenate([params["m2m"], params["m2h"]], axis=3),
    ], axis=2)
    # low-res conv: input [ddown(x_h) | down(x_m) | x_l] -> [out_l | l2m | l2h]
    # TODO(synk): once MXU-bound (big channels + bf16), split this into two dots
    # instead of carrying the zero blocks (~50% of the low-res matmul FLOPs).
    w_low = jnp.concatenate([
        jnp.concatenate([params["h2l"], z(Ch, Cm_out), z(Ch, Ch_out)], axis=3),
        jnp.concatenate([params["m2l"], z(Cm, Cm_out), z(Cm, Ch_out)], axis=3),
        jnp.concatenate([params["l2l"], params["l2m"], params["l2h"]], axis=3),
    ], axis=2)

    fused = {
        "h2h": taps(pad_cout(params["h2h"])),
        "h2m": taps(pad_cout(params["h2m"])),
        "h2l": taps(pad_cout(params["h2l"])),
        "mid": taps(pad_cout(w_mid)),
        "low": taps(pad_cout(w_low)),
    }
    meta = dict(KH=KH, KW=KW, Ch_out=Ch_out, Cm_out=Cm_out, Cl_out=Cl_out)
    return fused, meta


# ------------------------------ module forward --------------------------------

def octave_conv2_forward(fused, meta, x_h, x_m=None, x_l=None, *, padding=1,
                         compute_dtype=jnp.float32):
    """Mirrors OctaveConv2.forward; NCHW in / NCHW out."""
    KH, KW = meta["KH"], meta["KW"]
    Ch_out, Cm_out, Cl_out = meta["Ch_out"], meta["Cm_out"], meta["Cl_out"]
    conv = functools.partial(conv2d_flat, KH=KH, KW=KW, padding=padding,
                             compute_dtype=compute_dtype)

    if x_l is None or x_m is None:
        # High-frequency-only path (x passed as a single tensor in PyTorch).
        assert x_l is None and x_m is None, "provide both x_m and x_l, or neither"
        x_h2 = maxpool_nchw(x_h, 2)
        x_h4 = maxpool_nchw(x_h2, 2)
        out_h = conv(x_h, fused["h2h"], Ch_out)
        out_m = conv(x_h2, fused["h2m"], Cm_out)
        out_l = conv(x_h4, fused["h2l"], Cl_out)
        return out_h, out_m, out_l

    N, _, H, W = x_h.shape
    assert H % 4 == 0 and W % 4 == 0, "H, W must be divisible by 4"
    assert x_m.shape[0] == N and x_m.shape[2:] == (H // 2, W // 2)
    assert x_l.shape[0] == N and x_l.shape[2:] == (H // 4, W // 4)

    x_h2 = maxpool_nchw(x_h, 2)
    x_h4 = maxpool_nchw(x_h2, 2)          # 4x4/stride-4 pool == two 2x pools
    x_m2 = maxpool_nchw(x_m, 2)

    # 3 fused Pallas convs (instead of 9 convs + 6 adds).
    h2h = conv(x_h, fused["h2h"], Ch_out)

    mid = conv(jnp.concatenate([x_h2, x_m], axis=1), fused["mid"],
               Cm_out + Ch_out)
    out_m_part, m2h = mid[:, :Cm_out], mid[:, Cm_out:]

    low = conv(jnp.concatenate([x_h4, x_m2, x_l], axis=1), fused["low"],
               Cl_out + Cm_out + Ch_out)
    out_l = low[:, :Cl_out]
    l2m = low[:, Cl_out:Cl_out + Cm_out]
    l2h = low[:, Cl_out + Cm_out:]

    out_h = h2h + upsample_nchw(m2h, 2) + upsample_nchw(l2h, 4)
    out_m = out_m_part + upsample_nchw(l2m, 2)
    return out_h, out_m, out_l


# ---------------------------- pure-JAX reference ------------------------------

def _ref_conv(x_nchw, w_hwio, padding):
    return jax.lax.conv_general_dilated(
        x_nchw, w_hwio, window_strides=(1, 1),
        padding=[(padding, padding), (padding, padding)],
        dimension_numbers=("NCHW", "HWIO", "NCHW"))


def ref_forward(params, x_h, x_m, x_l, padding=1):
    conv = lambda t, name: _ref_conv(t, params[name], padding)
    x_h2h = conv(x_h, "h2h")
    x_h2m = conv(maxpool_nchw(x_h, 2), "h2m")
    x_h2l = conv(maxpool_nchw(x_h, 4), "h2l")
    x_m2h = upsample_nchw(conv(x_m, "m2h"), 2)
    x_m2m = conv(x_m, "m2m")
    x_m2l = conv(maxpool_nchw(x_m, 2), "m2l")
    x_l2h = upsample_nchw(conv(x_l, "l2h"), 4)
    x_l2m = upsample_nchw(conv(x_l, "l2m"), 2)
    x_l2l = conv(x_l, "l2l")
    return (x_l2h + x_m2h + x_h2h,
            x_l2m + x_m2m + x_h2m,
            x_l2l + x_m2l + x_h2l)


# ------------------------------------ main ------------------------------------

if __name__ == "__main__":
    key = jax.random.PRNGKey(0)
    kp, kh, km, kl = jax.random.split(key, 4)

    in_channels = out_channels = 8
    kernel_size, padding = 3, 1
    a_l, a_m, a_h = 0.25, 0.25, 0.5          # low / mid / high channel fractions

    params = init_params(kp, in_channels, out_channels, kernel_size,
                         a_l, a_m, a_h, a_l, a_m, a_h)
    fused, meta = fuse_params(params)        # precomputed once, reused per call

    N, H, W = 2, 16, 16
    x_h = jax.random.normal(kh, (N, int(a_h * in_channels), H, W), jnp.float32)
    x_m = jax.random.normal(km, (N, int(a_m * in_channels), H // 2, W // 2), jnp.float32)
    x_l = jax.random.normal(kl, (N, int(a_l * in_channels), H // 4, W // 4), jnp.float32)

    ref_h, ref_m, ref_l = ref_forward(params, x_h, x_m, x_l, padding)

    # --- f32 compute path (tight check) ---
    fwd32 = jax.jit(lambda a, b, c: octave_conv2_forward(
        fused, meta, a, b, c, padding=padding, compute_dtype=jnp.float32))
    out_h, out_m, out_l = jax.block_until_ready(fwd32(x_h, x_m, x_l))

    assert out_h.shape == (N, int(a_h * out_channels), H, W)
    assert out_m.shape == (N, int(a_m * out_channels), H // 2, W // 2)
    assert out_l.shape == (N, int(a_l * out_channels), H // 4, W // 4)
    for got, ref in ((out_h, ref_h), (out_m, ref_m), (out_l, ref_l)):
        assert jnp.allclose(got, ref, atol=1e-3, rtol=1e-3), "f32 mismatch vs reference"

    # --- bf16-on-MXU path (f32 accumulation; looser tolerance) ---
    fwd16 = jax.jit(lambda a, b, c: octave_conv2_forward(
        fused, meta, a, b, c, padding=padding, compute_dtype=jnp.bfloat16))
    b_h, b_m, b_l = jax.block_until_ready(fwd16(x_h, x_m, x_l))
    for got, ref in ((b_h, ref_h), (b_m, ref_m), (b_l, ref_l)):
        assert jnp.allclose(got, ref, atol=5e-2, rtol=5e-2), "bf16 mismatch vs reference"

    # --- high-frequency-only branch (x_m = x_l = None) ---
    fwd_hi = jax.jit(lambda a: octave_conv2_forward(
        fused, meta, a, padding=padding, compute_dtype=jnp.float32))
    h_h, h_m, h_l = jax.block_until_ready(fwd_hi(x_h))
    r_h = _ref_conv(x_h, params["h2h"], padding)
    r_m = _ref_conv(maxpool_nchw(x_h, 2), params["h2m"], padding)
    r_l = _ref_conv(maxpool_nchw(x_h, 4), params["h2l"], padding)
    for got, ref in ((h_h, r_h), (h_m, r_m), (h_l, r_l)):
        assert jnp.allclose(got, ref, atol=1e-3, rtol=1e-3), "h-only mismatch vs reference"

    print("KERNEL_OK")
</pallas_src>

<mosaic_0001>
module attributes {stable_mosaic.version = 11 : i64} {
  func.func @kernel(%arg0: i32, %arg1: i32, %arg2: memref<1x8x256xf32, #tpu.memory_space<vmem>>, %arg3: memref<9x8x8xf32, #tpu.memory_space<vmem>>, %arg4: memref<1x8x128xf32, #tpu.memory_space<vmem>>) attributes {dimension_semantics = [#tpu.dimension_semantics<parallel>, #tpu.dimension_semantics<parallel>], iteration_bounds = array<i64: 2, 1>, scalar_prefetch = 0 : i64, scratch_operands = 0 : i64, tpu.core_type = #tpu.core_type<tc>, window_params = [{transform_indices = @transform_0, window_bounds = array<i64: 1, 8, 256>}, {pipeline_mode = #tpu.pipeline_mode<synchronous>, transform_indices = @transform_1, window_bounds = array<i64: 9, 8, 8>}, {transform_indices = @transform_2, window_bounds = array<i64: 1, 8, 128>}]} {
    %c0 = arith.constant 0 : index
    %c0_0 = arith.constant 0 : index
    %c0_1 = arith.constant 0 : index
    %0 = vector.load %arg2[%c0, %c0_0, %c0_1] : memref<1x8x256xf32, #tpu.memory_space<vmem>>, vector<1x8x256xf32>
    %1 = vector.shape_cast %0 : vector<1x8x256xf32> to vector<8x256xf32>
    %cst = arith.constant 0.000000e+00 : f32
    %2 = vector.broadcast %cst : f32 to vector<8x128xf32>
    %c0_2 = arith.constant 0 : index
    %c0_3 = arith.constant 0 : index
    %c0_4 = arith.constant 0 : index
    %3 = vector.load %arg3[%c0_2, %c0_3, %c0_4] : memref<9x8x8xf32, #tpu.memory_space<vmem>>, vector<1x8x8xf32>
    %4 = vector.shape_cast %3 : vector<1x8x8xf32> to vector<8x8xf32>
    %5 = vector.extract_strided_slice %1 {offsets = [0, 0], sizes = [8, 128], strides = [1, 1]} : vector<8x256xf32> to vector<8x128xf32>
    %cst_5 = arith.constant dense<0.000000e+00> : vector<8x128xf32>
    %6 = tpu.matmul %4, %5, %cst_5 {dimension_numbers = #tpu.dot_dimension_numbers<[1], [0], [0], [1], [0, 0, 1, 1], [], []>} : vector<8x8xf32>, vector<8x128xf32>, vector<8x128xf32> -> vector<8x128xf32>
    %7 = arith.addf %2, %6 : vector<8x128xf32>
    %c1 = arith.constant 1 : index
    %c0_6 = arith.constant 0 : index
    %c0_7 = arith.constant 0 : index
    %8 = vector.load %arg3[%c1, %c0_6, %c0_7] : memref<9x8x8xf32, #tpu.memory_space<vmem>>, vector<1x8x8xf32>
    %9 = vector.shape_cast %8 : vector<1x8x8xf32> to vector<8x8xf32>
    %10 = vector.extract_strided_slice %1 {offsets = [0, 1], sizes = [8, 128], strides = [1, 1]} : vector<8x256xf32> to vector<8x128xf32>
    %cst_8 = arith.constant dense<0.000000e+00> : vector<8x128xf32>
    %11 = tpu.matmul %9, %10, %cst_8 {dimension_numbers = #tpu.dot_dimension_numbers<[1], [0], [0], [1], [0, 0, 1, 1], [], []>} : vector<8x8xf32>, vector<8x128xf32>, vector<8x128xf32> -> vector<8x128xf32>
    %12 = arith.addf %7, %11 : vector<8x128xf32>
    %c2 = arith.constant 2 : index
    %c0_9 = arith.constant 0 : index
    %c0_10 = arith.constant 0 : index
    %13 = vector.load %arg3[%c2, %c0_9, %c0_10] : memref<9x8x8xf32, #tpu.memory_space<vmem>>, vector<1x8x8xf32>
    %14 = vector.shape_cast %13 : vector<1x8x8xf32> to vector<8x8xf32>
    %15 = vector.extract_strided_slice %1 {offsets = [0, 2], sizes = [8, 128], strides = [1, 1]} : vector<8x256xf32> to vector<8x128xf32>
    %cst_11 = arith.constant dense<0.000000e+00> : vector<8x128xf32>
    %16 = tpu.matmul %14, %15, %cst_11 {dimension_numbers = #tpu.dot_dimension_numbers<[1], [0], [0], [1], [0, 0, 1, 1], [], []>} : vector<8x8xf32>, vector<8x128xf32>, vector<8x128xf32> -> vector<8x128xf32>
    %17 = arith.addf %12, %16 : vector<8x128xf32>
    %c3 = arith.constant 3 : index
    %c0_12 = arith.constant 0 : index
    %c0_13 = arith.constant 0 : index
    %18 = vector.load %arg3[%c3, %c0_12, %c0_13] : memref<9x8x8xf32, #tpu.memory_space<vmem>>, vector<1x8x8xf32>
    %19 = vector.shape_cast %18 : vector<1x8x8xf32> to vector<8x8xf32>
    %20 = vector.extract_strided_slice %1 {offsets = [0, 6], sizes = [8, 128], strides = [1, 1]} : vector<8x256xf32> to vector<8x128xf32>
    %cst_14 = arith.constant dense<0.000000e+00> : vector<8x128xf32>
    %21 = tpu.matmul %19, %20, %cst_14 {dimension_numbers = #tpu.dot_dimension_numbers<[1], [0], [0], [1], [0, 0, 1, 1], [], []>} : vector<8x8xf32>, vector<8x128xf32>, vector<8x128xf32> -> vector<8x128xf32>
    %22 = arith.addf %17, %21 : vector<8x128xf32>
    %c4 = arith.constant 4 : index
    %c0_15 = arith.constant 0 : index
    %c0_16 = arith.constant 0 : index
    %23 = vector.load %arg3[%c4, %c0_15, %c0_16] : memref<9x8x8xf32, #tpu.memory_space<vmem>>, vector<1x8x8xf32>
    %24 = vector.shape_cast %23 : vector<1x8x8xf32> to vector<8x8xf32>
    %25 = vector.extract_strided_slice %1 {offsets = [0, 7], sizes = [8, 128], strides = [1, 1]} : vector<8x256xf32> to vector<8x128xf32>
    %cst_17 = arith.constant dense<0.000000e+00> : vector<8x128xf32>
    %26 = tpu.matmul %24, %25, %cst_17 {dimension_numbers = #tpu.dot_dimension_numbers<[1], [0], [0], [1], [0, 0, 1, 1], [], []>} : vector<8x8xf32>, vector<8x128xf32>, vector<8x128xf32> -> vector<8x128xf32>
    %27 = arith.addf %22, %26 : vector<8x128xf32>
    %c5 = arith.constant 5 : index
    %c0_18 = arith.constant 0 : index
    %c0_19 = arith.constant 0 : index
    %28 = vector.load %arg3[%c5, %c0_18, %c0_19] : memref<9x8x8xf32, #tpu.memory_space<vmem>>, vector<1x8x8xf32>
    %29 = vector.shape_cast %28 : vector<1x8x8xf32> to vector<8x8xf32>
    %30 = vector.extract_strided_slice %1 {offsets = [0, 8], sizes = [8, 128], strides = [1, 1]} : vector<8x256xf32> to vector<8x128xf32>
    %cst_20 = arith.constant dense<0.000000e+00> : vector<8x128xf32>
    %31 = tpu.matmul %29, %30, %cst_20 {dimension_numbers = #tpu.dot_dimension_numbers<[1], [0], [0], [1], [0, 0, 1, 1], [], []>} : vector<8x8xf32>, vector<8x128xf32>, vector<8x128xf32> -> vector<8x128xf32>
    %32 = arith.addf %27, %31 : vector<8x128xf32>
    %c6 = arith.constant 6 : index
    %c0_21 = arith.constant 0 : index
    %c0_22 = arith.constant 0 : index
    %33 = vector.load %arg3[%c6, %c0_21, %c0_22] : memref<9x8x8xf32, #tpu.memory_space<vmem>>, vector<1x8x8xf32>
    %34 = vector.shape_cast %33 : vector<1x8x8xf32> to vector<8x8xf32>
    %35 = vector.extract_strided_slice %1 {offsets = [0, 12], sizes = [8, 128], strides = [1, 1]} : vector<8x256xf32> to vector<8x128xf32>
    %cst_23 = arith.constant dense<0.000000e+00> : vector<8x128xf32>
    %36 = tpu.matmul %34, %35, %cst_23 {dimension_numbers = #tpu.dot_dimension_numbers<[1], [0], [0], [1], [0, 0, 1, 1], [], []>} : vector<8x8xf32>, vector<8x128xf32>, vector<8x128xf32> -> vector<8x128xf32>
    %37 = arith.addf %32, %36 : vector<8x128xf32>
    %c7 = arith.constant 7 : index
    %c0_24 = arith.constant 0 : index
    %c0_25 = arith.constant 0 : index
    %38 = vector.load %arg3[%c7, %c0_24, %c0_25] : memref<9x8x8xf32, #tpu.memory_space<vmem>>, vector<1x8x8xf32>
    %39 = vector.shape_cast %38 : vector<1x8x8xf32> to vector<8x8xf32>
    %40 = vector.extract_strided_slice %1 {offsets = [0, 13], sizes = [8, 128], strides = [1, 1]} : vector<8x256xf32> to vector<8x128xf32>
    %cst_26 = arith.constant dense<0.000000e+00> : vector<8x128xf32>
    %41 = tpu.matmul %39, %40, %cst_26 {dimension_numbers = #tpu.dot_dimension_numbers<[1], [0], [0], [1], [0, 0, 1, 1], [], []>} : vector<8x8xf32>, vector<8x128xf32>, vector<8x128xf32> -> vector<8x128xf32>
    %42 = arith.addf %37, %41 : vector<8x128xf32>
    %c8 = arith.constant 8 : index
    %c0_27 = arith.constant 0 : index
    %c0_28 = arith.constant 0 : index
    %43 = vector.load %arg3[%c8, %c0_27, %c0_28] : memref<9x8x8xf32, #tpu.memory_space<vmem>>, vector<1x8x8xf32>
    %44 = vector.shape_cast %43 : vector<1x8x8xf32> to vector<8x8xf32>
    %45 = vector.extract_strided_slice %1 {offsets = [0, 14], sizes = [8, 128], strides = [1, 1]} : vector<8x256xf32> to vector<8x128xf32>
    %cst_29 = arith.constant dense<0.000000e+00> : vector<8x128xf32>
    %46 = tpu.matmul %44, %45, %cst_29 {dimension_numbers = #tpu.dot_dimension_numbers<[1], [0], [0], [1], [0, 0, 1, 1], [], []>} : vector<8x8xf32>, vector<8x128xf32>, vector<8x128xf32> -> vector<8x128xf32>
    %47 = arith.addf %42, %46 : vector<8x128xf32>
    %c0_30 = arith.constant 0 : index
    %c0_31 = arith.constant 0 : index
    %c0_32 = arith.constant 0 : index
    %48 = vector.load %arg4[%c0_30, %c0_31, %c0_32] : memref<1x8x128xf32, #tpu.memory_space<vmem>>, vector<1x8x128xf32>
    %49 = vector.shape_cast %48 : vector<1x8x128xf32> to vector<8x128xf32>
    %50 = vector.shape_cast %47 : vector<8x128xf32> to vector<1x8x128xf32>
    tpu.vector_store %arg4[%c0_30, %c0_31, %c0_32], %50 {strides = array<i32>} : memref<1x8x128xf32, #tpu.memory_space<vmem>>, vector<1x8x128xf32>,
    return
  }
  func.func @transform_0(%arg0: i32, %arg1: i32) -> (i32, i32, i32) {
    %c0_i32 = arith.constant 0 : i32
    %c0_i32_0 = arith.constant 0 : i32
    %c0_i32_1 = arith.constant 0 : i32
    return %arg0, %c0_i32, %c0_i32_0 : i32, i32, i32
  }
  func.func @transform_1(%arg0: i32, %arg1: i32) -> (i32, i32, i32) {
    %c0_i32 = arith.constant 0 : i32
    %c0_i32_0 = arith.constant 0 : i32
    %c0_i32_1 = arith.constant 0 : i32
    %c0_i32_2 = arith.constant 0 : i32
    return %c0_i32, %c0_i32_0, %c0_i32_1 : i32, i32, i32
  }
  func.func @transform_2(%arg0: i32, %arg1: i32) -> (i32, i32, i32) {
    %c0_i32 = arith.constant 0 : i32
    %c0_i32_0 = arith.constant 0 : i32
    return %arg0, %c0_i32, %arg1 : i32, i32, i32
  }
}

module attributes {stable_mosaic.version = 11 : i64} {
  func.func @kernel(%arg0: i32, %arg1: i32, %arg2: memref<1x6x256xf32, #tpu.memory_space<vmem>>, %arg3: memref<9x8x6xf32, #tpu.memory_space<vmem>>, %arg4: memref<1x8x128xf32, #tpu.memory_space<vmem>>) attributes {dimension_semantics = [#tpu.dimension_semantics<parallel>, #tpu.dimension_semantics<parallel>], iteration_bounds = array<i64: 2, 1>, scalar_prefetch = 0 : i64, scratch_operands = 0 : i64, tpu.core_type = #tpu.core_type<tc>, window_params = [{transform_indices = @transform_0, window_bounds = array<i64: 1, 6, 256>}, {pipeline_mode = #tpu.pipeline_mode<synchronous>, transform_indices = @transform_1, window_bounds = array<i64: 9, 8, 6>}, {transform_indices = @transform_2, window_bounds = array<i64: 1, 8, 128>}]} {
    %c0 = arith.constant 0 : index
    %c0_0 = arith.constant 0 : index
    %c0_1 = arith.constant 0 : index
    %0 = vector.load %arg2[%c0, %c0_0, %c0_1] : memref<1x6x256xf32, #tpu.memory_space<vmem>>, vector<1x6x256xf32>
    %1 = vector.shape_cast %0 : vector<1x6x256xf32> to vector<6x256xf32>
    %cst = arith.constant 0.000000e+00 : f32
    %2 = vector.broadcast %cst : f32 to vector<8x128xf32>
    %c0_2 = arith.constant 0 : index
    %c0_3 = arith.constant 0 : index
    %c0_4 = arith.constant 0 : index
    %3 = vector.load %arg3[%c0_2, %c0_3, %c0_4] : memref<9x8x6xf32, #tpu.memory_space<vmem>>, vector<1x8x6xf32>
    %4 = vector.shape_cast %3 : vector<1x8x6xf32> to vector<8x6xf32>
    %5 = vector.extract_strided_slice %1 {offsets = [0, 0], sizes = [6, 128], strides = [1, 1]} : vector<6x256xf32> to vector<6x128xf32>
    %cst_5 = arith.constant dense<0.000000e+00> : vector<8x128xf32>
    %6 = tpu.matmul %4, %5, %cst_5 {dimension_numbers = #tpu.dot_dimension_numbers<[1], [0], [0], [1], [0, 0, 1, 1], [], []>} : vector<8x6xf32>, vector<6x128xf32>, vector<8x128xf32> -> vector<8x128xf32>
    %7 = arith.addf %2, %6 : vector<8x128xf32>
    %c1 = arith.constant 1 : index
    %c0_6 = arith.constant 0 : index
    %c0_7 = arith.constant 0 : index
    %8 = vector.load %arg3[%c1, %c0_6, %c0_7] : memref<9x8x6xf32, #tpu.memory_space<vmem>>, vector<1x8x6xf32>
    %9 = vector.shape_cast %8 : vector<1x8x6xf32> to vector<8x6xf32>
    %10 = vector.extract_strided_slice %1 {offsets = [0, 1], sizes = [6, 128], strides = [1, 1]} : vector<6x256xf32> to vector<6x128xf32>
    %cst_8 = arith.constant dense<0.000000e+00> : vector<8x128xf32>
    %11 = tpu.matmul %9, %10, %cst_8 {dimension_numbers = #tpu.dot_dimension_numbers<[1], [0], [0], [1], [0, 0, 1, 1], [], []>} : vector<8x6xf32>, vector<6x128xf32>, vector<8x128xf32> -> vector<8x128xf32>
    %12 = arith.addf %7, %11 : vector<8x128xf32>
    %c2 = arith.constant 2 : index
    %c0_9 = arith.constant 0 : index
    %c0_10 = arith.constant 0 : index
    %13 = vector.load %arg3[%c2, %c0_9, %c0_10] : memref<9x8x6xf32, #tpu.memory_space<vmem>>, vector<1x8x6xf32>
    %14 = vector.shape_cast %13 : vector<1x8x6xf32> to vector<8x6xf32>
    %15 = vector.extract_strided_slice %1 {offsets = [0, 2], sizes = [6, 128], strides = [1, 1]} : vector<6x256xf32> to vector<6x128xf32>
    %cst_11 = arith.constant dense<0.000000e+00> : vector<8x128xf32>
    %16 = tpu.matmul %14, %15, %cst_11 {dimension_numbers = #tpu.dot_dimension_numbers<[1], [0], [0], [1], [0, 0, 1, 1], [], []>} : vector<8x6xf32>, vector<6x128xf32>, vector<8x128xf32> -> vector<8x128xf32>
    %17 = arith.addf %12, %16 : vector<8x128xf32>
    %c3 = arith.constant 3 : index
    %c0_12 = arith.constant 0 : index
    %c0_13 = arith.constant 0 : index
    %18 = vector.load %arg3[%c3, %c0_12, %c0_13] : memref<9x8x6xf32, #tpu.memory_space<vmem>>, vector<1x8x6xf32>
    %19 = vector.shape_cast %18 : vector<1x8x6xf32> to vector<8x6xf32>
    %20 = vector.extract_strided_slice %1 {offsets = [0, 10], sizes = [6, 128], strides = [1, 1]} : vector<6x256xf32> to vector<6x128xf32>
    %cst_14 = arith.constant dense<0.000000e+00> : vector<8x128xf32>
    %21 = tpu.matmul %19, %20, %cst_14 {dimension_numbers = #tpu.dot_dimension_numbers<[1], [0], [0], [1], [0, 0, 1, 1], [], []>} : vector<8x6xf32>, vector<6x128xf32>, vector<8x128xf32> -> vector<8x128xf32>
    %22 = arith.addf %17, %21 : vector<8x128xf32>
    %c4 = arith.constant 4 : index
    %c0_15 = arith.constant 0 : index
    %c0_16 = arith.constant 0 : index
    %23 = vector.load %arg3[%c4, %c0_15, %c0_16] : memref<9x8x6xf32, #tpu.memory_space<vmem>>, vector<1x8x6xf32>
    %24 = vector.shape_cast %23 : vector<1x8x6xf32> to vector<8x6xf32>
    %25 = vector.extract_strided_slice %1 {offsets = [0, 11], sizes = [6, 128], strides = [1, 1]} : vector<6x256xf32> to vector<6x128xf32>
    %cst_17 = arith.constant dense<0.000000e+00> : vector<8x128xf32>
    %26 = tpu.matmul %24, %25, %cst_17 {dimension_numbers = #tpu.dot_dimension_numbers<[1], [0], [0], [1], [0, 0, 1, 1], [], []>} : vector<8x6xf32>, vector<6x128xf32>, vector<8x128xf32> -> vector<8x128xf32>
    %27 = arith.addf %22, %26 : vector<8x128xf32>
    %c5 = arith.constant 5 : index
    %c0_18 = arith.constant 0 : index
    %c0_19 = arith.constant 0 : index
    %28 = vector.load %arg3[%c5, %c0_18, %c0_19] : memref<9x8x6xf32, #tpu.memory_space<vmem>>, vector<1x8x6xf32>
    %29 = vector.shape_cast %28 : vector<1x8x6xf32> to vector<8x6xf32>
    %30 = vector.extract_strided_slice %1 {offsets = [0, 12], sizes = [6, 128], strides = [1, 1]} : vector<6x256xf32> to vector<6x128xf32>
    %cst_20 = arith.constant dense<0.000000e+00> : vector<8x128xf32>
    %31 = tpu.matmul %29, %30, %cst_20 {dimension_numbers = #tpu.dot_dimension_numbers<[1], [0], [0], [1], [0, 0, 1, 1], [], []>} : vector<8x6xf32>, vector<6x128xf32>, vector<8x128xf32> -> vector<8x128xf32>
    %32 = arith.addf %27, %31 : vector<8x128xf32>
    %c6 = arith.constant 6 : index
    %c0_21 = arith.constant 0 : index
    %c0_22 = arith.constant 0 : index
    %33 = vector.load %arg3[%c6, %c0_21, %c0_22] : memref<9x8x6xf32, #tpu.memory_space<vmem>>, vector<1x8x6xf32>
    %34 = vector.shape_cast %33 : vector<1x8x6xf32> to vector<8x6xf32>
    %35 = vector.extract_strided_slice %1 {offsets = [0, 20], sizes = [6, 128], strides = [1, 1]} : vector<6x256xf32> to vector<6x128xf32>
    %cst_23 = arith.constant dense<0.000000e+00> : vector<8x128xf32>
    %36 = tpu.matmul %34, %35, %cst_23 {dimension_numbers = #tpu.dot_dimension_numbers<[1], [0], [0], [1], [0, 0, 1, 1], [], []>} : vector<8x6xf32>, vector<6x128xf32>, vector<8x128xf32> -> vector<8x128xf32>
    %37 = arith.addf %32, %36 : vector<8x128xf32>
    %c7 = arith.constant 7 : index
    %c0_24 = arith.constant 0 : index
    %c0_25 = arith.constant 0 : index
    %38 = vector.load %arg3[%c7, %c0_24, %c0_25] : memref<9x8x6xf32, #tpu.memory_space<vmem>>, vector<1x8x6xf32>
    %39 = vector.shape_cast %38 : vector<1x8x6xf32> to vector<8x6xf32>
    %40 = vector.extract_strided_slice %1 {offsets = [0, 21], sizes = [6, 128], strides = [1, 1]} : vector<6x256xf32> to vector<6x128xf32>
    %cst_26 = arith.constant dense<0.000000e+00> : vector<8x128xf32>
    %41 = tpu.matmul %39, %40, %cst_26 {dimension_numbers = #tpu.dot_dimension_numbers<[1], [0], [0], [1], [0, 0, 1, 1], [], []>} : vector<8x6xf32>, vector<6x128xf32>, vector<8x128xf32> -> vector<8x128xf32>
    %42 = arith.addf %37, %41 : vector<8x128xf32>
    %c8 = arith.constant 8 : index
    %c0_27 = arith.constant 0 : index
    %c0_28 = arith.constant 0 : index
    %43 = vector.load %arg3[%c8, %c0_27, %c0_28] : memref<9x8x6xf32, #tpu.memory_space<vmem>>, vector<1x8x6xf32>
    %44 = vector.shape_cast %43 : vector<1x8x6xf32> to vector<8x6xf32>
    %45 = vector.extract_strided_slice %1 {offsets = [0, 22], sizes = [6, 128], strides = [1, 1]} : vector<6x256xf32> to vector<6x128xf32>
    %cst_29 = arith.constant dense<0.000000e+00> : vector<8x128xf32>
    %46 = tpu.matmul %44, %45, %cst_29 {dimension_numbers = #tpu.dot_dimension_numbers<[1], [0], [0], [1], [0, 0, 1, 1], [], []>} : vector<8x6xf32>, vector<6x128xf32>, vector<8x128xf32> -> vector<8x128xf32>
    %47 = arith.addf %42, %46 : vector<8x128xf32>
    %c0_30 = arith.constant 0 : index
    %c0_31 = arith.constant 0 : index
    %c0_32 = arith.constant 0 : index
    %48 = vector.load %arg4[%c0_30, %c0_31, %c0_32] : memref<1x8x128xf32, #tpu.memory_space<vmem>>, vector<1x8x128xf32>
    %49 = vector.shape_cast %48 : vector<1x8x128xf32> to vector<8x128xf32>
    %50 = vector.shape_cast %47 : vector<8x128xf32> to vector<1x8x128xf32>
    tpu.vector_store %arg4[%c0_30, %c0_31, %c0_32], %50 {strides = array<i32>} : memref<1x8x128xf32, #tpu.memory_space<vmem>>, vector<1x8x128xf32>,
    return
  }
  func.func @transform_0(%arg0: i32, %arg1: i32) -> (i32, i32, i32) {
    %c0_i32 = arith.constant 0 : i32
    %c0_i32_0 = arith.constant 0 : i32
    %c0_i32_1 = arith.constant 0 : i32
    return %arg0, %c0_i32, %c0_i32_0 : i32, i32, i32
  }
  func.func @transform_1(%arg0: i32, %arg1: i32) -> (i32, i32, i32) {
    %c0_i32 = arith.constant 0 : i32
    %c0_i32_0 = arith.constant 0 : i32
    %c0_i32_1 = arith.constant 0 : i32
    %c0_i32_2 = arith.constant 0 : i32
    return %c0_i32, %c0_i32_0, %c0_i32_1 : i32, i32, i32
  }
  func.func @transform_2(%arg0: i32, %arg1: i32) -> (i32, i32, i32) {
    %c0_i32 = arith.constant 0 : i32
    %c0_i32_0 = arith.constant 0 : i32
    return %arg0, %c0_i32, %arg1 : i32, i32, i32
  }
}

module attributes {stable_mosaic.version = 11 : i64} {
  func.func @kernel(%arg0: i32, %arg1: i32, %arg2: memref<1x4x512xf32, #tpu.memory_space<vmem>>, %arg3: memref<9x8x4xf32, #tpu.memory_space<vmem>>, %arg4: memref<1x8x384xf32, #tpu.memory_space<vmem>>) attributes {dimension_semantics = [#tpu.dimension_semantics<parallel>, #tpu.dimension_semantics<parallel>], iteration_bounds = array<i64: 2, 1>, scalar_prefetch = 0 : i64, scratch_operands = 0 : i64, tpu.core_type = #tpu.core_type<tc>, window_params = [{transform_indices = @transform_0, window_bounds = array<i64: 1, 4, 512>}, {pipeline_mode = #tpu.pipeline_mode<synchronous>, transform_indices = @transform_1, window_bounds = array<i64: 9, 8, 4>}, {transform_indices = @transform_2, window_bounds = array<i64: 1, 8, 384>}]} {
    %c0 = arith.constant 0 : index
    %c0_0 = arith.constant 0 : index
    %c0_1 = arith.constant 0 : index
    %0 = vector.load %arg2[%c0, %c0_0, %c0_1] : memref<1x4x512xf32, #tpu.memory_space<vmem>>, vector<1x4x512xf32>
    %1 = vector.shape_cast %0 : vector<1x4x512xf32> to vector<4x512xf32>
    %cst = arith.constant 0.000000e+00 : f32
    %2 = vector.broadcast %cst : f32 to vector<8x384xf32>
    %c0_2 = arith.constant 0 : index
    %c0_3 = arith.constant 0 : index
    %c0_4 = arith.constant 0 : index
    %3 = vector.load %arg3[%c0_2, %c0_3, %c0_4] : memref<9x8x4xf32, #tpu.memory_space<vmem>>, vector<1x8x4xf32>
    %4 = vector.shape_cast %3 : vector<1x8x4xf32> to vector<8x4xf32>
    %5 = vector.extract_strided_slice %1 {offsets = [0, 0], sizes = [4, 384], strides = [1, 1]} : vector<4x512xf32> to vector<4x384xf32>
    %cst_5 = arith.constant dense<0.000000e+00> : vector<8x384xf32>
    %6 = tpu.matmul %4, %5, %cst_5 {dimension_numbers = #tpu.dot_dimension_numbers<[1], [0], [0], [1], [0, 0, 1, 1], [], []>} : vector<8x4xf32>, vector<4x384xf32>, vector<8x384xf32> -> vector<8x384xf32>
    %7 = arith.addf %2, %6 : vector<8x384xf32>
    %c1 = arith.constant 1 : index
    %c0_6 = arith.constant 0 : index
    %c0_7 = arith.constant 0 : index
    %8 = vector.load %arg3[%c1, %c0_6, %c0_7] : memref<9x8x4xf32, #tpu.memory_space<vmem>>, vector<1x8x4xf32>
    %9 = vector.shape_cast %8 : vector<1x8x4xf32> to vector<8x4xf32>
    %10 = vector.extract_strided_slice %1 {offsets = [0, 1], sizes = [4, 384], strides = [1, 1]} : vector<4x512xf32> to vector<4x384xf32>
    %cst_8 = arith.constant dense<0.000000e+00> : vector<8x384xf32>
    %11 = tpu.matmul %9, %10, %cst_8 {dimension_numbers = #tpu.dot_dimension_numbers<[1], [0], [0], [1], [0, 0, 1, 1], [], []>} : vector<8x4xf32>, vector<4x384xf32>, vector<8x384xf32> -> vector<8x384xf32>
    %12 = arith.addf %7, %11 : vector<8x384xf32>
    %c2 = arith.constant 2 : index
    %c0_9 = arith.constant 0 : index
    %c0_10 = arith.constant 0 : index
    %13 = vector.load %arg3[%c2, %c0_9, %c0_10] : memref<9x8x4xf32, #tpu.memory_space<vmem>>, vector<1x8x4xf32>
    %14 = vector.shape_cast %13 : vector<1x8x4xf32> to vector<8x4xf32>
    %15 = vector.extract_strided_slice %1 {offsets = [0, 2], sizes = [4, 384], strides = [1, 1]} : vector<4x512xf32> to vector<4x384xf32>
    %cst_11 = arith.constant dense<0.000000e+00> : vector<8x384xf32>
    %16 = tpu.matmul %14, %15, %cst_11 {dimension_numbers = #tpu.dot_dimension_numbers<[1], [0], [0], [1], [0, 0, 1, 1], [], []>} : vector<8x4xf32>, vector<4x384xf32>, vector<8x384xf32> -> vector<8x384xf32>
    %17 = arith.addf %12, %16 : vector<8x384xf32>
    %c3 = arith.constant 3 : index
    %c0_12 = arith.constant 0 : index
    %c0_13 = arith.constant 0 : index
    %18 = vector.load %arg3[%c3, %c0_12, %c0_13] : memref<9x8x4xf32, #tpu.memory_space<vmem>>, vector<1x8x4xf32>
    %19 = vector.shape_cast %18 : vector<1x8x4xf32> to vector<8x4xf32>
    %20 = vector.extract_strided_slice %1 {offsets = [0, 18], sizes = [4, 384], strides = [1, 1]} : vector<4x512xf32> to vector<4x384xf32>
    %cst_14 = arith.constant dense<0.000000e+00> : vector<8x384xf32>
    %21 = tpu.matmul %19, %20, %cst_14 {dimension_numbers = #tpu.dot_dimension_numbers<[1], [0], [0], [1], [0, 0, 1, 1], [], []>} : vector<8x4xf32>, vector<4x384xf32>, vector<8x384xf32> -> vector<8x384xf32>
    %22 = arith.addf %17, %21 : vector<8x384xf32>
    %c4 = arith.constant 4 : index
    %c0_15 = arith.constant 0 : index
    %c0_16 = arith.constant 0 : index
    %23 = vector.load %arg3[%c4, %c0_15, %c0_16] : memref<9x8x4xf32, #tpu.memory_space<vmem>>, vector<1x8x4xf32>
    %24 = vector.shape_cast %23 : vector<1x8x4xf32> to vector<8x4xf32>
    %25 = vector.extract_strided_slice %1 {offsets = [0, 19], sizes = [4, 384], strides = [1, 1]} : vector<4x512xf32> to vector<4x384xf32>
    %cst_17 = arith.constant dense<0.000000e+00> : vector<8x384xf32>
    %26 = tpu.matmul %24, %25, %cst_17 {dimension_numbers = #tpu.dot_dimension_numbers<[1], [0], [0], [1], [0, 0, 1, 1], [], []>} : vector<8x4xf32>, vector<4x384xf32>, vector<8x384xf32> -> vector<8x384xf32>
    %27 = arith.addf %22, %26 : vector<8x384xf32>
    %c5 = arith.constant 5 : index
    %c0_18 = arith.constant 0 : index
    %c0_19 = arith.constant 0 : index
    %28 = vector.load %arg3[%c5, %c0_18, %c0_19] : memref<9x8x4xf32, #tpu.memory_space<vmem>>, vector<1x8x4xf32>
    %29 = vector.shape_cast %28 : vector<1x8x4xf32> to vector<8x4xf32>
    %30 = vector.extract_strided_slice %1 {offsets = [0, 20], sizes = [4, 384], strides = [1, 1]} : vector<4x512xf32> to vector<4x384xf32>
    %cst_20 = arith.constant dense<0.000000e+00> : vector<8x384xf32>
    %31 = tpu.matmul %29, %30, %cst_20 {dimension_numbers = #tpu.dot_dimension_numbers<[1], [0], [0], [1], [0, 0, 1, 1], [], []>} : vector<8x4xf32>, vector<4x384xf32>, vector<8x384xf32> -> vector<8x384xf32>
    %32 = arith.addf %27, %31 : vector<8x384xf32>
    %c6 = arith.constant 6 : index
    %c0_21 = arith.constant 0 : index
    %c0_22 = arith.constant 0 : index
    %33 = vector.load %arg3[%c6, %c0_21, %c0_22] : memref<9x8x4xf32, #tpu.memory_space<vmem>>, vector<1x8x4xf32>
    %34 = vector.shape_cast %33 : vector<1x8x4xf32> to vector<8x4xf32>
    %35 = vector.extract_strided_slice %1 {offsets = [0, 36], sizes = [4, 384], strides = [1, 1]} : vector<4x512xf32> to vector<4x384xf32>
    %cst_23 = arith.constant dense<0.000000e+00> : vector<8x384xf32>
    %36 = tpu.matmul %34, %35, %cst_23 {dimension_numbers = #tpu.dot_dimension_numbers<[1], [0], [0], [1], [0, 0, 1, 1], [], []>} : vector<8x4xf32>, vector<4x384xf32>, vector<8x384xf32> -> vector<8x384xf32>
    %37 = arith.addf %32, %36 : vector<8x384xf32>
    %c7 = arith.constant 7 : index
    %c0_24 = arith.constant 0 : index
    %c0_25 = arith.constant 0 : index
    %38 = vector.load %arg3[%c7, %c0_24, %c0_25] : memref<9x8x4xf32, #tpu.memory_space<vmem>>, vector<1x8x4xf32>
    %39 = vector.shape_cast %38 : vector<1x8x4xf32> to vector<8x4xf32>
    %40 = vector.extract_strided_slice %1 {offsets = [0, 37], sizes = [4, 384], strides = [1, 1]} : vector<4x512xf32> to vector<4x384xf32>
    %cst_26 = arith.constant dense<0.000000e+00> : vector<8x384xf32>
    %41 = tpu.matmul %39, %40, %cst_26 {dimension_numbers = #tpu.dot_dimension_numbers<[1], [0], [0], [1], [0, 0, 1, 1], [], []>} : vector<8x4xf32>, vector<4x384xf32>, vector<8x384xf32> -> vector<8x384xf32>
    %42 = arith.addf %37, %41 : vector<8x384xf32>
    %c8 = arith.constant 8 : index
    %c0_27 = arith.constant 0 : index
    %c0_28 = arith.constant 0 : index
    %43 = vector.load %arg3[%c8, %c0_27, %c0_28] : memref<9x8x4xf32, #tpu.memory_space<vmem>>, vector<1x8x4xf32>
    %44 = vector.shape_cast %43 : vector<1x8x4xf32> to vector<8x4xf32>
    %45 = vector.extract_strided_slice %1 {offsets = [0, 38], sizes = [4, 384], strides = [1, 1]} : vector<4x512xf32> to vector<4x384xf32>
    %cst_29 = arith.constant dense<0.000000e+00> : vector<8x384xf32>
    %46 = tpu.matmul %44, %45, %cst_29 {dimension_numbers = #tpu.dot_dimension_numbers<[1], [0], [0], [1], [0, 0, 1, 1], [], []>} : vector<8x4xf32>, vector<4x384xf32>, vector<8x384xf32> -> vector<8x384xf32>
    %47 = arith.addf %42, %46 : vector<8x384xf32>
    %c0_30 = arith.constant 0 : index
    %c0_31 = arith.constant 0 : index
    %c0_32 = arith.constant 0 : index
    %48 = vector.load %arg4[%c0_30, %c0_31, %c0_32] : memref<1x8x384xf32, #tpu.memory_space<vmem>>, vector<1x8x384xf32>
    %49 = vector.shape_cast %48 : vector<1x8x384xf32> to vector<8x384xf32>
    %50 = vector.shape_cast %47 : vector<8x384xf32> to vector<1x8x384xf32>
    tpu.vector_store %arg4[%c0_30, %c0_31, %c0_32], %50 {strides = array<i32>} : memref<1x8x384xf32, #tpu.memory_space<vmem>>, vector<1x8x384xf32>,
    return
  }
  func.func @transform_0(%arg0: i32, %arg1: i32) -> (i32, i32, i32) {
    %c0_i32 = arith.constant 0 : i32
    %c0_i32_0 = arith.constant 0 : i32
    %c0_i32_1 = arith.constant 0 : i32
    return %arg0, %c0_i32, %c0_i32_0 : i32, i32, i32
  }
  func.func @transform_1(%arg0: i32, %arg1: i32) -> (i32, i32, i32) {
    %c0_i32 = arith.constant 0 : i32
    %c0_i32_0 = arith.constant 0 : i32
    %c0_i32_1 = arith.constant 0 : i32
    %c0_i32_2 = arith.constant 0 : i32
    return %c0_i32, %c0_i32_0, %c0_i32_1 : i32, i32, i32
  }
  func.func @transform_2(%arg0: i32, %arg1: i32) -> (i32, i32, i32) {
    %c0_i32 = arith.constant 0 : i32
    %c0_i32_0 = arith.constant 0 : i32
    return %arg0, %c0_i32, %arg1 : i32, i32, i32
  }
}

</mosaic_0001>

<llo_original>
// kernel: _lambda_.5
$region0: #{_lambda_.5}
  #allocation0 [shape = 'u32[]', space=smem, size = 0x4, offset = 0x4, fixed_abs, tag = 'smem constant byte address 0x4 - core index']
  #allocation1 [shape = 'u32[144,128]{1,0:T(1,128)}', space=vmem, size = 0x12000, scoped, tag = 'internal scratch']
  %s0 = inlined_call_operand.vmem [shape: f32[2,8,256], index: 0, kind: input, shape index: {}]
  %s1 = inlined_call_operand.vmem [shape: f32[9,8,8], index: 1, kind: input, shape index: {}]
  %s2 = inlined_call_operand.vmem [shape: f32[2,8,128], index: 2, kind: output, shape index: {}]
  %s3 = sld [smem:[#allocation0]]
  $region41: #{_lambda_.5} parent=0
    _
  %s5 = ssub.s32 1, %s3
  %s6 = scalar_select 0, %s5, %s3
  loop: start=0, step=1, limit=4
  $region2: #{_lambda_.5} parent=0 // loop_pre_header
    _
  $region3: #{_lambda_.5} parent=0 // loop_header
    %s8 = sphi 0, %s12
    %p9 = scmp.ge.s32.totalorder %s8, 4
    %s15 = sphi 0, %s27
    %s16 = sphi 0, %s23
    %s17 = sphi 0, %s15
    %s18 = sphi 0, %s16
    %s19 = sphi 0, %s17
    %s20 = sphi 0, %s18
    %s30 = sphi 0, %s32
    %s33 = sphi 0, %s30
    %s34 = sphi 0, %s33
    %s50 = sphi 0, %s34
    %s54 = sphi 0, %s54
    %s56 = sphi 0, %s54
    %s57 = sphi 0, %s56
    %s71 = sphi 0, %s57
    %s79 = sphi 0, %s81
    %s82 = sphi 0, %s79
    %s83 = sphi 0, %s82
    %s99 = sphi 0, %s83
  $region4: #{_lambda_.5} parent=0 // loop_header_branch
    %11 = sbr.rel (%p9) target = $region8
  $region5: #{_lambda_.5} parent=0 // loop_body
    %s13 = ssub.s32 %s8, 1
    %s14 = ssub.s32 %s8, 2
    %s21 = sadd.s32 1, %s16
    %p22 = scmp.ge.s32.totalorder %s21, 1
    %s23 = scalar_select %p22, 0, %s21
    %s24 = sadd.s32 1, %s15
    %s25 = scalar_select %p22, %s24, %s15
    %p26 = scmp.ge.s32.totalorder %s25, 2
    %s27 = scalar_select %p26, 0, %s25
    %s28 = ssub.s32 %s15, %s27
    %p29 = scmp.eq.s32.totalorder %s28, 0
    %s31 = sadd.s32 %s30, 1
    %s32 = scalar_select %p29, %s30, %s31
    %p35 = pneg %p29
    %p36 = scmp.eq.s32.totalorder %s8, 1
    %p37 = por %p35, %p36
    %p38 = scmp.ne.s32.totalorder %s30, %s33
    %p39 = scmp.eq.s32.totalorder %s8, 0
    %p40 = por %p38, %p39
    %p41 = scmp.ne.s32.totalorder %s30, %s33
    %p42 = scmp.eq.s32.totalorder %s13, 1
    %p43 = por %p41, %p42
    %p44 = scmp.ne.s32.totalorder %s33, %s34
    %p45 = scmp.eq.s32.totalorder %s13, 0
    %p46 = por %p44, %p45
    %p47 = scmp.ne.s32.totalorder %s33, %s34
    %p48 = scmp.eq.s32.totalorder %s14, 1
    %p49 = por %p47, %p48
    %p51 = scmp.ne.s32.totalorder %s34, %s50
    %p52 = scmp.eq.s32.totalorder %s14, 0
    %p53 = por %p51, %p52
    %s55 = sadd.s32 %s54, 1
    %p58 = scmp.eq.s32.totalorder %s8, 1
    %p59 = scmp.ne.s32.totalorder %s54, %s56
    %p60 = scmp.eq.s32.totalorder %s8, 0
    %p61 = por %p59, %p60
    %p62 = scmp.ne.s32.totalorder %s54, %s56
    %p63 = scmp.eq.s32.totalorder %s13, 1
    %p64 = por %p62, %p63
    %p65 = scmp.ne.s32.totalorder %s56, %s57
    %p66 = scmp.eq.s32.totalorder %s13, 0
    %p67 = por %p65, %p66
    %p68 = scmp.ne.s32.totalorder %s56, %s57
    %p69 = scmp.eq.s32.totalorder %s14, 1
    %p70 = por %p68, %p69
    %p72 = scmp.ne.s32.totalorder %s57, %s71
    %p73 = scmp.eq.s32.totalorder %s14, 0
    %p74 = por %p72, %p73
    %s75 = ssub.s32 %s15, %s27
    %s76 = ssub.s32 %s16, %s23
    %s77 = sor.u32 %s75, %s76
    %p78 = scmp.eq.s32.totalorder %s77, 0
    %s80 = sadd.s32 %s79, 1
    %s81 = scalar_select %p78, %s79, %s80
    %p84 = pneg %p78
    %p85 = scmp.eq.s32.totalorder %s8, 1
    %p86 = por %p84, %p85
    %p87 = scmp.ne.s32.totalorder %s79, %s82
    %p88 = scmp.eq.s32.totalorder %s8, 0
    %p89 = por %p87, %p88
    %p90 = scmp.ne.s32.totalorder %s79, %s82
    %p91 = scmp.eq.s32.totalorder %s13, 1
    %p92 = por %p90, %p91
    %p93 = scmp.ne.s32.totalorder %s82, %s83
    %p94 = scmp.eq.s32.totalorder %s13, 0
    %p95 = por %p93, %p94
    %p96 = scmp.ne.s32.totalorder %s82, %s83
    %p97 = scmp.eq.s32.totalorder %s14, 1
    %p98 = por %p96, %p97
    %p100 = scmp.ne.s32.totalorder %s83, %s99
    %p101 = scmp.eq.s32.totalorder %s14, 0
    %p102 = por %p100, %p101
    %p103 = scmp.le.s32.totalorder 1, %s8
    %p104 = scmp.lt.s32.totalorder %s8, 3
    %p105 = pnand %p103, %p104
    %p106 = pneg %p105
    // Predicated region
    $region9: #{_lambda_.5} parent=5 // pred_check
      _
    $region10: #{_lambda_.5} parent=5 // pred_check_branch
      %108 = sbr.rel (%p105) target = $region12
    $region11: #{_lambda_.5} parent=5 // pred_region
      %s109 = ssub.s32 %s8, 1
      // Predicated region
      $region13: #{_lambda_.5} parent=11 // pred_check
        %p110 = pneg %p67
      $region14: #{_lambda_.5} parent=11 // pred_check_branch
        %112 = sbr.rel (%p110) target = $region16
      $region15: #{_lambda_.5} parent=11 // pred_region
        _
      $region16: #{_lambda_.5} parent=11 // pred_fallthru
        _
    $region12: #{_lambda_.5} parent=5 // pred_fallthru
      _
    %p113 = scmp.lt.s32.totalorder %s8, 2
    // Predicated region
    $region17: #{_lambda_.5} parent=5 // pred_check
      %p114 = pneg %p113
    $region18: #{_lambda_.5} parent=5 // pred_check_branch
      %116 = sbr.rel (%p114) target = $region20
    $region19: #{_lambda_.5} parent=5 // pred_region
      // Predicated region
      $region21: #{_lambda_.5} parent=19 // pred_check
        %p117 = pneg %p40
      $region22: #{_lambda_.5} parent=19 // pred_check_branch
        %119 = sbr.rel (%p117) target = $region24
      $region23: #{_lambda_.5} parent=19 // pred_region
        %p120 = scmp.lt.s32.totalorder %s15, 1
        %s121 = scalar_select %p120, %s15, 1
        %s122 = smul.addr %s121, 2
        %s123 = smul.addr %s122, 8
        %s124 = scalar_lea.vmem %s0, %s123
      $region24: #{_lambda_.5} parent=19 // pred_fallthru
        _
    $region20: #{_lambda_.5} parent=5 // pred_fallthru
      _
    %p125 = scmp.le.s32.totalorder 1, %s8
    %p126 = scmp.lt.s32.totalorder %s8, 3
    %p127 = pnand %p125, %p126
    %p128 = pneg %p127
    // Predicated region
    $region25: #{_lambda_.5} parent=5 // pred_check
      _
    $region26: #{_lambda_.5} parent=5 // pred_check_branch
      %130 = sbr.rel (%p127) target = $region28
    $region27: #{_lambda_.5} parent=5 // pred_region
      %s131 = ssub.s32 %s8, 1
      %p132 = scmp.lt.s32.totalorder %s17, 1
      %s133 = scalar_select %p132, %s17, 1
      %s134 = smul.addr %s133, 2
      %s135 = smul.addr %s134, 8
      %s136 = scalar_lea.vmem %s0, %s135
      %p137 = pneg %p46
      %p138 = pneg %p43
      %p139 = pneg %p67
      %p140 = pneg %p64
      %p141 = pneg %p95
      %p142 = pneg %p92
      %p143 = scmp.lt.s32.totalorder %s17, 1
      %s144 = scalar_select %p143, %s17, 1
      %p145 = scmp.lt.s32.totalorder %s18, 0
      %s146 = scalar_select %p145, %s18, 0
      %s147 = sadd.s32 %s146, %s144
      %s148 = smul.addr %s147, 8
      %s149 = scalar_lea.vmem %s2, %s148
      %p150 = scmp.lt.s32.totalorder %s17, 1
      %s151 = scalar_select %p150, %s17, 1
      %s152 = smul.addr %s151, 2
      %s153 = smul.addr %s152, 8
      %s154 = scalar_lea.vmem %s0, %s153
      %p155 = scmp.lt.s32.totalorder %s17, 1
      %s156 = scalar_select %p155, %s17, 1
      %p157 = scmp.lt.s32.totalorder %s18, 0
      %s158 = scalar_select %p157, %s18, 0
      %s159 = sadd.s32 %s158, %s156
      %s160 = smul.addr %s159, 8
      %s161 = scalar_lea.vmem %s2, %s160
      %v162 = vld [vmem:[%s154] sm:$0xff]
      %v163 = vld [vmem:[%s154 + $0x8] sm:$0xff]
      %v164 = vld [vmem:[%s1] sm:$0xff]
      %s165 = scalar_lea.vmem %s1, 8
      %v166 = vld [vmem:[%s165] sm:$0xff]
      %169 = vrot.lane.b32.xlu0 %v162, 127
      %v170 = vpop.permute.xlu0 %169
      %171 = vrot.lane.b32.xlu0 %v163, 127
      %v172 = vpop.permute.xlu0 %171
      %vm173 = vcmask 1039360
      %v174 = vsel %vm173, %v170, %v172
      %vm176 = vcmask 64512
      %v178 = vsel %vm176, %v166, 0
      %180 = vmatprep.subr.mxu0 0.0
      %181 = vmatpush1.msra.mxu0 %v174
      %182 = vmatprep.subr.mxu0 0.0
      %183 = vmatpush1.msra.mxu0 0.0
      %184 = vmatprep.subr.mxu0 0.0
      %185 = vmatpush1.msra.mxu0 0.0
      %186 = vmatprep.subr.mxu0 0.0
      %187 = vmatpush1.msra.mxu0 0.0
      %188 = vmatprep.subr.mxu0 0.0
      %189 = vmatpush1.msra.mxu0 0.0
      %190 = vmatprep.subr.mxu0 0.0
      %191 = vmatpush1.msra.mxu0 0.0
      %192 = vmatprep.subr.mxu0 0.0
      %193 = vmatpush1.msra.mxu0 0.0
      %194 = vmatprep.subr.mxu0 0.0
      %195 = vmatpush1.msra.mxu0 0.0
      %196 = vmatprep.subr.mxu0 0.0
      %197 = vmatpush1.msra.mxu0 0.0
      %198 = vmatprep.subr.mxu0 0.0
      %199 = vmatpush1.msra.mxu0 0.0
      %200 = vmatprep.subr.mxu0 0.0
      %201 = vmatpush1.msra.mxu0 0.0
      %202 = vmatprep.subr.mxu0 0.0
      %203 = vmatpush1.msra.mxu0 0.0
      %204 = vmatprep.subr.mxu0 0.0
      %205 = vmatpush1.msra.mxu0 0.0
      %206 = vmatprep.subr.mxu0 0.0
      %207 = vmatpush1.msra.mxu0 0.0
      %208 = vmatprep.subr.mxu0 0.0
      %209 = vmatpush1.msra.mxu0 0.0
      %210 = vmatprep.subr.mxu0 0.0
      %211 = vmatpush1.msra.mxu0 0.0
      %212 = vmatprep.subr.mxu0 0.0
      %213 = vmatpush1.msra.mxu0 0.0
      %214 = vmatprep.subr.mxu0 0.0
      %215 = vmatpush1.msra.mxu0 0.0
      %216 = vmatprep.subr.mxu0 0.0
      %217 = vmatpush1.msra.mxu0 0.0
      %218 = vmatprep.subr.mxu0 0.0
      %219 = vmatpush1.msra.mxu0 0.0
      %220 = vmatprep.subr.mxu0 0.0
      %221 = vmatpush1.msra.mxu0 0.0
      %222 = vmatprep.subr.mxu0 0.0
      %223 = vmatpush1.msra.mxu0 0.0
      %224 = vmatprep.subr.mxu0 0.0
      %225 = vmatpush1.msra.mxu0 0.0
      %226 = vmatprep.subr.mxu0 0.0
      %227 = vmatpush1.msra.mxu0 0.0
      %228 = vmatprep.subr.mxu0 0.0
      %229 = vmatpush1.msra.mxu0 0.0
      %230 = vmatprep.subr.mxu0 0.0
      %231 = vmatpush1.msra.mxu0 0.0
      %232 = vmatprep.subr.mxu0 0.0
      %233 = vmatpush1.msra.mxu0 0.0
      %234 = vmatprep.subr.mxu0 0.0
      %235 = vmatpush1.msra.mxu0 0.0
      %236 = vmatprep.subr.mxu0 0.0
      %237 = vmatpush1.msra.mxu0 0.0
      %238 = vmatprep.subr.mxu0 0.0
      %239 = vmatpush1.msra.mxu0 0.0
      %240 = vmatprep.subr.mxu0 0.0
      %241 = vmatpush1.msra.mxu0 0.0
      %242 = vmatprep.subr.mxu0 0.0
      %243 = vmatpush1.msra.mxu0 0.0
      %244 = vmatprep.mubr.f32.mxu0 0.0
      %245 = vmatmul.mubr.f32.gmra.mrb[0].mxu0 %v178
      %v246 = vpop.f32.mrb[0].mxu0
      %v247 = vadd.f32 0.0, %v246
      %v248 = vpop.f32.mrb[0].mxu0
      %249 = vdwg.mxu0
      %v251 = vsel %vm176, %v164, 0
      %253 = vmatprep.subr.mxu0 0.0
      %254 = vmatpush1.msra.mxu0 %v162
      %255 = vmatprep.subr.mxu0 0.0
      %256 = vmatpush1.msra.mxu0 0.0
      %257 = vmatprep.subr.mxu0 0.0
      %258 = vmatpush1.msra.mxu0 0.0
      %259 = vmatprep.subr.mxu0 0.0
      %260 = vmatpush1.msra.mxu0 0.0
      %261 = vmatprep.subr.mxu0 0.0
      %262 = vmatpush1.msra.mxu0 0.0
      %263 = vmatprep.subr.mxu0 0.0
      %264 = vmatpush1.msra.mxu0 0.0
      %265 = vmatprep.subr.mxu0 0.0
      %266 = vmatpush1.msra.mxu0 0.0
      %267 = vmatprep.subr.mxu0 0.0
      %268 = vmatpush1.msra.mxu0 0.0
      %269 = vmatprep.subr.mxu0 0.0
      %270 = vmatpush1.msra.mxu0 0.0
      %271 = vmatprep.subr.mxu0 0.0
      %272 = vmatpush1.msra.mxu0 0.0
      %273 = vmatprep.subr.mxu0 0.0
      %274 = vmatpush1.msra.mxu0 0.0
      %275 = vmatprep.subr.mxu0 0.0
      %276 = vmatpush1.msra.mxu0 0.0
      %277 = vmatprep.subr.mxu0 0.0
      %278 = vmatpush1.msra.mxu0 0.0
      %279 = vmatprep.subr.mxu0 0.0
      %280 = vmatpush1.msra.mxu0 0.0
      %281 = vmatprep.subr.mxu0 0.0
      %282 = vmatpush1.msra.mxu0 0.0
      %283 = vmatprep.subr.mxu0 0.0
      %284 = vmatpush1.msra.mxu0 0.0
      %285 = vmatprep.subr.mxu0 0.0
      %286 = vmatpush1.msra.mxu0 0.0
      %287 = vmatprep.subr.mxu0 0.0
      %288 = vmatpush1.msra.mxu0 0.0
      %289 = vmatprep.subr.mxu0 0.0
      %290 = vmatpush1.msra.mxu0 0.0
      %291 = vmatprep.subr.mxu0 0.0
      %292 = vmatpush1.msra.mxu0 0.0
      %293 = vmatprep.subr.mxu0 0.0
      %294 = vmatpush1.msra.mxu0 0.0
      %295 = vmatprep.subr.mxu0 0.0
      %296 = vmatpush1.msra.mxu0 0.0
      %297 = vmatprep.subr.mxu0 0.0
      %298 = vmatpush1.msra.mxu0 0.0
      %299 = vmatprep.subr.mxu0 0.0
      %300 = vmatpush1.msra.mxu0 0.0
      %301 = vmatprep.subr.mxu0 0.0
      %302 = vmatpush1.msra.mxu0 0.0
      %303 = vmatprep.subr.mxu0 0.0
      %304 = vmatpush1.msra.mxu0 0.0
      %305 = vmatprep.subr.mxu0 0.0
      %306 = vmatpush1.msra.mxu0 0.0
      %307 = vmatprep.subr.mxu0 0.0
      %308 = vmatpush1.msra.mxu0 0.0
      %309 = vmatprep.subr.mxu0 0.0
      %310 = vmatpush1.msra.mxu0 0.0
      %311 = vmatprep.subr.mxu0 0.0
      %312 = vmatpush1.msra.mxu0 0.0
      %313 = vmatprep.subr.mxu0 0.0
      %314 = vmatpush1.msra.mxu0 0.0
      %315 = vmatprep.subr.mxu0 0.0
      %316 = vmatpush1.msra.mxu0 0.0
      %317 = vmatprep.mubr.f32.mxu0 0.0
      %318 = vmatmul.mubr.f32.gmra.mrb[0].mxu0 %v251
      %v319 = vpop.f32.mrb[0].mxu0
      %v320 = vadd.f32 %v247, %v319
      %v321 = vpop.f32.mrb[0].mxu0
      %322 = vdwg.mxu0
      %s323 = scalar_lea.vmem %s1, 16
      %v324 = vld [vmem:[%s323] sm:$0xff]
      %325 = vrot.lane.b32.xlu0 %v162, 126
      %v326 = vpop.permute.xlu0 %325
      %327 = vrot.lane.b32.xlu0 %v163, 126
      %v328 = vpop.permute.xlu0 %327
      %vm329 = vcmask 1031168
      %v330 = vsel %vm329, %v326, %v328
      %v333 = vsel %vm176, %v324, 0
      %335 = vmatprep.subr.mxu0 0.0
      %336 = vmatpush1.msra.mxu0 %v330
      %337 = vmatprep.subr.mxu0 0.0
      %338 = vmatpush1.msra.mxu0 0.0
      %339 = vmatprep.subr.mxu0 0.0
      %340 = vmatpush1.msra.mxu0 0.0
      %341 = vmatprep.subr.mxu0 0.0
      %342 = vmatpush1.msra.mxu0 0.0
      %343 = vmatprep.subr.mxu0 0.0
      %344 = vmatpush1.msra.mxu0 0.0
      %345 = vmatprep.subr.mxu0 0.0
      %346 = vmatpush1.msra.mxu0 0.0
      %347 = vmatprep.subr.mxu0 0.0
      %348 = vmatpush1.msra.mxu0 0.0
      %349 = vmatprep.subr.mxu0 0.0
      %350 = vmatpush1.msra.mxu0 0.0
      %351 = vmatprep.subr.mxu0 0.0
      %352 = vmatpush1.msra.mxu0 0.0
      %353 = vmatprep.subr.mxu0 0.0
      %354 = vmatpush1.msra.mxu0 0.0
      %355 = vmatprep.subr.mxu0 0.0
      %356 = vmatpush1.msra.mxu0 0.0
      %357 = vmatprep.subr.mxu0 0.0
      %358 = vmatpush1.msra.mxu0 0.0
      %359 = vmatprep.subr.mxu0 0.0
      %360 = vmatpush1.msra.mxu0 0.0
      %361 = vmatprep.subr.mxu0 0.0
      %362 = vmatpush1.msra.mxu0 0.0
      %363 = vmatprep.subr.mxu0 0.0
      %364 = vmatpush1.msra.mxu0 0.0
      %365 = vmatprep.subr.mxu0 0.0
      %366 = vmatpush1.msra.mxu0 0.0
      %367 = vmatprep.subr.mxu0 0.0
      %368 = vmatpush1.msra.mxu0 0.0
      %369 = vmatprep.subr.mxu0 0.0
      %370 = vmatpush1.msra.mxu0 0.0
      %371 = vmatprep.subr.mxu0 0.0
      %372 = vmatpush1.msra.mxu0 0.0
      %373 = vmatprep.subr.mxu0 0.0
      %374 = vmatpush1.msra.mxu0 0.0
      %375 = vmatprep.subr.mxu0 0.0
      %376 = vmatpush1.msra.mxu0 0.0
      %377 = vmatprep.subr.mxu0 0.0
      %378 = vmatpush1.msra.mxu0 0.0
      %379 = vmatprep.subr.mxu0 0.0
      %380 = vmatpush1.msra.mxu0 0.0
      %381 = vmatprep.subr.mxu0 0.0
      %382 = vmatpush1.msra.mxu0 0.0
      %383 = vmatprep.subr.mxu0 0.0
      %384 = vmatpush1.msra.mxu0 0.0
      %385 = vmatprep.subr.mxu0 0.0
      %386 = vmatpush1.msra.mxu0 0.0
      %387 = vmatprep.subr.mxu0 0.0
      %388 = vmatpush1.msra.mxu0 0.0
      %389 = vmatprep.subr.mxu0 0.0
      %390 = vmatpush1.msra.mxu0 0.0
      %391 = vmatprep.subr.mxu0 0.0
      %392 = vmatpush1.msra.mxu0 0.0
      %393 = vmatprep.subr.mxu0 0.0
      %394 = vmatpush1.msra.mxu0 0.0
      %395 = vmatprep.subr.mxu0 0.0
      %396 = vmatpush1.msra.mxu0 0.0
      %397 = vmatprep.subr.mxu0 0.0
      %398 = vmatpush1.msra.mxu0 0.0
      %399 = vmatprep.mubr.f32.mxu0 0.0
      %400 = vmatmul.mubr.f32.gmra.mrb[0].mxu0 %v333
      %v401 = vpop.f32.mrb[0].mxu0
      %v402 = vadd.f32 0.0, %v401
      %v403 = vpop.f32.mrb[0].mxu0
      %404 = vdwg.mxu0
      %v405 = vadd.f32 %v320, %v402
      %s406 = scalar_lea.vmem %s1, 24
      %v407 = vld [vmem:[%s406] sm:$0xff]
      %408 = vrot.lane.b32.xlu0 %v162, 122
      %v409 = vpop.permute.xlu0 %408
      %410 = vrot.lane.b32.xlu0 %v163, 122
      %v411 = vpop.permute.xlu0 %410
      %vm412 = vcmask 998400
      %v413 = vsel %vm412, %v409, %v411
      %v416 = vsel %vm176, %v407, 0
      %418 = vmatprep.subr.mxu0 0.0
      %419 = vmatpush1.msra.mxu0 %v413
      %420 = vmatprep.subr.mxu0 0.0
      %421 = vmatpush1.msra.mxu0 0.0
      %422 = vmatprep.subr.mxu0 0.0
      %423 = vmatpush1.msra.mxu0 0.0
      %424 = vmatprep.subr.mxu0 0.0
      %425 = vmatpush1.msra.mxu0 0.0
      %426 = vmatprep.subr.mxu0 0.0
      %427 = vmatpush1.msra.mxu0 0.0
      %428 = vmatprep.subr.mxu0 0.0
      %429 = vmatpush1.msra.mxu0 0.0
      %430 = vmatprep.subr.mxu0 0.0
      %431 = vmatpush1.msra.mxu0 0.0
      %432 = vmatprep.subr.mxu0 0.0
      %433 = vmatpush1.msra.mxu0 0.0
      %434 = vmatprep.subr.mxu0 0.0
      %435 = vmatpush1.msra.mxu0 0.0
      %436 = vmatprep.subr.mxu0 0.0
      %437 = vmatpush1.msra.mxu0 0.0
      %438 = vmatprep.subr.mxu0 0.0
      %439 = vmatpush1.msra.mxu0 0.0
      %440 = vmatprep.subr.mxu0 0.0
      %441 = vmatpush1.msra.mxu0 0.0
      %442 = vmatprep.subr.mxu0 0.0
      %443 = vmatpush1.msra.mxu0 0.0
      %444 = vmatprep.subr.mxu0 0.0
      %445 = vmatpush1.msra.mxu0 0.0
      %446 = vmatprep.subr.mxu0 0.0
      %447 = vmatpush1.msra.mxu0 0.0
      %448 = vmatprep.subr.mxu0 0.0
      %449 = vmatpush1.msra.mxu0 0.0
      %450 = vmatprep.subr.mxu0 0.0
      %451 = vmatpush1.msra.mxu0 0.0
      %452 = vmatprep.subr.mxu0 0.0
      %453 = vmatpush1.msra.mxu0 0.0
      %454 = vmatprep.subr.mxu0 0.0
      %455 = vmatpush1.msra.mxu0 0.0
      %456 = vmatprep.subr.mxu0 0.0
      %457 = vmatpush1.msra.mxu0 0.0
      %458 = vmatprep.subr.mxu0 0.0
      %459 = vmatpush1.msra.mxu0 0.0
      %460 = vmatprep.subr.mxu0 0.0
      %461 = vmatpush1.msra.mxu0 0.0
      %462 = vmatprep.subr.mxu0 0.0
      %463 = vmatpush1.msra.mxu0 0.0
      %464 = vmatprep.subr.mxu0 0.0
      %465 = vmatpush1.msra.mxu0 0.0
      %466 = vmatprep.subr.mxu0 0.0
      %467 = vmatpush1.msra.mxu0 0.0
      %468 = vmatprep.subr.mxu0 0.0
      %469 = vmatpush1.msra.mxu0 0.0
      %470 = vmatprep.subr.mxu0 0.0
      %471 = vmatpush1.msra.mxu0 0.0
      %472 = vmatprep.subr.mxu0 0.0
      %473 = vmatpush1.msra.mxu0 0.0
      %474 = vmatprep.subr.mxu0 0.0
      %475 = vmatpush1.msra.mxu0 0.0
      %476 = vmatprep.subr.mxu0 0.0
      %477 = vmatpush1.msra.mxu0 0.0
      %478 = vmatprep.subr.mxu0 0.0
      %479 = vmatpush1.msra.mxu0 0.0
      %480 = vmatprep.subr.mxu0 0.0
      %481 = vmatpush1.msra.mxu0 0.0
      %482 = vmatprep.mubr.f32.mxu0 0.0
      %483 = vmatmul.mubr.f32.gmra.mrb[0].mxu0 %v416
      %v484 = vpop.f32.mrb[0].mxu0
      %v485 = vadd.f32 0.0, %v484
      %v486 = vpop.f32.mrb[0].mxu0
      %487 = vdwg.mxu0
      %v488 = vadd.f32 %v405, %v485
      %s489 = scalar_lea.vmem %s1, 32
      %v490 = vld [vmem:[%s489] sm:$0xff]
      %491 = vrot.lane.b32.xlu0 %v162, 121
      %v492 = vpop.permute.xlu0 %491
      %493 = vrot.lane.b32.xlu0 %v163, 121
      %v494 = vpop.permute.xlu0 %493
      %vm495 = vcmask 990208
      %v496 = vsel %vm495, %v492, %v494
      %v499 = vsel %vm176, %v490, 0
      %501 = vmatprep.subr.mxu0 0.0
      %502 = vmatpush1.msra.mxu0 %v496
      %503 = vmatprep.subr.mxu0 0.0
      %504 = vmatpush1.msra.mxu0 0.0
      %505 = vmatprep.subr.mxu0 0.0
      %506 = vmatpush1.msra.mxu0 0.0
      %507 = vmatprep.subr.mxu0 0.0
      %508 = vmatpush1.msra.mxu0 0.0
      %509 = vmatprep.subr.mxu0 0.0
      %510 = vmatpush1.msra.mxu0 0.0
      %511 = vmatprep.subr.mxu0 0.0
      %512 = vmatpush1.msra.mxu0 0.0
      %513 = vmatprep.subr.mxu0 0.0
      %514 = vmatpush1.msra.mxu0 0.0
      %515 = vmatprep.subr.mxu0 0.0
      %516 = vmatpush1.msra.mxu0 0.0
      %517 = vmatprep.subr.mxu0 0.0
      %518 = vmatpush1.msra.mxu0 0.0
      %519 = vmatprep.subr.mxu0 0.0
      %520 = vmatpush1.msra.mxu0 0.0
      %521 = vmatprep.subr.mxu0 0.0
      %522 = vmatpush1.msra.mxu0 0.0
      %523 = vmatprep.subr.mxu0 0.0
      %524 = vmatpush1.msra.mxu0 0.0
      %525 = vmatprep.subr.mxu0 0.0
      %526 = vmatpush1.msra.mxu0 0.0
      %527 = vmatprep.subr.mxu0 0.0
      %528 = vmatpush1.msra.mxu0 0.0
      %529 = vmatprep.subr.mxu0 0.0
      %530 = vmatpush1.msra.mxu0 0.0
      %531 = vmatprep.subr.mxu0 0.0
      %532 = vmatpush1.msra.mxu0 0.0
      %533 = vmatprep.subr.mxu0 0.0
      %534 = vmatpush1.msra.mxu0 0.0
      %535 = vmatprep.subr.mxu0 0.0
      %536 = vmatpush1.msra.mxu0 0.0
      %537 = vmatprep.subr.mxu0 0.0
      %538 = vmatpush1.msra.mxu0 0.0
      %539 = vmatprep.subr.mxu0 0.0
      %540 = vmatpush1.msra.mxu0 0.0
      %541 = vmatprep.subr.mxu0 0.0
      %542 = vmatpush1.msra.mxu0 0.0
      %543 = vmatprep.subr.mxu0 0.0
      %544 = vmatpush1.msra.mxu0 0.0
      %545 = vmatprep.subr.mxu0 0.0
      %546 = vmatpush1.msra.mxu0 0.0
      %547 = vmatprep.subr.mxu0 0.0
      %548 = vmatpush1.msra.mxu0 0.0
      %549 = vmatprep.subr.mxu0 0.0
      %550 = vmatpush1.msra.mxu0 0.0
      %551 = vmatprep.subr.mxu0 0.0
      %552 = vmatpush1.msra.mxu0 0.0
      %553 = vmatprep.subr.mxu0 0.0
      %554 = vmatpush1.msra.mxu0 0.0
      %555 = vmatprep.subr.mxu0 0.0
      %556 = vmatpush1.msra.mxu0 0.0
      %557 = vmatprep.subr.mxu0 0.0
      %558 = vmatpush1.msra.mxu0 0.0
      %559 = vmatprep.subr.mxu0 0.0
      %560 = vmatpush1.msra.mxu0 0.0
      %561 = vmatprep.subr.mxu0 0.0
      %562 = vmatpush1.msra.mxu0 0.0
      %563 = vmatprep.subr.mxu0 0.0
      %564 = vmatpush1.msra.mxu0 0.0
      %565 = vmatprep.mubr.f32.mxu0 0.0
      %566 = vmatmul.mubr.f32.gmra.mrb[0].mxu0 %v499
      %v567 = vpop.f32.mrb[0].mxu0
      %v568 = vadd.f32 0.0, %v567
      %v569 = vpop.f32.mrb[0].mxu0
      %570 = vdwg.mxu0
      %v571 = vadd.f32 %v488, %v568
      %s572 = scalar_lea.vmem %s1, 40
      %v573 = vld [vmem:[%s572] sm:$0xff]
      %574 = vrot.lane.b32.xlu0 %v162, 120
      %v575 = vpop.permute.xlu0 %574
      %576 = vrot.lane.b32.xlu0 %v163, 120
      %v577 = vpop.permute.xlu0 %576
      %vm578 = vcmask 982016
      %v579 = vsel %vm578, %v575, %v577
      %v582 = vsel %vm176, %v573, 0
      %584 = vmatprep.subr.mxu0 0.0
      %585 = vmatpush1.msra.mxu0 %v579
      %586 = vmatprep.subr.mxu0 0.0
      %587 = vmatpush1.msra.mxu0 0.0
      %588 = vmatprep.subr.mxu0 0.0
      %589 = vmatpush1.msra.mxu0 0.0
      %590 = vmatprep.subr.mxu0 0.0
      %591 = vmatpush1.msra.mxu0 0.0
      %592 = vmatprep.subr.mxu0 0.0
      %593 = vmatpush1.msra.mxu0 0.0
      %594 = vmatprep.subr.mxu0 0.0
      %595 = vmatpush1.msra.mxu0 0.0
      %596 = vmatprep.subr.mxu0 0.0
      %597 = vmatpush1.msra.mxu0 0.0
      %598 = vmatprep.subr.mxu0 0.0
      %599 = vmatpush1.msra.mxu0 0.0
      %600 = vmatprep.subr.mxu0 0.0
      %601 = vmatpush1.msra.mxu0 0.0
      %602 = vmatprep.subr.mxu0 0.0
      %603 = vmatpush1.msra.mxu0 0.0
      %604 = vmatprep.subr.mxu0 0.0
      %605 = vmatpush1.msra.mxu0 0.0
      %606 = vmatprep.subr.mxu0 0.0
      %607 = vmatpush1.msra.mxu0 0.0
      %608 = vmatprep.subr.mxu0 0.0
      %609 = vmatpush1.msra.mxu0 0.0
      %610 = vmatprep.subr.mxu0 0.0
      %611 = vmatpush1.msra.mxu0 0.0
      %612 = vmatprep.subr.mxu0 0.0
      %613 = vmatpush1.msra.mxu0 0.0
      %614 = vmatprep.subr.mxu0 0.0
      %615 = vmatpush1.msra.mxu0 0.0
      %616 = vmatprep.subr.mxu0 0.0
      %617 = vmatpush1.msra.mxu0 0.0
      %618 = vmatprep.subr.mxu0 0.0
      %619 = vmatpush1.msra.mxu0 0.0
      %620 = vmatprep.subr.mxu0 0.0
      %621 = vmatpush1.msra.mxu0 0.0
      %622 = vmatprep.subr.mxu0 0.0
      %623 = vmatpush1.msra.mxu0 0.0
      %624 = vmatprep.subr.mxu0 0.0
      %625 = vmatpush1.msra.mxu0 0.0
      %626 = vmatprep.subr.mxu0 0.0
      %627 = vmatpush1.msra.mxu0 0.0
      %628 = vmatprep.subr.mxu0 0.0
      %629 = vmatpush1.msra.mxu0 0.0
      %630 = vmatprep.subr.mxu0 0.0
      %631 = vmatpush1.msra.mxu0 0.0
      %632 = vmatprep.subr.mxu0 0.0
      %633 = vmatpush1.msra.mxu0 0.0
      %634 = vmatprep.subr.mxu0 0.0
      %635 = vmatpush1.msra.mxu0 0.0
      %636 = vmatprep.subr.mxu0 0.0
      %637 = vmatpush1.msra.mxu0 0.0
      %638 = vmatprep.subr.mxu0 0.0
      %639 = vmatpush1.msra.mxu0 0.0
      %640 = vmatprep.subr.mxu0 0.0
      %641 = vmatpush1.msra.mxu0 0.0
      %642 = vmatprep.subr.mxu0 0.0
      %643 = vmatpush1.msra.mxu0 0.0
      %644 = vmatprep.subr.mxu0 0.0
      %645 = vmatpush1.msra.mxu0 0.0
      %646 = vmatprep.subr.mxu0 0.0
      %647 = vmatpush1.msra.mxu0 0.0
      %648 = vmatprep.mubr.f32.mxu0 0.0
      %649 = vmatmul.mubr.f32.gmra.mrb[0].mxu0 %v582
      %v650 = vpop.f32.mrb[0].mxu0
      %v651 = vadd.f32 0.0, %v650
      %v652 = vpop.f32.mrb[0].mxu0
      %653 = vdwg.mxu0
      %v654 = vadd.f32 %v571, %v651
      %s655 = scalar_lea.vmem %s1, 48
      %v656 = vld [vmem:[%s655] sm:$0xff]
      %657 = vrot.lane.b32.xlu0 %v162, 116
      %v658 = vpop.permute.xlu0 %657
      %659 = vrot.lane.b32.xlu0 %v163, 116
      %v660 = vpop.permute.xlu0 %659
      %vm661 = vcmask 949248
      %v662 = vsel %vm661, %v658, %v660
      %v665 = vsel %vm176, %v656, 0
      %667 = vmatprep.subr.mxu0 0.0
      %668 = vmatpush1.msra.mxu0 %v662
      %669 = vmatprep.subr.mxu0 0.0
      %670 = vmatpush1.msra.mxu0 0.0
      %671 = vmatprep.subr.mxu0 0.0
      %672 = vmatpush1.msra.mxu0 0.0
      %673 = vmatprep.subr.mxu0 0.0
      %674 = vmatpush1.msra.mxu0 0.0
      %675 = vmatprep.subr.mxu0 0.0
      %676 = vmatpush1.msra.mxu0 0.0
      %677 = vmatprep.subr.mxu0 0.0
      %678 = vmatpush1.msra.mxu0 0.0
      %679 = vmatprep.subr.mxu0 0.0
      %680 = vmatpush1.msra.mxu0 0.0
      %681 = vmatprep.subr.mxu0 0.0
      %682 = vmatpush1.msra.mxu0 0.0
      %683 = vmatprep.subr.mxu0 0.0
      %684 = vmatpush1.msra.mxu0 0.0
      %685 = vmatprep.subr.mxu0 0.0
      %686 = vmatpush1.msra.mxu0 0.0
      %687 = vmatprep.subr.mxu0 0.0
      %688 = vmatpush1.msra.mxu0 0.0
      %689 = vmatprep.subr.mxu0 0.0
      %690 = vmatpush1.msra.mxu0 0.0
      %691 = vmatprep.subr.mxu0 0.0
      %692 = vmatpush1.msra.mxu0 0.0
      %693 = vmatprep.subr.mxu0 0.0
      %694 = vmatpush1.msra.mxu0 0.0
      %695 = vmatprep.subr.mxu0 0.0
      %696 = vmatpush1.msra.mxu0 0.0
      %697 = vmatprep.subr.mxu0 0.0
      %698 = vmatpush1.msra.mxu0 0.0
      %699 = vmatprep.subr.mxu0 0.0
      %700 = vmatpush1.msra.mxu0 0.0
      %701 = vmatprep.subr.mxu0 0.0
      %702 = vmatpush1.msra.mxu0 0.0
      %703 = vmatprep.subr.mxu0 0.0
      %704 = vmatpush1.msra.mxu0 0.0
      %705 = vmatprep.subr.mxu0 0.0
      %706 = vmatpush1.msra.mxu0 0.0
      %707 = vmatprep.subr.mxu0 0.0
      %708 = vmatpush1.msra.mxu0 0.0
      %709 = vmatprep.subr.mxu0 0.0
      %710 = vmatpush1.msra.mxu0 0.0
      %711 = vmatprep.subr.mxu0 0.0
      %712 = vmatpush1.msra.mxu0 0.0
      %713 = vmatprep.subr.mxu0 0.0
      %714 = vmatpush1.msra.mxu0 0.0
      %715 = vmatprep.subr.mxu0 0.0
      %716 = vmatpush1.msra.mxu0 0.0
      %717 = vmatprep.subr.mxu0 0.0
      %718 = vmatpush1.msra.mxu0 0.0
      %719 = vmatprep.subr.mxu0 0.0
      %720 = vmatpush1.msra.mxu0 0.0
      %721 = vmatprep.subr.mxu0 0.0
      %722 = vmatpush1.msra.mxu0 0.0
      %723 = vmatprep.subr.mxu0 0.0
      %724 = vmatpush1.msra.mxu0 0.0
      %725 = vmatprep.subr.mxu0 0.0
      %726 = vmatpush1.msra.mxu0 0.0
      %727 = vmatprep.subr.mxu0 0.0
      %728 = vmatpush1.msra.mxu0 0.0
      %729 = vmatprep.subr.mxu0 0.0
      %730 = vmatpush1.msra.mxu0 0.0
      %731 = vmatprep.mubr.f32.mxu0 0.0
      %732 = vmatmul.mubr.f32.gmra.mrb[0].mxu0 %v665
      %v733 = vpop.f32.mrb[0].mxu0
      %v734 = vadd.f32 0.0, %v733
      %v735 = vpop.f32.mrb[0].mxu0
      %736 = vdwg.mxu0
      %v737 = vadd.f32 %v654, %v734
      %s738 = scalar_lea.vmem %s1, 56
      %v739 = vld [vmem:[%s738] sm:$0xff]
      %740 = vrot.lane.b32.xlu0 %v162, 115
      %v741 = vpop.permute.xlu0 %740
      %742 = vrot.lane.b32.xlu0 %v163, 115
      %v743 = vpop.permute.xlu0 %742
      %vm744 = vcmask 941056
      %v745 = vsel %vm744, %v741, %v743
      %v748 = vsel %vm176, %v739, 0
      %750 = vmatprep.subr.mxu0 0.0
      %751 = vmatpush1.msra.mxu0 %v745
      %752 = vmatprep.subr.mxu0 0.0
      %753 = vmatpush1.msra.mxu0 0.0
      %754 = vmatprep.subr.mxu0 0.0
      %755 = vmatpush1.msra.mxu0 0.0
      %756 = vmatprep.subr.mxu0 0.0
      %757 = vmatpush1.msra.mxu0 0.0
      %758 = vmatprep.subr.mxu0 0.0
      %759 = vmatpush1.msra.mxu0 0.0
      %760 = vmatprep.subr.mxu0 0.0
      %761 = vmatpush1.msra.mxu0 0.0
      %762 = vmatprep.subr.mxu0 0.0
      %763 = vmatpush1.msra.mxu0 0.0
      %764 = vmatprep.subr.mxu0 0.0
      %765 = vmatpush1.msra.mxu0 0.0
      %766 = vmatprep.subr.mxu0 0.0
      %767 = vmatpush1.msra.mxu0 0.0
      %768 = vmatprep.subr.mxu0 0.0
      %769 = vmatpush1.msra.mxu0 0.0
      %770 = vmatprep.subr.mxu0 0.0
      %771 = vmatpush1.msra.mxu0 0.0
      %772 = vmatprep.subr.mxu0 0.0
      %773 = vmatpush1.msra.mxu0 0.0
      %774 = vmatprep.subr.mxu0 0.0
      %775 = vmatpush1.msra.mxu0 0.0
      %776 = vmatprep.subr.mxu0 0.0
      %777 = vmatpush1.msra.mxu0 0.0
      %778 = vmatprep.subr.mxu0 0.0
      %779 = vmatpush1.msra.mxu0 0.0
      %780 = vmatprep.subr.mxu0 0.0
      %781 = vmatpush1.msra.mxu0 0.0
      %782 = vmatprep.subr.mxu0 0.0
      %783 = vmatpush1.msra.mxu0 0.0
      %784 = vmatprep.subr.mxu0 0.0
      %785 = vmatpush1.msra.mxu0 0.0
      %786 = vmatprep.subr.mxu0 0.0
      %787 = vmatpush1.msra.mxu0 0.0
      %788 = vmatprep.subr.mxu0 0.0
      %789 = vmatpush1.msra.mxu0 0.0
      %790 = vmatprep.subr.mxu0 0.0
      %791 = vmatpush1.msra.mxu0 0.0
      %792 = vmatprep.subr.mxu0 0.0
      %793 = vmatpush1.msra.mxu0 0.0
      %794 = vmatprep.subr.mxu0 0.0
      %795 = vmatpush1.msra.mxu0 0.0
      %796 = vmatprep.subr.mxu0 0.0
      %797 = vmatpush1.msra.mxu0 0.0
      %798 = vmatprep.subr.mxu0 0.0
      %799 = vmatpush1.msra.mxu0 0.0
      %800 = vmatprep.subr.mxu0 0.0
      %801 = vmatpush1.msra.mxu0 0.0
      %802 = vmatprep.subr.mxu0 0.0
      %803 = vmatpush1.msra.mxu0 0.0
      %804 = vmatprep.subr.mxu0 0.0
      %805 = vmatpush1.msra.mxu0 0.0
      %806 = vmatprep.subr.mxu0 0.0
      %807 = vmatpush1.msra.mxu0 0.0
      %808 = vmatprep.subr.mxu0 0.0
      %809 = vmatpush1.msra.mxu0 0.0
      %810 = vmatprep.subr.mxu0 0.0
      %811 = vmatpush1.msra.mxu0 0.0
      %812 = vmatprep.subr.mxu0 0.0
      %813 = vmatpush1.msra.mxu0 0.0
      %814 = vmatprep.mubr.f32.mxu0 0.0
      %815 = vmatmul.mubr.f32.gmra.mrb[0].mxu0 %v748
      %v816 = vpop.f32.mrb[0].mxu0
      %v817 = vadd.f32 0.0, %v816
      %v818 = vpop.f32.mrb[0].mxu0
      %819 = vdwg.mxu0
      %v820 = vadd.f32 %v737, %v817
      %s821 = scalar_lea.vmem %s1, 64
      %v822 = vld [vmem:[%s821] sm:$0xff]
      %823 = vrot.lane.b32.xlu0 %v162, 114
      %v824 = vpop.permute.xlu0 %823
      %825 = vrot.lane.b32.xlu0 %v163, 114
      %v826 = vpop.permute.xlu0 %825
      %vm827 = vcmask 932864
      %v828 = vsel %vm827, %v824, %v826
      %v831 = vsel %vm176, %v822, 0
      %833 = vmatprep.subr.mxu0 0.0
      %834 = vmatpush1.msra.mxu0 %v828
      %835 = vmatprep.subr.mxu0 0.0
      %836 = vmatpush1.msra.mxu0 0.0
      %837 = vmatprep.subr.mxu0 0.0
      %838 = vmatpush1.msra.mxu0 0.0
      %839 = vmatprep.subr.mxu0 0.0
      %840 = vmatpush1.msra.mxu0 0.0
      %841 = vmatprep.subr.mxu0 0.0
      %842 = vmatpush1.msra.mxu0 0.0
      %843 = vmatprep.subr.mxu0 0.0
      %844 = vmatpush1.msra.mxu0 0.0
      %845 = vmatprep.subr.mxu0 0.0
      %846 = vmatpush1.msra.mxu0 0.0
      %847 = vmatprep.subr.mxu0 0.0
      %848 = vmatpush1.msra.mxu0 0.0
      %849 = vmatprep.subr.mxu0 0.0
      %850 = vmatpush1.msra.mxu0 0.0
      %851 = vmatprep.subr.mxu0 0.0
      %852 = vmatpush1.msra.mxu0 0.0
      %853 = vmatprep.subr.mxu0 0.0
      %854 = vmatpush1.msra.mxu0 0.0
      %855 = vmatprep.subr.mxu0 0.0
      %856 = vmatpush1.msra.mxu0 0.0
      %857 = vmatprep.subr.mxu0 0.0
      %858 = vmatpush1.msra.mxu0 0.0
      %859 = vmatprep.subr.mxu0 0.0
      %860 = vmatpush1.msra.mxu0 0.0
      %861 = vmatprep.subr.mxu0 0.0
      %862 = vmatpush1.msra.mxu0 0.0
      %863 = vmatprep.subr.mxu0 0.0
      %864 = vmatpush1.msra.mxu0 0.0
      %865 = vmatprep.subr.mxu0 0.0
      %866 = vmatpush1.msra.mxu0 0.0
      %867 = vmatprep.subr.mxu0 0.0
      %868 = vmatpush1.msra.mxu0 0.0
      %869 = vmatprep.subr.mxu0 0.0
      %870 = vmatpush1.msra.mxu0 0.0
      %871 = vmatprep.subr.mxu0 0.0
      %872 = vmatpush1.msra.mxu0 0.0
      %873 = vmatprep.subr.mxu0 0.0
      %874 = vmatpush1.msra.mxu0 0.0
      %875 = vmatprep.subr.mxu0 0.0
      %876 = vmatpush1.msra.mxu0 0.0
      %877 = vmatprep.subr.mxu0 0.0
      %878 = vmatpush1.msra.mxu0 0.0
      %879 = vmatprep.subr.mxu0 0.0
      %880 = vmatpush1.msra.mxu0 0.0
      %881 = vmatprep.subr.mxu0 0.0
      %882 = vmatpush1.msra.mxu0 0.0
      %883 = vmatprep.subr.mxu0 0.0
      %884 = vmatpush1.msra.mxu0 0.0
      %885 = vmatprep.subr.mxu0 0.0
      %886 = vmatpush1.msra.mxu0 0.0
      %887 = vmatprep.subr.mxu0 0.0
      %888 = vmatpush1.msra.mxu0 0.0
      %889 = vmatprep.subr.mxu0 0.0
      %890 = vmatpush1.msra.mxu0 0.0
      %891 = vmatprep.subr.mxu0 0.0
      %892 = vmatpush1.msra.mxu0 0.0
      %893 = vmatprep.subr.mxu0 0.0
      %894 = vmatpush1.msra.mxu0 0.0
      %895 = vmatprep.subr.mxu0 0.0
      %896 = vmatpush1.msra.mxu0 0.0
      %897 = vmatprep.mubr.f32.mxu0 0.0
      %898 = vmatmul.mubr.f32.gmra.mrb[0].mxu0 %v831
      %v899 = vpop.f32.mrb[0].mxu0
      %v900 = vadd.f32 0.0, %v899
      %v901 = vpop.f32.mrb[0].mxu0
      %902 = vdwg.mxu0
      %v903 = vadd.f32 %v820, %v900
      %904 = vst [vmem:[%s161] sm:$0xff] %v903
      %p905 = scmp.lt.s32.totalorder %s17, 1
      %s906 = scalar_select %p905, %s17, 1
      %p907 = scmp.lt.s32.totalorder %s18, 0
      %s908 = scalar_select %p907, %s18, 0
      %s909 = sadd.s32 %s908, %s906
      %s910 = smul.addr %s909, 8
      %s911 = scalar_lea.vmem %s2, %s910
      // Predicated region
      $region29: #{_lambda_.5} parent=27 // pred_check
        %p912 = pneg %p92
      $region30: #{_lambda_.5} parent=27 // pred_check_branch
        %914 = sbr.rel (%p912) target = $region32
      $region31: #{_lambda_.5} parent=27 // pred_region
        _
      $region32: #{_lambda_.5} parent=27 // pred_fallthru
        _
    $region28: #{_lambda_.5} parent=5 // pred_fallthru
      _
    %p915 = scmp.le.s32.totalorder 2, %s8
    // Predicated region
    $region33: #{_lambda_.5} parent=5 // pred_check
      %p916 = pneg %p915
    $region34: #{_lambda_.5} parent=5 // pred_check_branch
      %918 = sbr.rel (%p916) target = $region36
    $region35: #{_lambda_.5} parent=5 // pred_region
      %s919 = ssub.s32 %s8, 2
      // Predicated region
      $region37: #{_lambda_.5} parent=35 // pred_check
        %p920 = pneg %p98
      $region38: #{_lambda_.5} parent=35 // pred_check_branch
        %922 = sbr.rel (%p920) target = $region40
      $region39: #{_lambda_.5} parent=35 // pred_region
        %p923 = scmp.lt.s32.totalorder %s19, 1
        %s924 = scalar_select %p923, %s19, 1
        %p925 = scmp.lt.s32.totalorder %s20, 0
        %s926 = scalar_select %p925, %s20, 0
        %s927 = sadd.s32 %s926, %s924
        %s928 = smul.addr %s927, 8
        %s929 = scalar_lea.vmem %s2, %s928
      $region40: #{_lambda_.5} parent=35 // pred_fallthru
        _
    $region36: #{_lambda_.5} parent=5 // pred_fallthru
      _
  $region6: #{_lambda_.5} parent=0 // loop_footer
    %s12 = sadd.s32 1, %s8
  $region7: #{_lambda_.5} parent=0 // loop_footer_branch
    %7 = sbr.rel target = $region3
  $region8: #{_lambda_.5} parent=0 // loop_exit
    _

// kernel: _lambda_.4
$region0: #{_lambda_.4}
  #allocation0 [shape = 'u32[]', space=smem, size = 0x4, offset = 0x4, fixed_abs, tag = 'smem constant byte address 0x4 - core index']
  #allocation1 [shape = 'u32[144,128]{1,0:T(1,128)}', space=vmem, size = 0x12000, scoped, tag = 'internal scratch']
  %s0 = inlined_call_operand.vmem [shape: f32[2,6,256], index: 0, kind: input, shape index: {}]
  %s1 = inlined_call_operand.vmem [shape: f32[9,8,6], index: 1, kind: input, shape index: {}]
  %s2 = inlined_call_operand.vmem [shape: f32[2,8,128], index: 2, kind: output, shape index: {}]
  %s3 = sld [smem:[#allocation0]]
  $region41: #{_lambda_.4} parent=0
    _
  %s5 = ssub.s32 1, %s3
  %s6 = scalar_select 0, %s5, %s3
  loop: start=0, step=1, limit=4
  $region2: #{_lambda_.4} parent=0 // loop_pre_header
    _
  $region3: #{_lambda_.4} parent=0 // loop_header
    %s8 = sphi 0, %s12
    %p9 = scmp.ge.s32.totalorder %s8, 4
    %s15 = sphi 0, %s27
    %s16 = sphi 0, %s23
    %s17 = sphi 0, %s15
    %s18 = sphi 0, %s16
    %s19 = sphi 0, %s17
    %s20 = sphi 0, %s18
    %s30 = sphi 0, %s32
    %s33 = sphi 0, %s30
    %s34 = sphi 0, %s33
    %s50 = sphi 0, %s34
    %s54 = sphi 0, %s54
    %s56 = sphi 0, %s54
    %s57 = sphi 0, %s56
    %s71 = sphi 0, %s57
    %s79 = sphi 0, %s81
    %s82 = sphi 0, %s79
    %s83 = sphi 0, %s82
    %s99 = sphi 0, %s83
  $region4: #{_lambda_.4} parent=0 // loop_header_branch
    %11 = sbr.rel (%p9) target = $region8
  $region5: #{_lambda_.4} parent=0 // loop_body
    %s13 = ssub.s32 %s8, 1
    %s14 = ssub.s32 %s8, 2
    %s21 = sadd.s32 1, %s16
    %p22 = scmp.ge.s32.totalorder %s21, 1
    %s23 = scalar_select %p22, 0, %s21
    %s24 = sadd.s32 1, %s15
    %s25 = scalar_select %p22, %s24, %s15
    %p26 = scmp.ge.s32.totalorder %s25, 2
    %s27 = scalar_select %p26, 0, %s25
    %s28 = ssub.s32 %s15, %s27
    %p29 = scmp.eq.s32.totalorder %s28, 0
    %s31 = sadd.s32 %s30, 1
    %s32 = scalar_select %p29, %s30, %s31
    %p35 = pneg %p29
    %p36 = scmp.eq.s32.totalorder %s8, 1
    %p37 = por %p35, %p36
    %p38 = scmp.ne.s32.totalorder %s30, %s33
    %p39 = scmp.eq.s32.totalorder %s8, 0
    %p40 = por %p38, %p39
    %p41 = scmp.ne.s32.totalorder %s30, %s33
    %p42 = scmp.eq.s32.totalorder %s13, 1
    %p43 = por %p41, %p42
    %p44 = scmp.ne.s32.totalorder %s33, %s34
    %p45 = scmp.eq.s32.totalorder %s13, 0
    %p46 = por %p44, %p45
    %p47 = scmp.ne.s32.totalorder %s33, %s34
    %p48 = scmp.eq.s32.totalorder %s14, 1
    %p49 = por %p47, %p48
    %p51 = scmp.ne.s32.totalorder %s34, %s50
    %p52 = scmp.eq.s32.totalorder %s14, 0
    %p53 = por %p51, %p52
    %s55 = sadd.s32 %s54, 1
    %p58 = scmp.eq.s32.totalorder %s8, 1
    %p59 = scmp.ne.s32.totalorder %s54, %s56
    %p60 = scmp.eq.s32.totalorder %s8, 0
    %p61 = por %p59, %p60
    %p62 = scmp.ne.s32.totalorder %s54, %s56
    %p63 = scmp.eq.s32.totalorder %s13, 1
    %p64 = por %p62, %p63
    %p65 = scmp.ne.s32.totalorder %s56, %s57
    %p66 = scmp.eq.s32.totalorder %s13, 0
    %p67 = por %p65, %p66
    %p68 = scmp.ne.s32.totalorder %s56, %s57
    %p69 = scmp.eq.s32.totalorder %s14, 1
    %p70 = por %p68, %p69
    %p72 = scmp.ne.s32.totalorder %s57, %s71
    %p73 = scmp.eq.s32.totalorder %s14, 0
    %p74 = por %p72, %p73
    %s75 = ssub.s32 %s15, %s27
    %s76 = ssub.s32 %s16, %s23
    %s77 = sor.u32 %s75, %s76
    %p78 = scmp.eq.s32.totalorder %s77, 0
    %s80 = sadd.s32 %s79, 1
    %s81 = scalar_select %p78, %s79, %s80
    %p84 = pneg %p78
    %p85 = scmp.eq.s32.totalorder %s8, 1
    %p86 = por %p84, %p85
    %p87 = scmp.ne.s32.totalorder %s79, %s82
    %p88 = scmp.eq.s32.totalorder %s8, 0
    %p89 = por %p87, %p88
    %p90 = scmp.ne.s32.totalorder %s79, %s82
    %p91 = scmp.eq.s32.totalorder %s13, 1
    %p92 = por %p90, %p91
    %p93 = scmp.ne.s32.totalorder %s82, %s83
    %p94 = scmp.eq.s32.totalorder %s13, 0
    %p95 = por %p93, %p94
    %p96 = scmp.ne.s32.totalorder %s82, %s83
    %p97 = scmp.eq.s32.totalorder %s14, 1
    %p98 = por %p96, %p97
    %p100 = scmp.ne.s32.totalorder %s83, %s99
    %p101 = scmp.eq.s32.totalorder %s14, 0
    %p102 = por %p100, %p101
    %p103 = scmp.le.s32.totalorder 1, %s8
    %p104 = scmp.lt.s32.totalorder %s8, 3
    %p105 = pnand %p103, %p104
    %p106 = pneg %p105
    // Predicated region
    $region9: #{_lambda_.4} parent=5 // pred_check
      _
    $region10: #{_lambda_.4} parent=5 // pred_check_branch
      %108 = sbr.rel (%p105) target = $region12
    $region11: #{_lambda_.4} parent=5 // pred_region
      %s109 = ssub.s32 %s8, 1
      // Predicated region
      $region13: #{_lambda_.4} parent=11 // pred_check
        %p110 = pneg %p67
      $region14: #{_lambda_.4} parent=11 // pred_check_branch
        %112 = sbr.rel (%p110) target = $region16
      $region15: #{_lambda_.4} parent=11 // pred_region
        _
      $region16: #{_lambda_.4} parent=11 // pred_fallthru
        _
    $region12: #{_lambda_.4} parent=5 // pred_fallthru
      _
    %p113 = scmp.lt.s32.totalorder %s8, 2
    // Predicated region
    $region17: #{_lambda_.4} parent=5 // pred_check
      %p114 = pneg %p113
    $region18: #{_lambda_.4} parent=5 // pred_check_branch
      %116 = sbr.rel (%p114) target = $region20
    $region19: #{_lambda_.4} parent=5 // pred_region
      // Predicated region
      $region21: #{_lambda_.4} parent=19 // pred_check
        %p117 = pneg %p40
      $region22: #{_lambda_.4} parent=19 // pred_check_branch
        %119 = sbr.rel (%p117) target = $region24
      $region23: #{_lambda_.4} parent=19 // pred_region
        %p120 = scmp.lt.s32.totalorder %s15, 1
        %s121 = scalar_select %p120, %s15, 1
        %s122 = smul.addr %s121, 2
        %s123 = smul.addr %s122, 8
        %s124 = scalar_lea.vmem %s0, %s123
      $region24: #{_lambda_.4} parent=19 // pred_fallthru
        _
    $region20: #{_lambda_.4} parent=5 // pred_fallthru
      _
    %p125 = scmp.le.s32.totalorder 1, %s8
    %p126 = scmp.lt.s32.totalorder %s8, 3
    %p127 = pnand %p125, %p126
    %p128 = pneg %p127
    // Predicated region
    $region25: #{_lambda_.4} parent=5 // pred_check
      _
    $region26: #{_lambda_.4} parent=5 // pred_check_branch
      %130 = sbr.rel (%p127) target = $region28
    $region27: #{_lambda_.4} parent=5 // pred_region
      %s131 = ssub.s32 %s8, 1
      %p132 = scmp.lt.s32.totalorder %s17, 1
      %s133 = scalar_select %p132, %s17, 1
      %s134 = smul.addr %s133, 2
      %s135 = smul.addr %s134, 8
      %s136 = scalar_lea.vmem %s0, %s135
      %p137 = pneg %p46
      %p138 = pneg %p43
      %p139 = pneg %p67
      %p140 = pneg %p64
      %p141 = pneg %p95
      %p142 = pneg %p92
      %p143 = scmp.lt.s32.totalorder %s17, 1
      %s144 = scalar_select %p143, %s17, 1
      %p145 = scmp.lt.s32.totalorder %s18, 0
      %s146 = scalar_select %p145, %s18, 0
      %s147 = sadd.s32 %s146, %s144
      %s148 = smul.addr %s147, 8
      %s149 = scalar_lea.vmem %s2, %s148
      %p150 = scmp.lt.s32.totalorder %s17, 1
      %s151 = scalar_select %p150, %s17, 1
      %s152 = smul.addr %s151, 2
      %s153 = smul.addr %s152, 8
      %s154 = scalar_lea.vmem %s0, %s153
      %p155 = scmp.lt.s32.totalorder %s17, 1
      %s156 = scalar_select %p155, %s17, 1
      %p157 = scmp.lt.s32.totalorder %s18, 0
      %s158 = scalar_select %p157, %s18, 0
      %s159 = sadd.s32 %s158, %s156
      %s160 = smul.addr %s159, 8
      %s161 = scalar_lea.vmem %s2, %s160
      %v162 = vld [vmem:[%s154] sm:$0x3f]
      %v163 = vld [vmem:[%s154 + $0x8] sm:$0x3f]
      %v164 = vld [vmem:[%s1] sm:$0xff]
      %s165 = scalar_lea.vmem %s1, 8
      %v166 = vld [vmem:[%s165] sm:$0xff]
      %169 = vrot.lane.b32.xlu0 %v162, 127
      %v170 = vpop.permute.xlu0 %169
      %171 = vrot.lane.b32.xlu0 %v163, 127
      %v172 = vpop.permute.xlu0 %171
      %vm173 = vcmask 1039360
      %v174 = vsel %vm173, %v170, %v172
      %vm175 = vcmask 48128
      %v177 = vsel %vm175, %v166, 0
      %vm179 = vcmask 1045504
      %v180 = vsel %vm179, %v174, 0
      %182 = vmatprep.subr.mxu0 0.0
      %183 = vmatpush1.msra.mxu0 %v180
      %184 = vmatprep.subr.mxu0 0.0
      %185 = vmatpush1.msra.mxu0 0.0
      %186 = vmatprep.subr.mxu0 0.0
      %187 = vmatpush1.msra.mxu0 0.0
      %188 = vmatprep.subr.mxu0 0.0
      %189 = vmatpush1.msra.mxu0 0.0
      %190 = vmatprep.subr.mxu0 0.0
      %191 = vmatpush1.msra.mxu0 0.0
      %192 = vmatprep.subr.mxu0 0.0
      %193 = vmatpush1.msra.mxu0 0.0
      %194 = vmatprep.subr.mxu0 0.0
      %195 = vmatpush1.msra.mxu0 0.0
      %196 = vmatprep.subr.mxu0 0.0
      %197 = vmatpush1.msra.mxu0 0.0
      %198 = vmatprep.subr.mxu0 0.0
      %199 = vmatpush1.msra.mxu0 0.0
      %200 = vmatprep.subr.mxu0 0.0
      %201 = vmatpush1.msra.mxu0 0.0
      %202 = vmatprep.subr.mxu0 0.0
      %203 = vmatpush1.msra.mxu0 0.0
      %204 = vmatprep.subr.mxu0 0.0
      %205 = vmatpush1.msra.mxu0 0.0
      %206 = vmatprep.subr.mxu0 0.0
      %207 = vmatpush1.msra.mxu0 0.0
      %208 = vmatprep.subr.mxu0 0.0
      %209 = vmatpush1.msra.mxu0 0.0
      %210 = vmatprep.subr.mxu0 0.0
      %211 = vmatpush1.msra.mxu0 0.0
      %212 = vmatprep.subr.mxu0 0.0
      %213 = vmatpush1.msra.mxu0 0.0
      %214 = vmatprep.subr.mxu0 0.0
      %215 = vmatpush1.msra.mxu0 0.0
      %216 = vmatprep.subr.mxu0 0.0
      %217 = vmatpush1.msra.mxu0 0.0
      %218 = vmatprep.subr.mxu0 0.0
      %219 = vmatpush1.msra.mxu0 0.0
      %220 = vmatprep.subr.mxu0 0.0
      %221 = vmatpush1.msra.mxu0 0.0
      %222 = vmatprep.subr.mxu0 0.0
      %223 = vmatpush1.msra.mxu0 0.0
      %224 = vmatprep.subr.mxu0 0.0
      %225 = vmatpush1.msra.mxu0 0.0
      %226 = vmatprep.subr.mxu0 0.0
      %227 = vmatpush1.msra.mxu0 0.0
      %228 = vmatprep.subr.mxu0 0.0
      %229 = vmatpush1.msra.mxu0 0.0
      %230 = vmatprep.subr.mxu0 0.0
      %231 = vmatpush1.msra.mxu0 0.0
      %232 = vmatprep.subr.mxu0 0.0
      %233 = vmatpush1.msra.mxu0 0.0
      %234 = vmatprep.subr.mxu0 0.0
      %235 = vmatpush1.msra.mxu0 0.0
      %236 = vmatprep.subr.mxu0 0.0
      %237 = vmatpush1.msra.mxu0 0.0
      %238 = vmatprep.subr.mxu0 0.0
      %239 = vmatpush1.msra.mxu0 0.0
      %240 = vmatprep.subr.mxu0 0.0
      %241 = vmatpush1.msra.mxu0 0.0
      %242 = vmatprep.subr.mxu0 0.0
      %243 = vmatpush1.msra.mxu0 0.0
      %244 = vmatprep.subr.mxu0 0.0
      %245 = vmatpush1.msra.mxu0 0.0
      %246 = vmatprep.mubr.f32.mxu0 0.0
      %247 = vmatmul.mubr.f32.gmra.mrb[0].mxu0 %v177
      %v248 = vpop.f32.mrb[0].mxu0
      %v249 = vadd.f32 0.0, %v248
      %v250 = vpop.f32.mrb[0].mxu0
      %251 = vdwg.mxu0
      %v253 = vsel %vm175, %v164, 0
      %v255 = vsel %vm179, %v162, 0
      %257 = vmatprep.subr.mxu0 0.0
      %258 = vmatpush1.msra.mxu0 %v255
      %259 = vmatprep.subr.mxu0 0.0
      %260 = vmatpush1.msra.mxu0 0.0
      %261 = vmatprep.subr.mxu0 0.0
      %262 = vmatpush1.msra.mxu0 0.0
      %263 = vmatprep.subr.mxu0 0.0
      %264 = vmatpush1.msra.mxu0 0.0
      %265 = vmatprep.subr.mxu0 0.0
      %266 = vmatpush1.msra.mxu0 0.0
      %267 = vmatprep.subr.mxu0 0.0
      %268 = vmatpush1.msra.mxu0 0.0
      %269 = vmatprep.subr.mxu0 0.0
      %270 = vmatpush1.msra.mxu0 0.0
      %271 = vmatprep.subr.mxu0 0.0
      %272 = vmatpush1.msra.mxu0 0.0
      %273 = vmatprep.subr.mxu0 0.0
      %274 = vmatpush1.msra.mxu0 0.0
      %275 = vmatprep.subr.mxu0 0.0
      %276 = vmatpush1.msra.mxu0 0.0
      %277 = vmatprep.subr.mxu0 0.0
      %278 = vmatpush1.msra.mxu0 0.0
      %279 = vmatprep.subr.mxu0 0.0
      %280 = vmatpush1.msra.mxu0 0.0
      %281 = vmatprep.subr.mxu0 0.0
      %282 = vmatpush1.msra.mxu0 0.0
      %283 = vmatprep.subr.mxu0 0.0
      %284 = vmatpush1.msra.mxu0 0.0
      %285 = vmatprep.subr.mxu0 0.0
      %286 = vmatpush1.msra.mxu0 0.0
      %287 = vmatprep.subr.mxu0 0.0
      %288 = vmatpush1.msra.mxu0 0.0
      %289 = vmatprep.subr.mxu0 0.0
      %290 = vmatpush1.msra.mxu0 0.0
      %291 = vmatprep.subr.mxu0 0.0
      %292 = vmatpush1.msra.mxu0 0.0
      %293 = vmatprep.subr.mxu0 0.0
      %294 = vmatpush1.msra.mxu0 0.0
      %295 = vmatprep.subr.mxu0 0.0
      %296 = vmatpush1.msra.mxu0 0.0
      %297 = vmatprep.subr.mxu0 0.0
      %298 = vmatpush1.msra.mxu0 0.0
      %299 = vmatprep.subr.mxu0 0.0
      %300 = vmatpush1.msra.mxu0 0.0
      %301 = vmatprep.subr.mxu0 0.0
      %302 = vmatpush1.msra.mxu0 0.0
      %303 = vmatprep.subr.mxu0 0.0
      %304 = vmatpush1.msra.mxu0 0.0
      %305 = vmatprep.subr.mxu0 0.0
      %306 = vmatpush1.msra.mxu0 0.0
      %307 = vmatprep.subr.mxu0 0.0
      %308 = vmatpush1.msra.mxu0 0.0
      %309 = vmatprep.subr.mxu0 0.0
      %310 = vmatpush1.msra.mxu0 0.0
      %311 = vmatprep.subr.mxu0 0.0
      %312 = vmatpush1.msra.mxu0 0.0
      %313 = vmatprep.subr.mxu0 0.0
      %314 = vmatpush1.msra.mxu0 0.0
      %315 = vmatprep.subr.mxu0 0.0
      %316 = vmatpush1.msra.mxu0 0.0
      %317 = vmatprep.subr.mxu0 0.0
      %318 = vmatpush1.msra.mxu0 0.0
      %319 = vmatprep.subr.mxu0 0.0
      %320 = vmatpush1.msra.mxu0 0.0
      %321 = vmatprep.mubr.f32.mxu0 0.0
      %322 = vmatmul.mubr.f32.gmra.mrb[0].mxu0 %v253
      %v323 = vpop.f32.mrb[0].mxu0
      %v324 = vadd.f32 %v249, %v323
      %v325 = vpop.f32.mrb[0].mxu0
      %326 = vdwg.mxu0
      %s327 = scalar_lea.vmem %s1, 16
      %v328 = vld [vmem:[%s327] sm:$0xff]
      %329 = vrot.lane.b32.xlu0 %v162, 126
      %v330 = vpop.permute.xlu0 %329
      %331 = vrot.lane.b32.xlu0 %v163, 126
      %v332 = vpop.permute.xlu0 %331
      %vm333 = vcmask 1031168
      %v334 = vsel %vm333, %v330, %v332
      %v336 = vsel %vm175, %v328, 0
      %v338 = vsel %vm179, %v334, 0
      %340 = vmatprep.subr.mxu0 0.0
      %341 = vmatpush1.msra.mxu0 %v338
      %342 = vmatprep.subr.mxu0 0.0
      %343 = vmatpush1.msra.mxu0 0.0
      %344 = vmatprep.subr.mxu0 0.0
      %345 = vmatpush1.msra.mxu0 0.0
      %346 = vmatprep.subr.mxu0 0.0
      %347 = vmatpush1.msra.mxu0 0.0
      %348 = vmatprep.subr.mxu0 0.0
      %349 = vmatpush1.msra.mxu0 0.0
      %350 = vmatprep.subr.mxu0 0.0
      %351 = vmatpush1.msra.mxu0 0.0
      %352 = vmatprep.subr.mxu0 0.0
      %353 = vmatpush1.msra.mxu0 0.0
      %354 = vmatprep.subr.mxu0 0.0
      %355 = vmatpush1.msra.mxu0 0.0
      %356 = vmatprep.subr.mxu0 0.0
      %357 = vmatpush1.msra.mxu0 0.0
      %358 = vmatprep.subr.mxu0 0.0
      %359 = vmatpush1.msra.mxu0 0.0
      %360 = vmatprep.subr.mxu0 0.0
      %361 = vmatpush1.msra.mxu0 0.0
      %362 = vmatprep.subr.mxu0 0.0
      %363 = vmatpush1.msra.mxu0 0.0
      %364 = vmatprep.subr.mxu0 0.0
      %365 = vmatpush1.msra.mxu0 0.0
      %366 = vmatprep.subr.mxu0 0.0
      %367 = vmatpush1.msra.mxu0 0.0
      %368 = vmatprep.subr.mxu0 0.0
      %369 = vmatpush1.msra.mxu0 0.0
      %370 = vmatprep.subr.mxu0 0.0
      %371 = vmatpush1.msra.mxu0 0.0
      %372 = vmatprep.subr.mxu0 0.0
      %373 = vmatpush1.msra.mxu0 0.0
      %374 = vmatprep.subr.mxu0 0.0
      %375 = vmatpush1.msra.mxu0 0.0
      %376 = vmatprep.subr.mxu0 0.0
      %377 = vmatpush1.msra.mxu0 0.0
      %378 = vmatprep.subr.mxu0 0.0
      %379 = vmatpush1.msra.mxu0 0.0
      %380 = vmatprep.subr.mxu0 0.0
      %381 = vmatpush1.msra.mxu0 0.0
      %382 = vmatprep.subr.mxu0 0.0
      %383 = vmatpush1.msra.mxu0 0.0
      %384 = vmatprep.subr.mxu0 0.0
      %385 = vmatpush1.msra.mxu0 0.0
      %386 = vmatprep.subr.mxu0 0.0
      %387 = vmatpush1.msra.mxu0 0.0
      %388 = vmatprep.subr.mxu0 0.0
      %389 = vmatpush1.msra.mxu0 0.0
      %390 = vmatprep.subr.mxu0 0.0
      %391 = vmatpush1.msra.mxu0 0.0
      %392 = vmatprep.subr.mxu0 0.0
      %393 = vmatpush1.msra.mxu0 0.0
      %394 = vmatprep.subr.mxu0 0.0
      %395 = vmatpush1.msra.mxu0 0.0
      %396 = vmatprep.subr.mxu0 0.0
      %397 = vmatpush1.msra.mxu0 0.0
      %398 = vmatprep.subr.mxu0 0.0
      %399 = vmatpush1.msra.mxu0 0.0
      %400 = vmatprep.subr.mxu0 0.0
      %401 = vmatpush1.msra.mxu0 0.0
      %402 = vmatprep.subr.mxu0 0.0
      %403 = vmatpush1.msra.mxu0 0.0
      %404 = vmatprep.mubr.f32.mxu0 0.0
      %405 = vmatmul.mubr.f32.gmra.mrb[0].mxu0 %v336
      %v406 = vpop.f32.mrb[0].mxu0
      %v407 = vadd.f32 0.0, %v406
      %v408 = vpop.f32.mrb[0].mxu0
      %409 = vdwg.mxu0
      %v410 = vadd.f32 %v324, %v407
      %s411 = scalar_lea.vmem %s1, 24
      %v412 = vld [vmem:[%s411] sm:$0xff]
      %413 = vrot.lane.b32.xlu0 %v162, 118
      %v414 = vpop.permute.xlu0 %413
      %415 = vrot.lane.b32.xlu0 %v163, 118
      %v416 = vpop.permute.xlu0 %415
      %vm417 = vcmask 965632
      %v418 = vsel %vm417, %v414, %v416
      %v420 = vsel %vm175, %v412, 0
      %v422 = vsel %vm179, %v418, 0
      %424 = vmatprep.subr.mxu0 0.0
      %425 = vmatpush1.msra.mxu0 %v422
      %426 = vmatprep.subr.mxu0 0.0
      %427 = vmatpush1.msra.mxu0 0.0
      %428 = vmatprep.subr.mxu0 0.0
      %429 = vmatpush1.msra.mxu0 0.0
      %430 = vmatprep.subr.mxu0 0.0
      %431 = vmatpush1.msra.mxu0 0.0
      %432 = vmatprep.subr.mxu0 0.0
      %433 = vmatpush1.msra.mxu0 0.0
      %434 = vmatprep.subr.mxu0 0.0
      %435 = vmatpush1.msra.mxu0 0.0
      %436 = vmatprep.subr.mxu0 0.0
      %437 = vmatpush1.msra.mxu0 0.0
      %438 = vmatprep.subr.mxu0 0.0
      %439 = vmatpush1.msra.mxu0 0.0
      %440 = vmatprep.subr.mxu0 0.0
      %441 = vmatpush1.msra.mxu0 0.0
      %442 = vmatprep.subr.mxu0 0.0
      %443 = vmatpush1.msra.mxu0 0.0
      %444 = vmatprep.subr.mxu0 0.0
      %445 = vmatpush1.msra.mxu0 0.0
      %446 = vmatprep.subr.mxu0 0.0
      %447 = vmatpush1.msra.mxu0 0.0
      %448 = vmatprep.subr.mxu0 0.0
      %449 = vmatpush1.msra.mxu0 0.0
      %450 = vmatprep.subr.mxu0 0.0
      %451 = vmatpush1.msra.mxu0 0.0
      %452 = vmatprep.subr.mxu0 0.0
      %453 = vmatpush1.msra.mxu0 0.0
      %454 = vmatprep.subr.mxu0 0.0
      %455 = vmatpush1.msra.mxu0 0.0
      %456 = vmatprep.subr.mxu0 0.0
      %457 = vmatpush1.msra.mxu0 0.0
      %458 = vmatprep.subr.mxu0 0.0
      %459 = vmatpush1.msra.mxu0 0.0
      %460 = vmatprep.subr.mxu0 0.0
      %461 = vmatpush1.msra.mxu0 0.0
      %462 = vmatprep.subr.mxu0 0.0
      %463 = vmatpush1.msra.mxu0 0.0
      %464 = vmatprep.subr.mxu0 0.0
      %465 = vmatpush1.msra.mxu0 0.0
      %466 = vmatprep.subr.mxu0 0.0
      %467 = vmatpush1.msra.mxu0 0.0
      %468 = vmatprep.subr.mxu0 0.0
      %469 = vmatpush1.msra.mxu0 0.0
      %470 = vmatprep.subr.mxu0 0.0
      %471 = vmatpush1.msra.mxu0 0.0
      %472 = vmatprep.subr.mxu0 0.0
      %473 = vmatpush1.msra.mxu0 0.0
      %474 = vmatprep.subr.mxu0 0.0
      %475 = vmatpush1.msra.mxu0 0.0
      %476 = vmatprep.subr.mxu0 0.0
      %477 = vmatpush1.msra.mxu0 0.0
      %478 = vmatprep.subr.mxu0 0.0
      %479 = vmatpush1.msra.mxu0 0.0
      %480 = vmatprep.subr.mxu0 0.0
      %481 = vmatpush1.msra.mxu0 0.0
      %482 = vmatprep.subr.mxu0 0.0
      %483 = vmatpush1.msra.mxu0 0.0
      %484 = vmatprep.subr.mxu0 0.0
      %485 = vmatpush1.msra.mxu0 0.0
      %486 = vmatprep.subr.mxu0 0.0
      %487 = vmatpush1.msra.mxu0 0.0
      %488 = vmatprep.mubr.f32.mxu0 0.0
      %489 = vmatmul.mubr.f32.gmra.mrb[0].mxu0 %v420
      %v490 = vpop.f32.mrb[0].mxu0
      %v491 = vadd.f32 0.0, %v490
      %v492 = vpop.f32.mrb[0].mxu0
      %493 = vdwg.mxu0
      %v494 = vadd.f32 %v410, %v491
      %s495 = scalar_lea.vmem %s1, 32
      %v496 = vld [vmem:[%s495] sm:$0xff]
      %497 = vrot.lane.b32.xlu0 %v162, 117
      %v498 = vpop.permute.xlu0 %497
      %499 = vrot.lane.b32.xlu0 %v163, 117
      %v500 = vpop.permute.xlu0 %499
      %vm501 = vcmask 957440
      %v502 = vsel %vm501, %v498, %v500
      %v504 = vsel %vm175, %v496, 0
      %v506 = vsel %vm179, %v502, 0
      %508 = vmatprep.subr.mxu0 0.0
      %509 = vmatpush1.msra.mxu0 %v506
      %510 = vmatprep.subr.mxu0 0.0
      %511 = vmatpush1.msra.mxu0 0.0
      %512 = vmatprep.subr.mxu0 0.0
      %513 = vmatpush1.msra.mxu0 0.0
      %514 = vmatprep.subr.mxu0 0.0
      %515 = vmatpush1.msra.mxu0 0.0
      %516 = vmatprep.subr.mxu0 0.0
      %517 = vmatpush1.msra.mxu0 0.0
      %518 = vmatprep.subr.mxu0 0.0
      %519 = vmatpush1.msra.mxu0 0.0
      %520 = vmatprep.subr.mxu0 0.0
      %521 = vmatpush1.msra.mxu0 0.0
      %522 = vmatprep.subr.mxu0 0.0
      %523 = vmatpush1.msra.mxu0 0.0
      %524 = vmatprep.subr.mxu0 0.0
      %525 = vmatpush1.msra.mxu0 0.0
      %526 = vmatprep.subr.mxu0 0.0
      %527 = vmatpush1.msra.mxu0 0.0
      %528 = vmatprep.subr.mxu0 0.0
      %529 = vmatpush1.msra.mxu0 0.0
      %530 = vmatprep.subr.mxu0 0.0
      %531 = vmatpush1.msra.mxu0 0.0
      %532 = vmatprep.subr.mxu0 0.0
      %533 = vmatpush1.msra.mxu0 0.0
      %534 = vmatprep.subr.mxu0 0.0
      %535 = vmatpush1.msra.mxu0 0.0
      %536 = vmatprep.subr.mxu0 0.0
      %537 = vmatpush1.msra.mxu0 0.0
      %538 = vmatprep.subr.mxu0 0.0
      %539 = vmatpush1.msra.mxu0 0.0
      %540 = vmatprep.subr.mxu0 0.0
      %541 = vmatpush1.msra.mxu0 0.0
      %542 = vmatprep.subr.mxu0 0.0
      %543 = vmatpush1.msra.mxu0 0.0
      %544 = vmatprep.subr.mxu0 0.0
      %545 = vmatpush1.msra.mxu0 0.0
      %546 = vmatprep.subr.mxu0 0.0
      %547 = vmatpush1.msra.mxu0 0.0
      %548 = vmatprep.subr.mxu0 0.0
      %549 = vmatpush1.msra.mxu0 0.0
      %550 = vmatprep.subr.mxu0 0.0
      %551 = vmatpush1.msra.mxu0 0.0
      %552 = vmatprep.subr.mxu0 0.0
      %553 = vmatpush1.msra.mxu0 0.0
      %554 = vmatprep.subr.mxu0 0.0
      %555 = vmatpush1.msra.mxu0 0.0
      %556 = vmatprep.subr.mxu0 0.0
      %557 = vmatpush1.msra.mxu0 0.0
      %558 = vmatprep.subr.mxu0 0.0
      %559 = vmatpush1.msra.mxu0 0.0
      %560 = vmatprep.subr.mxu0 0.0
      %561 = vmatpush1.msra.mxu0 0.0
      %562 = vmatprep.subr.mxu0 0.0
      %563 = vmatpush1.msra.mxu0 0.0
      %564 = vmatprep.subr.mxu0 0.0
      %565 = vmatpush1.msra.mxu0 0.0
      %566 = vmatprep.subr.mxu0 0.0
      %567 = vmatpush1.msra.mxu0 0.0
      %568 = vmatprep.subr.mxu0 0.0
      %569 = vmatpush1.msra.mxu0 0.0
      %570 = vmatprep.subr.mxu0 0.0
      %571 = vmatpush1.msra.mxu0 0.0
      %572 = vmatprep.mubr.f32.mxu0 0.0
      %573 = vmatmul.mubr.f32.gmra.mrb[0].mxu0 %v504
      %v574 = vpop.f32.mrb[0].mxu0
      %v575 = vadd.f32 0.0, %v574
      %v576 = vpop.f32.mrb[0].mxu0
      %577 = vdwg.mxu0
      %v578 = vadd.f32 %v494, %v575
      %s579 = scalar_lea.vmem %s1, 40
      %v580 = vld [vmem:[%s579] sm:$0xff]
      %581 = vrot.lane.b32.xlu0 %v162, 116
      %v582 = vpop.permute.xlu0 %581
      %583 = vrot.lane.b32.xlu0 %v163, 116
      %v584 = vpop.permute.xlu0 %583
      %vm585 = vcmask 949248
      %v586 = vsel %vm585, %v582, %v584
      %v588 = vsel %vm175, %v580, 0
      %v590 = vsel %vm179, %v586, 0
      %592 = vmatprep.subr.mxu0 0.0
      %593 = vmatpush1.msra.mxu0 %v590
      %594 = vmatprep.subr.mxu0 0.0
      %595 = vmatpush1.msra.mxu0 0.0
      %596 = vmatprep.subr.mxu0 0.0
      %597 = vmatpush1.msra.mxu0 0.0
      %598 = vmatprep.subr.mxu0 0.0
      %599 = vmatpush1.msra.mxu0 0.0
      %600 = vmatprep.subr.mxu0 0.0
      %601 = vmatpush1.msra.mxu0 0.0
      %602 = vmatprep.subr.mxu0 0.0
      %603 = vmatpush1.msra.mxu0 0.0
      %604 = vmatprep.subr.mxu0 0.0
      %605 = vmatpush1.msra.mxu0 0.0
      %606 = vmatprep.subr.mxu0 0.0
      %607 = vmatpush1.msra.mxu0 0.0
      %608 = vmatprep.subr.mxu0 0.0
      %609 = vmatpush1.msra.mxu0 0.0
      %610 = vmatprep.subr.mxu0 0.0
      %611 = vmatpush1.msra.mxu0 0.0
      %612 = vmatprep.subr.mxu0 0.0
      %613 = vmatpush1.msra.mxu0 0.0
      %614 = vmatprep.subr.mxu0 0.0
      %615 = vmatpush1.msra.mxu0 0.0
      %616 = vmatprep.subr.mxu0 0.0
      %617 = vmatpush1.msra.mxu0 0.0
      %618 = vmatprep.subr.mxu0 0.0
      %619 = vmatpush1.msra.mxu0 0.0
      %620 = vmatprep.subr.mxu0 0.0
      %621 = vmatpush1.msra.mxu0 0.0
      %622 = vmatprep.subr.mxu0 0.0
      %623 = vmatpush1.msra.mxu0 0.0
      %624 = vmatprep.subr.mxu0 0.0
      %625 = vmatpush1.msra.mxu0 0.0
      %626 = vmatprep.subr.mxu0 0.0
      %627 = vmatpush1.msra.mxu0 0.0
      %628 = vmatprep.subr.mxu0 0.0
      %629 = vmatpush1.msra.mxu0 0.0
      %630 = vmatprep.subr.mxu0 0.0
      %631 = vmatpush1.msra.mxu0 0.0
      %632 = vmatprep.subr.mxu0 0.0
      %633 = vmatpush1.msra.mxu0 0.0
      %634 = vmatprep.subr.mxu0 0.0
      %635 = vmatpush1.msra.mxu0 0.0
      %636 = vmatprep.subr.mxu0 0.0
      %637 = vmatpush1.msra.mxu0 0.0
      %638 = vmatprep.subr.mxu0 0.0
      %639 = vmatpush1.msra.mxu0 0.0
      %640 = vmatprep.subr.mxu0 0.0
      %641 = vmatpush1.msra.mxu0 0.0
      %642 = vmatprep.subr.mxu0 0.0
      %643 = vmatpush1.msra.mxu0 0.0
      %644 = vmatprep.subr.mxu0 0.0
      %645 = vmatpush1.msra.mxu0 0.0
      %646 = vmatprep.subr.mxu0 0.0
      %647 = vmatpush1.msra.mxu0 0.0
      %648 = vmatprep.subr.mxu0 0.0
      %649 = vmatpush1.msra.mxu0 0.0
      %650 = vmatprep.subr.mxu0 0.0
      %651 = vmatpush1.msra.mxu0 0.0
      %652 = vmatprep.subr.mxu0 0.0
      %653 = vmatpush1.msra.mxu0 0.0
      %654 = vmatprep.subr.mxu0 0.0
      %655 = vmatpush1.msra.mxu0 0.0
      %656 = vmatprep.mubr.f32.mxu0 0.0
      %657 = vmatmul.mubr.f32.gmra.mrb[0].mxu0 %v588
      %v658 = vpop.f32.mrb[0].mxu0
      %v659 = vadd.f32 0.0, %v658
      %v660 = vpop.f32.mrb[0].mxu0
      %661 = vdwg.mxu0
      %v662 = vadd.f32 %v578, %v659
      %s663 = scalar_lea.vmem %s1, 48
      %v664 = vld [vmem:[%s663] sm:$0xff]
      %665 = vrot.lane.b32.xlu0 %v162, 108
      %v666 = vpop.permute.xlu0 %665
      %667 = vrot.lane.b32.xlu0 %v163, 108
      %v668 = vpop.permute.xlu0 %667
      %vm669 = vcmask 883712
      %v670 = vsel %vm669, %v666, %v668
      %v672 = vsel %vm175, %v664, 0
      %v674 = vsel %vm179, %v670, 0
      %676 = vmatprep.subr.mxu0 0.0
      %677 = vmatpush1.msra.mxu0 %v674
      %678 = vmatprep.subr.mxu0 0.0
      %679 = vmatpush1.msra.mxu0 0.0
      %680 = vmatprep.subr.mxu0 0.0
      %681 = vmatpush1.msra.mxu0 0.0
      %682 = vmatprep.subr.mxu0 0.0
      %683 = vmatpush1.msra.mxu0 0.0
      %684 = vmatprep.subr.mxu0 0.0
      %685 = vmatpush1.msra.mxu0 0.0
      %686 = vmatprep.subr.mxu0 0.0
      %687 = vmatpush1.msra.mxu0 0.0
      %688 = vmatprep.subr.mxu0 0.0
      %689 = vmatpush1.msra.mxu0 0.0
      %690 = vmatprep.subr.mxu0 0.0
      %691 = vmatpush1.msra.mxu0 0.0
      %692 = vmatprep.subr.mxu0 0.0
      %693 = vmatpush1.msra.mxu0 0.0
      %694 = vmatprep.subr.mxu0 0.0
      %695 = vmatpush1.msra.mxu0 0.0
      %696 = vmatprep.subr.mxu0 0.0
      %697 = vmatpush1.msra.mxu0 0.0
      %698 = vmatprep.subr.mxu0 0.0
      %699 = vmatpush1.msra.mxu0 0.0
      %700 = vmatprep.subr.mxu0 0.0
      %701 = vmatpush1.msra.mxu0 0.0
      %702 = vmatprep.subr.mxu0 0.0
      %703 = vmatpush1.msra.mxu0 0.0
      %704 = vmatprep.subr.mxu0 0.0
      %705 = vmatpush1.msra.mxu0 0.0
      %706 = vmatprep.subr.mxu0 0.0
      %707 = vmatpush1.msra.mxu0 0.0
      %708 = vmatprep.subr.mxu0 0.0
      %709 = vmatpush1.msra.mxu0 0.0
      %710 = vmatprep.subr.mxu0 0.0
      %711 = vmatpush1.msra.mxu0 0.0
      %712 = vmatprep.subr.mxu0 0.0
      %713 = vmatpush1.msra.mxu0 0.0
      %714 = vmatprep.subr.mxu0 0.0
      %715 = vmatpush1.msra.mxu0 0.0
      %716 = vmatprep.subr.mxu0 0.0
      %717 = vmatpush1.msra.mxu0 0.0
      %718 = vmatprep.subr.mxu0 0.0
      %719 = vmatpush1.msra.mxu0 0.0
      %720 = vmatprep.subr.mxu0 0.0
      %721 = vmatpush1.msra.mxu0 0.0
      %722 = vmatprep.subr.mxu0 0.0
      %723 = vmatpush1.msra.mxu0 0.0
      %724 = vmatprep.subr.mxu0 0.0
      %725 = vmatpush1.msra.mxu0 0.0
      %726 = vmatprep.subr.mxu0 0.0
      %727 = vmatpush1.msra.mxu0 0.0
      %728 = vmatprep.subr.mxu0 0.0
      %729 = vmatpush1.msra.mxu0 0.0
      %730 = vmatprep.subr.mxu0 0.0
      %731 = vmatpush1.msra.mxu0 0.0
      %732 = vmatprep.subr.mxu0 0.0
      %733 = vmatpush1.msra.mxu0 0.0
      %734 = vmatprep.subr.mxu0 0.0
      %735 = vmatpush1.msra.mxu0 0.0
      %736 = vmatprep.subr.mxu0 0.0
      %737 = vmatpush1.msra.mxu0 0.0
      %738 = vmatprep.subr.mxu0 0.0
      %739 = vmatpush1.msra.mxu0 0.0
      %740 = vmatprep.mubr.f32.mxu0 0.0
      %741 = vmatmul.mubr.f32.gmra.mrb[0].mxu0 %v672
      %v742 = vpop.f32.mrb[0].mxu0
      %v743 = vadd.f32 0.0, %v742
      %v744 = vpop.f32.mrb[0].mxu0
      %745 = vdwg.mxu0
      %v746 = vadd.f32 %v662, %v743
      %s747 = scalar_lea.vmem %s1, 56
      %v748 = vld [vmem:[%s747] sm:$0xff]
      %749 = vrot.lane.b32.xlu0 %v162, 107
      %v750 = vpop.permute.xlu0 %749
      %751 = vrot.lane.b32.xlu0 %v163, 107
      %v752 = vpop.permute.xlu0 %751
      %vm753 = vcmask 875520
      %v754 = vsel %vm753, %v750, %v752
      %v756 = vsel %vm175, %v748, 0
      %v758 = vsel %vm179, %v754, 0
      %760 = vmatprep.subr.mxu0 0.0
      %761 = vmatpush1.msra.mxu0 %v758
      %762 = vmatprep.subr.mxu0 0.0
      %763 = vmatpush1.msra.mxu0 0.0
      %764 = vmatprep.subr.mxu0 0.0
      %765 = vmatpush1.msra.mxu0 0.0
      %766 = vmatprep.subr.mxu0 0.0
      %767 = vmatpush1.msra.mxu0 0.0
      %768 = vmatprep.subr.mxu0 0.0
      %769 = vmatpush1.msra.mxu0 0.0
      %770 = vmatprep.subr.mxu0 0.0
      %771 = vmatpush1.msra.mxu0 0.0
      %772 = vmatprep.subr.mxu0 0.0
      %773 = vmatpush1.msra.mxu0 0.0
      %774 = vmatprep.subr.mxu0 0.0
      %775 = vmatpush1.msra.mxu0 0.0
      %776 = vmatprep.subr.mxu0 0.0
      %777 = vmatpush1.msra.mxu0 0.0
      %778 = vmatprep.subr.mxu0 0.0
      %779 = vmatpush1.msra.mxu0 0.0
      %780 = vmatprep.subr.mxu0 0.0
      %781 = vmatpush1.msra.mxu0 0.0
      %782 = vmatprep.subr.mxu0 0.0
      %783 = vmatpush1.msra.mxu0 0.0
      %784 = vmatprep.subr.mxu0 0.0
      %785 = vmatpush1.msra.mxu0 0.0
      %786 = vmatprep.subr.mxu0 0.0
      %787 = vmatpush1.msra.mxu0 0.0
      %788 = vmatprep.subr.mxu0 0.0
      %789 = vmatpush1.msra.mxu0 0.0
      %790 = vmatprep.subr.mxu0 0.0
      %791 = vmatpush1.msra.mxu0 0.0
      %792 = vmatprep.subr.mxu0 0.0
      %793 = vmatpush1.msra.mxu0 0.0
      %794 = vmatprep.subr.mxu0 0.0
      %795 = vmatpush1.msra.mxu0 0.0
      %796 = vmatprep.subr.mxu0 0.0
      %797 = vmatpush1.msra.mxu0 0.0
      %798 = vmatprep.subr.mxu0 0.0
      %799 = vmatpush1.msra.mxu0 0.0
      %800 = vmatprep.subr.mxu0 0.0
      %801 = vmatpush1.msra.mxu0 0.0
      %802 = vmatprep.subr.mxu0 0.0
      %803 = vmatpush1.msra.mxu0 0.0
      %804 = vmatprep.subr.mxu0 0.0
      %805 = vmatpush1.msra.mxu0 0.0
      %806 = vmatprep.subr.mxu0 0.0
      %807 = vmatpush1.msra.mxu0 0.0
      %808 = vmatprep.subr.mxu0 0.0
      %809 = vmatpush1.msra.mxu0 0.0
      %810 = vmatprep.subr.mxu0 0.0
      %811 = vmatpush1.msra.mxu0 0.0
      %812 = vmatprep.subr.mxu0 0.0
      %813 = vmatpush1.msra.mxu0 0.0
      %814 = vmatprep.subr.mxu0 0.0
      %815 = vmatpush1.msra.mxu0 0.0
      %816 = vmatprep.subr.mxu0 0.0
      %817 = vmatpush1.msra.mxu0 0.0
      %818 = vmatprep.subr.mxu0 0.0
      %819 = vmatpush1.msra.mxu0 0.0
      %820 = vmatprep.subr.mxu0 0.0
      %821 = vmatpush1.msra.mxu0 0.0
      %822 = vmatprep.subr.mxu0 0.0
      %823 = vmatpush1.msra.mxu0 0.0
      %824 = vmatprep.mubr.f32.mxu0 0.0
      %825 = vmatmul.mubr.f32.gmra.mrb[0].mxu0 %v756
      %v826 = vpop.f32.mrb[0].mxu0
      %v827 = vadd.f32 0.0, %v826
      %v828 = vpop.f32.mrb[0].mxu0
      %829 = vdwg.mxu0
      %v830 = vadd.f32 %v746, %v827
      %s831 = scalar_lea.vmem %s1, 64
      %v832 = vld [vmem:[%s831] sm:$0xff]
      %833 = vrot.lane.b32.xlu0 %v162, 106
      %v834 = vpop.permute.xlu0 %833
      %835 = vrot.lane.b32.xlu0 %v163, 106
      %v836 = vpop.permute.xlu0 %835
      %vm837 = vcmask 867328
      %v838 = vsel %vm837, %v834, %v836
      %v840 = vsel %vm175, %v832, 0
      %v842 = vsel %vm179, %v838, 0
      %844 = vmatprep.subr.mxu0 0.0
      %845 = vmatpush1.msra.mxu0 %v842
      %846 = vmatprep.subr.mxu0 0.0
      %847 = vmatpush1.msra.mxu0 0.0
      %848 = vmatprep.subr.mxu0 0.0
      %849 = vmatpush1.msra.mxu0 0.0
      %850 = vmatprep.subr.mxu0 0.0
      %851 = vmatpush1.msra.mxu0 0.0
      %852 = vmatprep.subr.mxu0 0.0
      %853 = vmatpush1.msra.mxu0 0.0
      %854 = vmatprep.subr.mxu0 0.0
      %855 = vmatpush1.msra.mxu0 0.0
      %856 = vmatprep.subr.mxu0 0.0
      %857 = vmatpush1.msra.mxu0 0.0
      %858 = vmatprep.subr.mxu0 0.0
      %859 = vmatpush1.msra.mxu0 0.0
      %860 = vmatprep.subr.mxu0 0.0
      %861 = vmatpush1.msra.mxu0 0.0
      %862 = vmatprep.subr.mxu0 0.0
      %863 = vmatpush1.msra.mxu0 0.0
      %864 = vmatprep.subr.mxu0 0.0
      %865 = vmatpush1.msra.mxu0 0.0
      %866 = vmatprep.subr.mxu0 0.0
      %867 = vmatpush1.msra.mxu0 0.0
      %868 = vmatprep.subr.mxu0 0.0
      %869 = vmatpush1.msra.mxu0 0.0
      %870 = vmatprep.subr.mxu0 0.0
      %871 = vmatpush1.msra.mxu0 0.0
      %872 = vmatprep.subr.mxu0 0.0
      %873 = vmatpush1.msra.mxu0 0.0
      %874 = vmatprep.subr.mxu0 0.0
      %875 = vmatpush1.msra.mxu0 0.0
      %876 = vmatprep.subr.mxu0 0.0
      %877 = vmatpush1.msra.mxu0 0.0
      %878 = vmatprep.subr.mxu0 0.0
      %879 = vmatpush1.msra.mxu0 0.0
      %880 = vmatprep.subr.mxu0 0.0
      %881 = vmatpush1.msra.mxu0 0.0
      %882 = vmatprep.subr.mxu0 0.0
      %883 = vmatpush1.msra.mxu0 0.0
      %884 = vmatprep.subr.mxu0 0.0
      %885 = vmatpush1.msra.mxu0 0.0
      %886 = vmatprep.subr.mxu0 0.0
      %887 = vmatpush1.msra.mxu0 0.0
      %888 = vmatprep.subr.mxu0 0.0
      %889 = vmatpush1.msra.mxu0 0.0
      %890 = vmatprep.subr.mxu0 0.0
      %891 = vmatpush1.msra.mxu0 0.0
      %892 = vmatprep.subr.mxu0 0.0
      %893 = vmatpush1.msra.mxu0 0.0
      %894 = vmatprep.subr.mxu0 0.0
      %895 = vmatpush1.msra.mxu0 0.0
      %896 = vmatprep.subr.mxu0 0.0
      %897 = vmatpush1.msra.mxu0 0.0
      %898 = vmatprep.subr.mxu0 0.0
      %899 = vmatpush1.msra.mxu0 0.0
      %900 = vmatprep.subr.mxu0 0.0
      %901 = vmatpush1.msra.mxu0 0.0
      %902 = vmatprep.subr.mxu0 0.0
      %903 = vmatpush1.msra.mxu0 0.0
      %904 = vmatprep.subr.mxu0 0.0
      %905 = vmatpush1.msra.mxu0 0.0
      %906 = vmatprep.subr.mxu0 0.0
      %907 = vmatpush1.msra.mxu0 0.0
      %908 = vmatprep.mubr.f32.mxu0 0.0
      %909 = vmatmul.mubr.f32.gmra.mrb[0].mxu0 %v840
      %v910 = vpop.f32.mrb[0].mxu0
      %v911 = vadd.f32 0.0, %v910
      %v912 = vpop.f32.mrb[0].mxu0
      %913 = vdwg.mxu0
      %v914 = vadd.f32 %v830, %v911
      %915 = vst [vmem:[%s161] sm:$0xff] %v914
      %p916 = scmp.lt.s32.totalorder %s17, 1
      %s917 = scalar_select %p916, %s17, 1
      %p918 = scmp.lt.s32.totalorder %s18, 0
      %s919 = scalar_select %p918, %s18, 0
      %s920 = sadd.s32 %s919, %s917
      %s921 = smul.addr %s920, 8
      %s922 = scalar_lea.vmem %s2, %s921
      // Predicated region
      $region29: #{_lambda_.4} parent=27 // pred_check
        %p923 = pneg %p92
      $region30: #{_lambda_.4} parent=27 // pred_check_branch
        %925 = sbr.rel (%p923) target = $region32
      $region31: #{_lambda_.4} parent=27 // pred_region
        _
      $region32: #{_lambda_.4} parent=27 // pred_fallthru
        _
    $region28: #{_lambda_.4} parent=5 // pred_fallthru
      _
    %p926 = scmp.le.s32.totalorder 2, %s8
    // Predicated region
    $region33: #{_lambda_.4} parent=5 // pred_check
      %p927 = pneg %p926
    $region34: #{_lambda_.4} parent=5 // pred_check_branch
      %929 = sbr.rel (%p927) target = $region36
    $region35: #{_lambda_.4} parent=5 // pred_region
      %s930 = ssub.s32 %s8, 2
      // Predicated region
      $region37: #{_lambda_.4} parent=35 // pred_check
        %p931 = pneg %p98
      $region38: #{_lambda_.4} parent=35 // pred_check_branch
        %933 = sbr.rel (%p931) target = $region40
      $region39: #{_lambda_.4} parent=35 // pred_region
        %p934 = scmp.lt.s32.totalorder %s19, 1
        %s935 = scalar_select %p934, %s19, 1
        %p936 = scmp.lt.s32.totalorder %s20, 0
        %s937 = scalar_select %p936, %s20, 0
        %s938 = sadd.s32 %s937, %s935
        %s939 = smul.addr %s938, 8
        %s940 = scalar_lea.vmem %s2, %s939
      $region40: #{_lambda_.4} parent=35 // pred_fallthru
        _
    $region36: #{_lambda_.4} parent=5 // pred_fallthru
      _
  $region6: #{_lambda_.4} parent=0 // loop_footer
    %s12 = sadd.s32 1, %s8
  $region7: #{_lambda_.4} parent=0 // loop_footer_branch
    %7 = sbr.rel target = $region3
  $region8: #{_lambda_.4} parent=0 // loop_exit
    _

// kernel: _lambda_.3
$region0: #{_lambda_.3}
  #allocation0 [shape = 'u32[]', space=smem, size = 0x4, offset = 0x4, fixed_abs, tag = 'smem constant byte address 0x4 - core index']
  #allocation1 [shape = 'u32[144,128]{1,0:T(1,128)}', space=vmem, size = 0x12000, scoped, tag = 'internal scratch']
  %s0 = inlined_call_operand.vmem [shape: f32[2,4,512], index: 0, kind: input, shape index: {}]
  %s1 = inlined_call_operand.vmem [shape: f32[9,8,4], index: 1, kind: input, shape index: {}]
  %s2 = inlined_call_operand.vmem [shape: f32[2,8,384], index: 2, kind: output, shape index: {}]
  %s3 = sld [smem:[#allocation0]]
  $region41: #{_lambda_.3} parent=0
    _
  %s5 = ssub.s32 1, %s3
  %s6 = scalar_select 0, %s5, %s3
  loop: start=0, step=1, limit=4
  $region2: #{_lambda_.3} parent=0 // loop_pre_header
    _
  $region3: #{_lambda_.3} parent=0 // loop_header
    %s8 = sphi 0, %s12
    %p9 = scmp.ge.s32.totalorder %s8, 4
    %s15 = sphi 0, %s27
    %s16 = sphi 0, %s23
    %s17 = sphi 0, %s15
    %s18 = sphi 0, %s16
    %s19 = sphi 0, %s17
    %s20 = sphi 0, %s18
    %s30 = sphi 0, %s32
    %s33 = sphi 0, %s30
    %s34 = sphi 0, %s33
    %s50 = sphi 0, %s34
    %s54 = sphi 0, %s54
    %s56 = sphi 0, %s54
    %s57 = sphi 0, %s56
    %s71 = sphi 0, %s57
    %s79 = sphi 0, %s81
    %s82 = sphi 0, %s79
    %s83 = sphi 0, %s82
    %s99 = sphi 0, %s83
  $region4: #{_lambda_.3} parent=0 // loop_header_branch
    %11 = sbr.rel (%p9) target = $region8
  $region5: #{_lambda_.3} parent=0 // loop_body
    %s13 = ssub.s32 %s8, 1
    %s14 = ssub.s32 %s8, 2
    %s21 = sadd.s32 1, %s16
    %p22 = scmp.ge.s32.totalorder %s21, 1
    %s23 = scalar_select %p22, 0, %s21
    %s24 = sadd.s32 1, %s15
    %s25 = scalar_select %p22, %s24, %s15
    %p26 = scmp.ge.s32.totalorder %s25, 2
    %s27 = scalar_select %p26, 0, %s25
    %s28 = ssub.s32 %s15, %s27
    %p29 = scmp.eq.s32.totalorder %s28, 0
    %s31 = sadd.s32 %s30, 1
    %s32 = scalar_select %p29, %s30, %s31
    %p35 = pneg %p29
    %p36 = scmp.eq.s32.totalorder %s8, 1
    %p37 = por %p35, %p36
    %p38 = scmp.ne.s32.totalorder %s30, %s33
    %p39 = scmp.eq.s32.totalorder %s8, 0
    %p40 = por %p38, %p39
    %p41 = scmp.ne.s32.totalorder %s30, %s33
    %p42 = scmp.eq.s32.totalorder %s13, 1
    %p43 = por %p41, %p42
    %p44 = scmp.ne.s32.totalorder %s33, %s34
    %p45 = scmp.eq.s32.totalorder %s13, 0
    %p46 = por %p44, %p45
    %p47 = scmp.ne.s32.totalorder %s33, %s34
    %p48 = scmp.eq.s32.totalorder %s14, 1
    %p49 = por %p47, %p48
    %p51 = scmp.ne.s32.totalorder %s34, %s50
    %p52 = scmp.eq.s32.totalorder %s14, 0
    %p53 = por %p51, %p52
    %s55 = sadd.s32 %s54, 1
    %p58 = scmp.eq.s32.totalorder %s8, 1
    %p59 = scmp.ne.s32.totalorder %s54, %s56
    %p60 = scmp.eq.s32.totalorder %s8, 0
    %p61 = por %p59, %p60
    %p62 = scmp.ne.s32.totalorder %s54, %s56
    %p63 = scmp.eq.s32.totalorder %s13, 1
    %p64 = por %p62, %p63
    %p65 = scmp.ne.s32.totalorder %s56, %s57
    %p66 = scmp.eq.s32.totalorder %s13, 0
    %p67 = por %p65, %p66
    %p68 = scmp.ne.s32.totalorder %s56, %s57
    %p69 = scmp.eq.s32.totalorder %s14, 1
    %p70 = por %p68, %p69
    %p72 = scmp.ne.s32.totalorder %s57, %s71
    %p73 = scmp.eq.s32.totalorder %s14, 0
    %p74 = por %p72, %p73
    %s75 = ssub.s32 %s15, %s27
    %s76 = ssub.s32 %s16, %s23
    %s77 = sor.u32 %s75, %s76
    %p78 = scmp.eq.s32.totalorder %s77, 0
    %s80 = sadd.s32 %s79, 1
    %s81 = scalar_select %p78, %s79, %s80
    %p84 = pneg %p78
    %p85 = scmp.eq.s32.totalorder %s8, 1
    %p86 = por %p84, %p85
    %p87 = scmp.ne.s32.totalorder %s79, %s82
    %p88 = scmp.eq.s32.totalorder %s8, 0
    %p89 = por %p87, %p88
    %p90 = scmp.ne.s32.totalorder %s79, %s82
    %p91 = scmp.eq.s32.totalorder %s13, 1
    %p92 = por %p90, %p91
    %p93 = scmp.ne.s32.totalorder %s82, %s83
    %p94 = scmp.eq.s32.totalorder %s13, 0
    %p95 = por %p93, %p94
    %p96 = scmp.ne.s32.totalorder %s82, %s83
    %p97 = scmp.eq.s32.totalorder %s14, 1
    %p98 = por %p96, %p97
    %p100 = scmp.ne.s32.totalorder %s83, %s99
    %p101 = scmp.eq.s32.totalorder %s14, 0
    %p102 = por %p100, %p101
    %p103 = scmp.le.s32.totalorder 1, %s8
    %p104 = scmp.lt.s32.totalorder %s8, 3
    %p105 = pnand %p103, %p104
    %p106 = pneg %p105
    // Predicated region
    $region9: #{_lambda_.3} parent=5 // pred_check
      _
    $region10: #{_lambda_.3} parent=5 // pred_check_branch
      %108 = sbr.rel (%p105) target = $region12
    $region11: #{_lambda_.3} parent=5 // pred_region
      %s109 = ssub.s32 %s8, 1
      // Predicated region
      $region13: #{_lambda_.3} parent=11 // pred_check
        %p110 = pneg %p67
      $region14: #{_lambda_.3} parent=11 // pred_check_branch
        %112 = sbr.rel (%p110) target = $region16
      $region15: #{_lambda_.3} parent=11 // pred_region
        _
      $region16: #{_lambda_.3} parent=11 // pred_fallthru
        _
    $region12: #{_lambda_.3} parent=5 // pred_fallthru
      _
    %p113 = scmp.lt.s32.totalorder %s8, 2
    // Predicated region
    $region17: #{_lambda_.3} parent=5 // pred_check
      %p114 = pneg %p113
    $region18: #{_lambda_.3} parent=5 // pred_check_branch
      %116 = sbr.rel (%p114) target = $region20
    $region19: #{_lambda_.3} parent=5 // pred_region
      // Predicated region
      $region21: #{_lambda_.3} parent=19 // pred_check
        %p117 = pneg %p40
      $region22: #{_lambda_.3} parent=19 // pred_check_branch
        %119 = sbr.rel (%p117) target = $region24
      $region23: #{_lambda_.3} parent=19 // pred_region
        %p120 = scmp.lt.s32.totalorder %s15, 1
        %s121 = scalar_select %p120, %s15, 1
        %s122 = smul.addr %s121, 4
        %s123 = smul.addr %s122, 4
        %s124 = scalar_lea.vmem %s0, %s123
      $region24: #{_lambda_.3} parent=19 // pred_fallthru
        _
    $region20: #{_lambda_.3} parent=5 // pred_fallthru
      _
    %p125 = scmp.le.s32.totalorder 1, %s8
    %p126 = scmp.lt.s32.totalorder %s8, 3
    %p127 = pnand %p125, %p126
    %p128 = pneg %p127
    // Predicated region
    $region25: #{_lambda_.3} parent=5 // pred_check
      _
    $region26: #{_lambda_.3} parent=5 // pred_check_branch
      %130 = sbr.rel (%p127) target = $region28
    $region27: #{_lambda_.3} parent=5 // pred_region
      %s131 = ssub.s32 %s8, 1
      %p132 = scmp.lt.s32.totalorder %s17, 1
      %s133 = scalar_select %p132, %s17, 1
      %s134 = smul.addr %s133, 4
      %s135 = smul.addr %s134, 4
      %s136 = scalar_lea.vmem %s0, %s135
      %p137 = pneg %p46
      %p138 = pneg %p43
      %p139 = pneg %p67
      %p140 = pneg %p64
      %p141 = pneg %p95
      %p142 = pneg %p92
      %s143 = smul.u32 3, %s18
      %p144 = scmp.lt.s32.totalorder %s17, 1
      %s145 = scalar_select %p144, %s17, 1
      %p146 = scmp.lt.s32.totalorder %s143, 2
      %s147 = scalar_select %p146, %s143, 2
      %s148 = smul.addr %s145, 3
      %s149 = sadd.s32 %s147, %s148
      %s150 = smul.addr %s149, 8
      %s151 = scalar_lea.vmem %s2, %s150
      %p152 = scmp.lt.s32.totalorder %s17, 1
      %s153 = scalar_select %p152, %s17, 1
      %s154 = smul.addr %s153, 4
      %s155 = smul.addr %s154, 4
      %s156 = scalar_lea.vmem %s0, %s155
      %s157 = smul.u32 3, %s18
      %p158 = scmp.lt.s32.totalorder %s17, 1
      %s159 = scalar_select %p158, %s17, 1
      %p160 = scmp.lt.s32.totalorder %s157, 2
      %s161 = scalar_select %p160, %s157, 2
      %s162 = smul.addr %s159, 3
      %s163 = sadd.s32 %s161, %s162
      %s164 = smul.addr %s163, 8
      %s165 = scalar_lea.vmem %s2, %s164
      %s166 = smul.u32 3, %s18
      %v167 = vld [vmem:[%s156] sm:$0xff]
      %v168 = vld [vmem:[%s156 + $0x8] sm:$0xff]
      %v169 = vld [vmem:[%s1] sm:$0xff]
      %s170 = scalar_lea.vmem %s1, 8
      %v171 = vld [vmem:[%s170] sm:$0xff]
      %v174 = vcombine.high %v167, %v167
      %v175 = vcombine.high %v168, %v168
      %176 = vrot.lane.b32.xlu0 %v167, 127
      %v177 = vpop.permute.xlu0 %176
      %178 = vrot.lane.b32.xlu0 %v174, 127
      %v179 = vpop.permute.xlu0 %178
      %180 = vrot.lane.b32.xlu0 %v168, 127
      %v181 = vpop.permute.xlu0 %180
      %182 = vrot.lane.b32.xlu0 %v175, 127
      %v183 = vpop.permute.xlu0 %182
      %vm184 = vcmask 1039360
      %v185 = vsel %vm184, %v177, %v179
      %v186 = vsel %vm184, %v179, %v181
      %v187 = vsel %vm184, %v181, %v183
      %vm188 = vcmask 31744
      %v190 = vsel %vm188, %v171, 0
      %vm192 = vcmask 1043456
      %v193 = vsel %vm192, %v185, 0
      %v195 = vsel %vm192, %v186, 0
      %v197 = vsel %vm192, %v187, 0
      %199 = vmatprep.subr.mxu0 %v195
      %200 = vmatpush1.msra.mxu0 %v193
      %201 = vmatprep.subr.mxu0 0.0
      %202 = vmatpush1.msra.mxu0 0.0
      %203 = vmatprep.subr.mxu0 0.0
      %204 = vmatpush1.msra.mxu0 0.0
      %205 = vmatprep.subr.mxu0 0.0
      %206 = vmatpush1.msra.mxu0 0.0
      %207 = vmatprep.subr.mxu0 0.0
      %208 = vmatpush1.msra.mxu0 0.0
      %209 = vmatprep.subr.mxu0 0.0
      %210 = vmatpush1.msra.mxu0 0.0
      %211 = vmatprep.subr.mxu0 0.0
      %212 = vmatpush1.msra.mxu0 0.0
      %213 = vmatprep.subr.mxu0 0.0
      %214 = vmatpush1.msra.mxu0 0.0
      %215 = vmatprep.subr.mxu0 0.0
      %216 = vmatpush1.msra.mxu0 0.0
      %217 = vmatprep.subr.mxu0 0.0
      %218 = vmatpush1.msra.mxu0 0.0
      %219 = vmatprep.subr.mxu0 0.0
      %220 = vmatpush1.msra.mxu0 0.0
      %221 = vmatprep.subr.mxu0 0.0
      %222 = vmatpush1.msra.mxu0 0.0
      %223 = vmatprep.subr.mxu0 0.0
      %224 = vmatpush1.msra.mxu0 0.0
      %225 = vmatprep.subr.mxu0 0.0
      %226 = vmatpush1.msra.mxu0 0.0
      %227 = vmatprep.subr.mxu0 0.0
      %228 = vmatpush1.msra.mxu0 0.0
      %229 = vmatprep.subr.mxu0 0.0
      %230 = vmatpush1.msra.mxu0 0.0
      %231 = vmatprep.subr.mxu0 0.0
      %232 = vmatpush1.msra.mxu0 0.0
      %233 = vmatprep.subr.mxu0 0.0
      %234 = vmatpush1.msra.mxu0 0.0
      %235 = vmatprep.subr.mxu0 0.0
      %236 = vmatpush1.msra.mxu0 0.0
      %237 = vmatprep.subr.mxu0 0.0
      %238 = vmatpush1.msra.mxu0 0.0
      %239 = vmatprep.subr.mxu0 0.0
      %240 = vmatpush1.msra.mxu0 0.0
      %241 = vmatprep.subr.mxu0 0.0
      %242 = vmatpush1.msra.mxu0 0.0
      %243 = vmatprep.subr.mxu0 0.0
      %244 = vmatpush1.msra.mxu0 0.0
      %245 = vmatprep.subr.mxu0 0.0
      %246 = vmatpush1.msra.mxu0 0.0
      %247 = vmatprep.subr.mxu0 0.0
      %248 = vmatpush1.msra.mxu0 0.0
      %249 = vmatprep.subr.mxu0 0.0
      %250 = vmatpush1.msra.mxu0 0.0
      %251 = vmatprep.subr.mxu0 0.0
      %252 = vmatpush1.msra.mxu0 0.0
      %253 = vmatprep.subr.mxu0 0.0
      %254 = vmatpush1.msra.mxu0 0.0
      %255 = vmatprep.subr.mxu0 0.0
      %256 = vmatpush1.msra.mxu0 0.0
      %257 = vmatprep.subr.mxu0 0.0
      %258 = vmatpush1.msra.mxu0 0.0
      %259 = vmatprep.subr.mxu0 0.0
      %260 = vmatpush1.msra.mxu0 0.0
      %261 = vmatprep.subr.mxu0 0.0
      %262 = vmatpush1.msra.mxu0 0.0
      %263 = vmatprep.mubr.f32.mxu0 0.0
      %264 = vmatmul.mubr.f32.gmra.mrb[0].mxu0 %v190
      %v265 = vpop.f32.mrb[0].mxu0
      %v266 = vadd.f32 0.0, %v265
      %v267 = vpop.f32.mrb[0].mxu0
      %v268 = vadd.f32 0.0, %v267
      %269 = vdwg.mxu0
      %270 = vmatprep.subr.mxu0 0.0
      %271 = vmatpush1.msra.mxu0 %v197
      %272 = vmatprep.subr.mxu0 0.0
      %273 = vmatpush1.msra.mxu0 0.0
      %274 = vmatprep.subr.mxu0 0.0
      %275 = vmatpush1.msra.mxu0 0.0
      %276 = vmatprep.subr.mxu0 0.0
      %277 = vmatpush1.msra.mxu0 0.0
      %278 = vmatprep.subr.mxu0 0.0
      %279 = vmatpush1.msra.mxu0 0.0
      %280 = vmatprep.subr.mxu0 0.0
      %281 = vmatpush1.msra.mxu0 0.0
      %282 = vmatprep.subr.mxu0 0.0
      %283 = vmatpush1.msra.mxu0 0.0
      %284 = vmatprep.subr.mxu0 0.0
      %285 = vmatpush1.msra.mxu0 0.0
      %286 = vmatprep.subr.mxu0 0.0
      %287 = vmatpush1.msra.mxu0 0.0
      %288 = vmatprep.subr.mxu0 0.0
      %289 = vmatpush1.msra.mxu0 0.0
      %290 = vmatprep.subr.mxu0 0.0
      %291 = vmatpush1.msra.mxu0 0.0
      %292 = vmatprep.subr.mxu0 0.0
      %293 = vmatpush1.msra.mxu0 0.0
      %294 = vmatprep.subr.mxu0 0.0
      %295 = vmatpush1.msra.mxu0 0.0
      %296 = vmatprep.subr.mxu0 0.0
      %297 = vmatpush1.msra.mxu0 0.0
      %298 = vmatprep.subr.mxu0 0.0
      %299 = vmatpush1.msra.mxu0 0.0
      %300 = vmatprep.subr.mxu0 0.0
      %301 = vmatpush1.msra.mxu0 0.0
      %302 = vmatprep.subr.mxu0 0.0
      %303 = vmatpush1.msra.mxu0 0.0
      %304 = vmatprep.subr.mxu0 0.0
      %305 = vmatpush1.msra.mxu0 0.0
      %306 = vmatprep.subr.mxu0 0.0
      %307 = vmatpush1.msra.mxu0 0.0
      %308 = vmatprep.subr.mxu0 0.0
      %309 = vmatpush1.msra.mxu0 0.0
      %310 = vmatprep.subr.mxu0 0.0
      %311 = vmatpush1.msra.mxu0 0.0
      %312 = vmatprep.subr.mxu0 0.0
      %313 = vmatpush1.msra.mxu0 0.0
      %314 = vmatprep.subr.mxu0 0.0
      %315 = vmatpush1.msra.mxu0 0.0
      %316 = vmatprep.subr.mxu0 0.0
      %317 = vmatpush1.msra.mxu0 0.0
      %318 = vmatprep.subr.mxu0 0.0
      %319 = vmatpush1.msra.mxu0 0.0
      %320 = vmatprep.subr.mxu0 0.0
      %321 = vmatpush1.msra.mxu0 0.0
      %322 = vmatprep.subr.mxu0 0.0
      %323 = vmatpush1.msra.mxu0 0.0
      %324 = vmatprep.subr.mxu0 0.0
      %325 = vmatpush1.msra.mxu0 0.0
      %326 = vmatprep.subr.mxu0 0.0
      %327 = vmatpush1.msra.mxu0 0.0
      %328 = vmatprep.subr.mxu0 0.0
      %329 = vmatpush1.msra.mxu0 0.0
      %330 = vmatprep.subr.mxu0 0.0
      %331 = vmatpush1.msra.mxu0 0.0
      %332 = vmatprep.subr.mxu0 0.0
      %333 = vmatpush1.msra.mxu0 0.0
      %334 = vmatprep.mubr.f32.mxu0 0.0
      %335 = vmatmul.mubr.f32.gmra.mrb[0].mxu0 %v190
      %v336 = vpop.f32.mrb[0].mxu0
      %v337 = vadd.f32 0.0, %v336
      %v338 = vpop.f32.mrb[0].mxu0
      %339 = vdwg.mxu0
      %v341 = vsel %vm188, %v169, 0
      %v343 = vsel %vm192, %v167, 0
      %v345 = vsel %vm192, %v174, 0
      %v347 = vsel %vm192, %v168, 0
      %349 = vmatprep.subr.mxu0 %v345
      %350 = vmatpush1.msra.mxu0 %v343
      %351 = vmatprep.subr.mxu0 0.0
      %352 = vmatpush1.msra.mxu0 0.0
      %353 = vmatprep.subr.mxu0 0.0
      %354 = vmatpush1.msra.mxu0 0.0
      %355 = vmatprep.subr.mxu0 0.0
      %356 = vmatpush1.msra.mxu0 0.0
      %357 = vmatprep.subr.mxu0 0.0
      %358 = vmatpush1.msra.mxu0 0.0
      %359 = vmatprep.subr.mxu0 0.0
      %360 = vmatpush1.msra.mxu0 0.0
      %361 = vmatprep.subr.mxu0 0.0
      %362 = vmatpush1.msra.mxu0 0.0
      %363 = vmatprep.subr.mxu0 0.0
      %364 = vmatpush1.msra.mxu0 0.0
      %365 = vmatprep.subr.mxu0 0.0
      %366 = vmatpush1.msra.mxu0 0.0
      %367 = vmatprep.subr.mxu0 0.0
      %368 = vmatpush1.msra.mxu0 0.0
      %369 = vmatprep.subr.mxu0 0.0
      %370 = vmatpush1.msra.mxu0 0.0
      %371 = vmatprep.subr.mxu0 0.0
      %372 = vmatpush1.msra.mxu0 0.0
      %373 = vmatprep.subr.mxu0 0.0
      %374 = vmatpush1.msra.mxu0 0.0
      %375 = vmatprep.subr.mxu0 0.0
      %376 = vmatpush1.msra.mxu0 0.0
      %377 = vmatprep.subr.mxu0 0.0
      %378 = vmatpush1.msra.mxu0 0.0
      %379 = vmatprep.subr.mxu0 0.0
      %380 = vmatpush1.msra.mxu0 0.0
      %381 = vmatprep.subr.mxu0 0.0
      %382 = vmatpush1.msra.mxu0 0.0
      %383 = vmatprep.subr.mxu0 0.0
      %384 = vmatpush1.msra.mxu0 0.0
      %385 = vmatprep.subr.mxu0 0.0
      %386 = vmatpush1.msra.mxu0 0.0
      %387 = vmatprep.subr.mxu0 0.0
      %388 = vmatpush1.msra.mxu0 0.0
      %389 = vmatprep.subr.mxu0 0.0
      %390 = vmatpush1.msra.mxu0 0.0
      %391 = vmatprep.subr.mxu0 0.0
      %392 = vmatpush1.msra.mxu0 0.0
      %393 = vmatprep.subr.mxu0 0.0
      %394 = vmatpush1.msra.mxu0 0.0
      %395 = vmatprep.subr.mxu0 0.0
      %396 = vmatpush1.msra.mxu0 0.0
      %397 = vmatprep.subr.mxu0 0.0
      %398 = vmatpush1.msra.mxu0 0.0
      %399 = vmatprep.subr.mxu0 0.0
      %400 = vmatpush1.msra.mxu0 0.0
      %401 = vmatprep.subr.mxu0 0.0
      %402 = vmatpush1.msra.mxu0 0.0
      %403 = vmatprep.subr.mxu0 0.0
      %404 = vmatpush1.msra.mxu0 0.0
      %405 = vmatprep.subr.mxu0 0.0
      %406 = vmatpush1.msra.mxu0 0.0
      %407 = vmatprep.subr.mxu0 0.0
      %408 = vmatpush1.msra.mxu0 0.0
      %409 = vmatprep.subr.mxu0 0.0
      %410 = vmatpush1.msra.mxu0 0.0
      %411 = vmatprep.subr.mxu0 0.0
      %412 = vmatpush1.msra.mxu0 0.0
      %413 = vmatprep.mubr.f32.mxu0 0.0
      %414 = vmatmul.mubr.f32.gmra.mrb[0].mxu0 %v341
      %v415 = vpop.f32.mrb[0].mxu0
      %v416 = vadd.f32 %v266, %v415
      %v417 = vpop.f32.mrb[0].mxu0
      %v418 = vadd.f32 %v268, %v417
      %419 = vdwg.mxu0
      %420 = vmatprep.subr.mxu0 0.0
      %421 = vmatpush1.msra.mxu0 %v347
      %422 = vmatprep.subr.mxu0 0.0
      %423 = vmatpush1.msra.mxu0 0.0
      %424 = vmatprep.subr.mxu0 0.0
      %425 = vmatpush1.msra.mxu0 0.0
      %426 = vmatprep.subr.mxu0 0.0
      %427 = vmatpush1.msra.mxu0 0.0
      %428 = vmatprep.subr.mxu0 0.0
      %429 = vmatpush1.msra.mxu0 0.0
      %430 = vmatprep.subr.mxu0 0.0
      %431 = vmatpush1.msra.mxu0 0.0
      %432 = vmatprep.subr.mxu0 0.0
      %433 = vmatpush1.msra.mxu0 0.0
      %434 = vmatprep.subr.mxu0 0.0
      %435 = vmatpush1.msra.mxu0 0.0
      %436 = vmatprep.subr.mxu0 0.0
      %437 = vmatpush1.msra.mxu0 0.0
      %438 = vmatprep.subr.mxu0 0.0
      %439 = vmatpush1.msra.mxu0 0.0
      %440 = vmatprep.subr.mxu0 0.0
      %441 = vmatpush1.msra.mxu0 0.0
      %442 = vmatprep.subr.mxu0 0.0
      %443 = vmatpush1.msra.mxu0 0.0
      %444 = vmatprep.subr.mxu0 0.0
      %445 = vmatpush1.msra.mxu0 0.0
      %446 = vmatprep.subr.mxu0 0.0
      %447 = vmatpush1.msra.mxu0 0.0
      %448 = vmatprep.subr.mxu0 0.0
      %449 = vmatpush1.msra.mxu0 0.0
      %450 = vmatprep.subr.mxu0 0.0
      %451 = vmatpush1.msra.mxu0 0.0
      %452 = vmatprep.subr.mxu0 0.0
      %453 = vmatpush1.msra.mxu0 0.0
      %454 = vmatprep.subr.mxu0 0.0
      %455 = vmatpush1.msra.mxu0 0.0
      %456 = vmatprep.subr.mxu0 0.0
      %457 = vmatpush1.msra.mxu0 0.0
      %458 = vmatprep.subr.mxu0 0.0
      %459 = vmatpush1.msra.mxu0 0.0
      %460 = vmatprep.subr.mxu0 0.0
      %461 = vmatpush1.msra.mxu0 0.0
      %462 = vmatprep.subr.mxu0 0.0
      %463 = vmatpush1.msra.mxu0 0.0
      %464 = vmatprep.subr.mxu0 0.0
      %465 = vmatpush1.msra.mxu0 0.0
      %466 = vmatprep.subr.mxu0 0.0
      %467 = vmatpush1.msra.mxu0 0.0
      %468 = vmatprep.subr.mxu0 0.0
      %469 = vmatpush1.msra.mxu0 0.0
      %470 = vmatprep.subr.mxu0 0.0
      %471 = vmatpush1.msra.mxu0 0.0
      %472 = vmatprep.subr.mxu0 0.0
      %473 = vmatpush1.msra.mxu0 0.0
      %474 = vmatprep.subr.mxu0 0.0
      %475 = vmatpush1.msra.mxu0 0.0
      %476 = vmatprep.subr.mxu0 0.0
      %477 = vmatpush1.msra.mxu0 0.0
      %478 = vmatprep.subr.mxu0 0.0
      %479 = vmatpush1.msra.mxu0 0.0
      %480 = vmatprep.subr.mxu0 0.0
      %481 = vmatpush1.msra.mxu0 0.0
      %482 = vmatprep.subr.mxu0 0.0
      %483 = vmatpush1.msra.mxu0 0.0
      %484 = vmatprep.mubr.f32.mxu0 0.0
      %485 = vmatmul.mubr.f32.gmra.mrb[0].mxu0 %v341
      %v486 = vpop.f32.mrb[0].mxu0
      %v487 = vadd.f32 %v337, %v486
      %v488 = vpop.f32.mrb[0].mxu0
      %489 = vdwg.mxu0
      %s490 = scalar_lea.vmem %s1, 16
      %v491 = vld [vmem:[%s490] sm:$0xff]
      %492 = vrot.lane.b32.xlu0 %v167, 126
      %v493 = vpop.permute.xlu0 %492
      %494 = vrot.lane.b32.xlu0 %v174, 126
      %v495 = vpop.permute.xlu0 %494
      %496 = vrot.lane.b32.xlu0 %v168, 126
      %v497 = vpop.permute.xlu0 %496
      %498 = vrot.lane.b32.xlu0 %v175, 126
      %v499 = vpop.permute.xlu0 %498
      %vm500 = vcmask 1031168
      %v501 = vsel %vm500, %v493, %v495
      %v502 = vsel %vm500, %v495, %v497
      %v503 = vsel %vm500, %v497, %v499
      %v505 = vsel %vm188, %v491, 0
      %v507 = vsel %vm192, %v501, 0
      %v509 = vsel %vm192, %v502, 0
      %v511 = vsel %vm192, %v503, 0
      %513 = vmatprep.subr.mxu0 %v509
      %514 = vmatpush1.msra.mxu0 %v507
      %515 = vmatprep.subr.mxu0 0.0
      %516 = vmatpush1.msra.mxu0 0.0
      %517 = vmatprep.subr.mxu0 0.0
      %518 = vmatpush1.msra.mxu0 0.0
      %519 = vmatprep.subr.mxu0 0.0
      %520 = vmatpush1.msra.mxu0 0.0
      %521 = vmatprep.subr.mxu0 0.0
      %522 = vmatpush1.msra.mxu0 0.0
      %523 = vmatprep.subr.mxu0 0.0
      %524 = vmatpush1.msra.mxu0 0.0
      %525 = vmatprep.subr.mxu0 0.0
      %526 = vmatpush1.msra.mxu0 0.0
      %527 = vmatprep.subr.mxu0 0.0
      %528 = vmatpush1.msra.mxu0 0.0
      %529 = vmatprep.subr.mxu0 0.0
      %530 = vmatpush1.msra.mxu0 0.0
      %531 = vmatprep.subr.mxu0 0.0
      %532 = vmatpush1.msra.mxu0 0.0
      %533 = vmatprep.subr.mxu0 0.0
      %534 = vmatpush1.msra.mxu0 0.0
      %535 = vmatprep.subr.mxu0 0.0
      %536 = vmatpush1.msra.mxu0 0.0
      %537 = vmatprep.subr.mxu0 0.0
      %538 = vmatpush1.msra.mxu0 0.0
      %539 = vmatprep.subr.mxu0 0.0
      %540 = vmatpush1.msra.mxu0 0.0
      %541 = vmatprep.subr.mxu0 0.0
      %542 = vmatpush1.msra.mxu0 0.0
      %543 = vmatprep.subr.mxu0 0.0
      %544 = vmatpush1.msra.mxu0 0.0
      %545 = vmatprep.subr.mxu0 0.0
      %546 = vmatpush1.msra.mxu0 0.0
      %547 = vmatprep.subr.mxu0 0.0
      %548 = vmatpush1.msra.mxu0 0.0
      %549 = vmatprep.subr.mxu0 0.0
      %550 = vmatpush1.msra.mxu0 0.0
      %551 = vmatprep.subr.mxu0 0.0
      %552 = vmatpush1.msra.mxu0 0.0
      %553 = vmatprep.subr.mxu0 0.0
      %554 = vmatpush1.msra.mxu0 0.0
      %555 = vmatprep.subr.mxu0 0.0
      %556 = vmatpush1.msra.mxu0 0.0
      %557 = vmatprep.subr.mxu0 0.0
      %558 = vmatpush1.msra.mxu0 0.0
      %559 = vmatprep.subr.mxu0 0.0
      %560 = vmatpush1.msra.mxu0 0.0
      %561 = vmatprep.subr.mxu0 0.0
      %562 = vmatpush1.msra.mxu0 0.0
      %563 = vmatprep.subr.mxu0 0.0
      %564 = vmatpush1.msra.mxu0 0.0
      %565 = vmatprep.subr.mxu0 0.0
      %566 = vmatpush1.msra.mxu0 0.0
      %567 = vmatprep.subr.mxu0 0.0
      %568 = vmatpush1.msra.mxu0 0.0
      %569 = vmatprep.subr.mxu0 0.0
      %570 = vmatpush1.msra.mxu0 0.0
      %571 = vmatprep.subr.mxu0 0.0
      %572 = vmatpush1.msra.mxu0 0.0
      %573 = vmatprep.subr.mxu0 0.0
      %574 = vmatpush1.msra.mxu0 0.0
      %575 = vmatprep.subr.mxu0 0.0
      %576 = vmatpush1.msra.mxu0 0.0
      %577 = vmatprep.mubr.f32.mxu0 0.0
      %578 = vmatmul.mubr.f32.gmra.mrb[0].mxu0 %v505
      %v579 = vpop.f32.mrb[0].mxu0
      %v580 = vadd.f32 0.0, %v579
      %v581 = vpop.f32.mrb[0].mxu0
      %v582 = vadd.f32 0.0, %v581
      %583 = vdwg.mxu0
      %584 = vmatprep.subr.mxu0 0.0
      %585 = vmatpush1.msra.mxu0 %v511
      %586 = vmatprep.subr.mxu0 0.0
      %587 = vmatpush1.msra.mxu0 0.0
      %588 = vmatprep.subr.mxu0 0.0
      %589 = vmatpush1.msra.mxu0 0.0
      %590 = vmatprep.subr.mxu0 0.0
      %591 = vmatpush1.msra.mxu0 0.0
      %592 = vmatprep.subr.mxu0 0.0
      %593 = vmatpush1.msra.mxu0 0.0
      %594 = vmatprep.subr.mxu0 0.0
      %595 = vmatpush1.msra.mxu0 0.0
      %596 = vmatprep.subr.mxu0 0.0
      %597 = vmatpush1.msra.mxu0 0.0
      %598 = vmatprep.subr.mxu0 0.0
      %599 = vmatpush1.msra.mxu0 0.0
      %600 = vmatprep.subr.mxu0 0.0
      %601 = vmatpush1.msra.mxu0 0.0
      %602 = vmatprep.subr.mxu0 0.0
      %603 = vmatpush1.msra.mxu0 0.0
      %604 = vmatprep.subr.mxu0 0.0
      %605 = vmatpush1.msra.mxu0 0.0
      %606 = vmatprep.subr.mxu0 0.0
      %607 = vmatpush1.msra.mxu0 0.0
      %608 = vmatprep.subr.mxu0 0.0
      %609 = vmatpush1.msra.mxu0 0.0
      %610 = vmatprep.subr.mxu0 0.0
      %611 = vmatpush1.msra.mxu0 0.0
      %612 = vmatprep.subr.mxu0 0.0
      %613 = vmatpush1.msra.mxu0 0.0
      %614 = vmatprep.subr.mxu0 0.0
      %615 = vmatpush1.msra.mxu0 0.0
      %616 = vmatprep.subr.mxu0 0.0
      %617 = vmatpush1.msra.mxu0 0.0
      %618 = vmatprep.subr.mxu0 0.0
      %619 = vmatpush1.msra.mxu0 0.0
      %620 = vmatprep.subr.mxu0 0.0
      %621 = vmatpush1.msra.mxu0 0.0
      %622 = vmatprep.subr.mxu0 0.0
      %623 = vmatpush1.msra.mxu0 0.0
      %624 = vmatprep.subr.mxu0 0.0
      %625 = vmatpush1.msra.mxu0 0.0
      %626 = vmatprep.subr.mxu0 0.0
      %627 = vmatpush1.msra.mxu0 0.0
      %628 = vmatprep.subr.mxu0 0.0
      %629 = vmatpush1.msra.mxu0 0.0
      %630 = vmatprep.subr.mxu0 0.0
      %631 = vmatpush1.msra.mxu0 0.0
      %632 = vmatprep.subr.mxu0 0.0
      %633 = vmatpush1.msra.mxu0 0.0
      %634 = vmatprep.subr.mxu0 0.0
      %635 = vmatpush1.msra.mxu0 0.0
      %636 = vmatprep.subr.mxu0 0.0
      %637 = vmatpush1.msra.mxu0 0.0
      %638 = vmatprep.subr.mxu0 0.0
      %639 = vmatpush1.msra.mxu0 0.0
      %640 = vmatprep.subr.mxu0 0.0
      %641 = vmatpush1.msra.mxu0 0.0
      %642 = vmatprep.subr.mxu0 0.0
      %643 = vmatpush1.msra.mxu0 0.0
      %644 = vmatprep.subr.mxu0 0.0
      %645 = vmatpush1.msra.mxu0 0.0
      %646 = vmatprep.subr.mxu0 0.0
      %647 = vmatpush1.msra.mxu0 0.0
      %648 = vmatprep.mubr.f32.mxu0 0.0
      %649 = vmatmul.mubr.f32.gmra.mrb[0].mxu0 %v505
      %v650 = vpop.f32.mrb[0].mxu0
      %v651 = vadd.f32 0.0, %v650
      %v652 = vpop.f32.mrb[0].mxu0
      %653 = vdwg.mxu0
      %v654 = vadd.f32 %v416, %v580
      %v655 = vadd.f32 %v418, %v582
      %v656 = vadd.f32 %v487, %v651
      %s657 = scalar_lea.vmem %s1, 24
      %v658 = vld [vmem:[%s657] sm:$0xff]
      %659 = vrot.lane.b32.xlu0 %v167, 110
      %v660 = vpop.permute.xlu0 %659
      %661 = vrot.lane.b32.xlu0 %v174, 110
      %v662 = vpop.permute.xlu0 %661
      %663 = vrot.lane.b32.xlu0 %v168, 110
      %v664 = vpop.permute.xlu0 %663
      %665 = vrot.lane.b32.xlu0 %v175, 110
      %v666 = vpop.permute.xlu0 %665
      %vm667 = vcmask 900096
      %v668 = vsel %vm667, %v660, %v662
      %v669 = vsel %vm667, %v662, %v664
      %v670 = vsel %vm667, %v664, %v666
      %v672 = vsel %vm188, %v658, 0
      %v674 = vsel %vm192, %v668, 0
      %v676 = vsel %vm192, %v669, 0
      %v678 = vsel %vm192, %v670, 0
      %680 = vmatprep.subr.mxu0 %v676
      %681 = vmatpush1.msra.mxu0 %v674
      %682 = vmatprep.subr.mxu0 0.0
      %683 = vmatpush1.msra.mxu0 0.0
      %684 = vmatprep.subr.mxu0 0.0
      %685 = vmatpush1.msra.mxu0 0.0
      %686 = vmatprep.subr.mxu0 0.0
      %687 = vmatpush1.msra.mxu0 0.0
      %688 = vmatprep.subr.mxu0 0.0
      %689 = vmatpush1.msra.mxu0 0.0
      %690 = vmatprep.subr.mxu0 0.0
      %691 = vmatpush1.msra.mxu0 0.0
      %692 = vmatprep.subr.mxu0 0.0
      %693 = vmatpush1.msra.mxu0 0.0
      %694 = vmatprep.subr.mxu0 0.0
      %695 = vmatpush1.msra.mxu0 0.0
      %696 = vmatprep.subr.mxu0 0.0
      %697 = vmatpush1.msra.mxu0 0.0
      %698 = vmatprep.subr.mxu0 0.0
      %699 = vmatpush1.msra.mxu0 0.0
      %700 = vmatprep.subr.mxu0 0.0
      %701 = vmatpush1.msra.mxu0 0.0
      %702 = vmatprep.subr.mxu0 0.0
      %703 = vmatpush1.msra.mxu0 0.0
      %704 = vmatprep.subr.mxu0 0.0
      %705 = vmatpush1.msra.mxu0 0.0
      %706 = vmatprep.subr.mxu0 0.0
      %707 = vmatpush1.msra.mxu0 0.0
      %708 = vmatprep.subr.mxu0 0.0
      %709 = vmatpush1.msra.mxu0 0.0
      %710 = vmatprep.subr.mxu0 0.0
      %711 = vmatpush1.msra.mxu0 0.0
      %712 = vmatprep.subr.mxu0 0.0
      %713 = vmatpush1.msra.mxu0 0.0
      %714 = vmatprep.subr.mxu0 0.0
      %715 = vmatpush1.msra.mxu0 0.0
      %716 = vmatprep.subr.mxu0 0.0
      %717 = vmatpush1.msra.mxu0 0.0
      %718 = vmatprep.subr.mxu0 0.0
      %719 = vmatpush1.msra.mxu0 0.0
      %720 = vmatprep.subr.mxu0 0.0
      %721 = vmatpush1.msra.mxu0 0.0
      %722 = vmatprep.subr.mxu0 0.0
      %723 = vmatpush1.msra.mxu0 0.0
      %724 = vmatprep.subr.mxu0 0.0
      %725 = vmatpush1.msra.mxu0 0.0
      %726 = vmatprep.subr.mxu0 0.0
      %727 = vmatpush1.msra.mxu0 0.0
      %728 = vmatprep.subr.mxu0 0.0
      %729 = vmatpush1.msra.mxu0 0.0
      %730 = vmatprep.subr.mxu0 0.0
      %731 = vmatpush1.msra.mxu0 0.0
      %732 = vmatprep.subr.mxu0 0.0
      %733 = vmatpush1.msra.mxu0 0.0
      %734 = vmatprep.subr.mxu0 0.0
      %735 = vmatpush1.msra.mxu0 0.0
      %736 = vmatprep.subr.mxu0 0.0
      %737 = vmatpush1.msra.mxu0 0.0
      %738 = vmatprep.subr.mxu0 0.0
      %739 = vmatpush1.msra.mxu0 0.0
      %740 = vmatprep.subr.mxu0 0.0
      %741 = vmatpush1.msra.mxu0 0.0
      %742 = vmatprep.subr.mxu0 0.0
      %743 = vmatpush1.msra.mxu0 0.0
      %744 = vmatprep.mubr.f32.mxu0 0.0
      %745 = vmatmul.mubr.f32.gmra.mrb[0].mxu0 %v672
      %v746 = vpop.f32.mrb[0].mxu0
      %v747 = vadd.f32 0.0, %v746
      %v748 = vpop.f32.mrb[0].mxu0
      %v749 = vadd.f32 0.0, %v748
      %750 = vdwg.mxu0
      %751 = vmatprep.subr.mxu0 0.0
      %752 = vmatpush1.msra.mxu0 %v678
      %753 = vmatprep.subr.mxu0 0.0
      %754 = vmatpush1.msra.mxu0 0.0
      %755 = vmatprep.subr.mxu0 0.0
      %756 = vmatpush1.msra.mxu0 0.0
      %757 = vmatprep.subr.mxu0 0.0
      %758 = vmatpush1.msra.mxu0 0.0
      %759 = vmatprep.subr.mxu0 0.0
      %760 = vmatpush1.msra.mxu0 0.0
      %761 = vmatprep.subr.mxu0 0.0
      %762 = vmatpush1.msra.mxu0 0.0
      %763 = vmatprep.subr.mxu0 0.0
      %764 = vmatpush1.msra.mxu0 0.0
      %765 = vmatprep.subr.mxu0 0.0
      %766 = vmatpush1.msra.mxu0 0.0
      %767 = vmatprep.subr.mxu0 0.0
      %768 = vmatpush1.msra.mxu0 0.0
      %769 = vmatprep.subr.mxu0 0.0
      %770 = vmatpush1.msra.mxu0 0.0
      %771 = vmatprep.subr.mxu0 0.0
      %772 = vmatpush1.msra.mxu0 0.0
      %773 = vmatprep.subr.mxu0 0.0
      %774 = vmatpush1.msra.mxu0 0.0
      %775 = vmatprep.subr.mxu0 0.0
      %776 = vmatpush1.msra.mxu0 0.0
      %777 = vmatprep.subr.mxu0 0.0
      %778 = vmatpush1.msra.mxu0 0.0
      %779 = vmatprep.subr.mxu0 0.0
      %780 = vmatpush1.msra.mxu0 0.0
      %781 = vmatprep.subr.mxu0 0.0
      %782 = vmatpush1.msra.mxu0 0.0
      %783 = vmatprep.subr.mxu0 0.0
      %784 = vmatpush1.msra.mxu0 0.0
      %785 = vmatprep.subr.mxu0 0.0
      %786 = vmatpush1.msra.mxu0 0.0
      %787 = vmatprep.subr.mxu0 0.0
      %788 = vmatpush1.msra.mxu0 0.0
      %789 = vmatprep.subr.mxu0 0.0
      %790 = vmatpush1.msra.mxu0 0.0
      %791 = vmatprep.subr.mxu0 0.0
      %792 = vmatpush1.msra.mxu0 0.0
      %793 = vmatprep.subr.mxu0 0.0
      %794 = vmatpush1.msra.mxu0 0.0
      %795 = vmatprep.subr.mxu0 0.0
      %796 = vmatpush1.msra.mxu0 0.0
      %797 = vmatprep.subr.mxu0 0.0
      %798 = vmatpush1.msra.mxu0 0.0
      %799 = vmatprep.subr.mxu0 0.0
      %800 = vmatpush1.msra.mxu0 0.0
      %801 = vmatprep.subr.mxu0 0.0
      %802 = vmatpush1.msra.mxu0 0.0
      %803 = vmatprep.subr.mxu0 0.0
      %804 = vmatpush1.msra.mxu0 0.0
      %805 = vmatprep.subr.mxu0 0.0
      %806 = vmatpush1.msra.mxu0 0.0
      %807 = vmatprep.subr.mxu0 0.0
      %808 = vmatpush1.msra.mxu0 0.0
      %809 = vmatprep.subr.mxu0 0.0
      %810 = vmatpush1.msra.mxu0 0.0
      %811 = vmatprep.subr.mxu0 0.0
      %812 = vmatpush1.msra.mxu0 0.0
      %813 = vmatprep.subr.mxu0 0.0
      %814 = vmatpush1.msra.mxu0 0.0
      %815 = vmatprep.mubr.f32.mxu0 0.0
      %816 = vmatmul.mubr.f32.gmra.mrb[0].mxu0 %v672
      %v817 = vpop.f32.mrb[0].mxu0
      %v818 = vadd.f32 0.0, %v817
      %v819 = vpop.f32.mrb[0].mxu0
      %820 = vdwg.mxu0
      %v821 = vadd.f32 %v654, %v747
      %v822 = vadd.f32 %v655, %v749
      %v823 = vadd.f32 %v656, %v818
      %s824 = scalar_lea.vmem %s1, 32
      %v825 = vld [vmem:[%s824] sm:$0xff]
      %826 = vrot.lane.b32.xlu0 %v167, 109
      %v827 = vpop.permute.xlu0 %826
      %828 = vrot.lane.b32.xlu0 %v174, 109
      %v829 = vpop.permute.xlu0 %828
      %830 = vrot.lane.b32.xlu0 %v168, 109
      %v831 = vpop.permute.xlu0 %830
      %832 = vrot.lane.b32.xlu0 %v175, 109
      %v833 = vpop.permute.xlu0 %832
      %vm834 = vcmask 891904
      %v835 = vsel %vm834, %v827, %v829
      %v836 = vsel %vm834, %v829, %v831
      %v837 = vsel %vm834, %v831, %v833
      %v839 = vsel %vm188, %v825, 0
      %v841 = vsel %vm192, %v835, 0
      %v843 = vsel %vm192, %v836, 0
      %v845 = vsel %vm192, %v837, 0
      %847 = vmatprep.subr.mxu0 %v843
      %848 = vmatpush1.msra.mxu0 %v841
      %849 = vmatprep.subr.mxu0 0.0
      %850 = vmatpush1.msra.mxu0 0.0
      %851 = vmatprep.subr.mxu0 0.0
      %852 = vmatpush1.msra.mxu0 0.0
      %853 = vmatprep.subr.mxu0 0.0
      %854 = vmatpush1.msra.mxu0 0.0
      %855 = vmatprep.subr.mxu0 0.0
      %856 = vmatpush1.msra.mxu0 0.0
      %857 = vmatprep.subr.mxu0 0.0
      %858 = vmatpush1.msra.mxu0 0.0
      %859 = vmatprep.subr.mxu0 0.0
      %860 = vmatpush1.msra.mxu0 0.0
      %861 = vmatprep.subr.mxu0 0.0
      %862 = vmatpush1.msra.mxu0 0.0
      %863 = vmatprep.subr.mxu0 0.0
      %864 = vmatpush1.msra.mxu0 0.0
      %865 = vmatprep.subr.mxu0 0.0
      %866 = vmatpush1.msra.mxu0 0.0
      %867 = vmatprep.subr.mxu0 0.0
      %868 = vmatpush1.msra.mxu0 0.0
      %869 = vmatprep.subr.mxu0 0.0
      %870 = vmatpush1.msra.mxu0 0.0
      %871 = vmatprep.subr.mxu0 0.0
      %872 = vmatpush1.msra.mxu0 0.0
      %873 = vmatprep.subr.mxu0 0.0
      %874 = vmatpush1.msra.mxu0 0.0
      %875 = vmatprep.subr.mxu0 0.0
      %876 = vmatpush1.msra.mxu0 0.0
      %877 = vmatprep.subr.mxu0 0.0
      %878 = vmatpush1.msra.mxu0 0.0
      %879 = vmatprep.subr.mxu0 0.0
      %880 = vmatpush1.msra.mxu0 0.0
      %881 = vmatprep.subr.mxu0 0.0
      %882 = vmatpush1.msra.mxu0 0.0
      %883 = vmatprep.subr.mxu0 0.0
      %884 = vmatpush1.msra.mxu0 0.0
      %885 = vmatprep.subr.mxu0 0.0
      %886 = vmatpush1.msra.mxu0 0.0
      %887 = vmatprep.subr.mxu0 0.0
      %888 = vmatpush1.msra.mxu0 0.0
      %889 = vmatprep.subr.mxu0 0.0
      %890 = vmatpush1.msra.mxu0 0.0
      %891 = vmatprep.subr.mxu0 0.0
      %892 = vmatpush1.msra.mxu0 0.0
      %893 = vmatprep.subr.mxu0 0.0
      %894 = vmatpush1.msra.mxu0 0.0
      %895 = vmatprep.subr.mxu0 0.0
      %896 = vmatpush1.msra.mxu0 0.0
      %897 = vmatprep.subr.mxu0 0.0
      %898 = vmatpush1.msra.mxu0 0.0
      %899 = vmatprep.subr.mxu0 0.0
      %900 = vmatpush1.msra.mxu0 0.0
      %901 = vmatprep.subr.mxu0 0.0
      %902 = vmatpush1.msra.mxu0 0.0
      %903 = vmatprep.subr.mxu0 0.0
      %904 = vmatpush1.msra.mxu0 0.0
      %905 = vmatprep.subr.mxu0 0.0
      %906 = vmatpush1.msra.mxu0 0.0
      %907 = vmatprep.subr.mxu0 0.0
      %908 = vmatpush1.msra.mxu0 0.0
      %909 = vmatprep.subr.mxu0 0.0
      %910 = vmatpush1.msra.mxu0 0.0
      %911 = vmatprep.mubr.f32.mxu0 0.0
      %912 = vmatmul.mubr.f32.gmra.mrb[0].mxu0 %v839
      %v913 = vpop.f32.mrb[0].mxu0
      %v914 = vadd.f32 0.0, %v913
      %v915 = vpop.f32.mrb[0].mxu0
      %v916 = vadd.f32 0.0, %v915
      %917 = vdwg.mxu0
      %918 = vmatprep.subr.mxu0 0.0
      %919 = vmatpush1.msra.mxu0 %v845
      %920 = vmatprep.subr.mxu0 0.0
      %921 = vmatpush1.msra.mxu0 0.0
      %922 = vmatprep.subr.mxu0 0.0
      %923 = vmatpush1.msra.mxu0 0.0
      %924 = vmatprep.subr.mxu0 0.0
      %925 = vmatpush1.msra.mxu0 0.0
      %926 = vmatprep.subr.mxu0 0.0
      %927 = vmatpush1.msra.mxu0 0.0
      %928 = vmatprep.subr.mxu0 0.0
      %929 = vmatpush1.msra.mxu0 0.0
      %930 = vmatprep.subr.mxu0 0.0
      %931 = vmatpush1.msra.mxu0 0.0
      %932 = vmatprep.subr.mxu0 0.0
      %933 = vmatpush1.msra.mxu0 0.0
      %934 = vmatprep.subr.mxu0 0.0
      %935 = vmatpush1.msra.mxu0 0.0
      %936 = vmatprep.subr.mxu0 0.0
      %937 = vmatpush1.msra.mxu0 0.0
      %938 = vmatprep.subr.mxu0 0.0
      %939 = vmatpush1.msra.mxu0 0.0
      %940 = vmatprep.subr.mxu0 0.0
      %941 = vmatpush1.msra.mxu0 0.0
      %942 = vmatprep.subr.mxu0 0.0
      %943 = vmatpush1.msra.mxu0 0.0
      %944 = vmatprep.subr.mxu0 0.0
      %945 = vmatpush1.msra.mxu0 0.0
      %946 = vmatprep.subr.mxu0 0.0
      %947 = vmatpush1.msra.mxu0 0.0
      %948 = vmatprep.subr.mxu0 0.0
      %949 = vmatpush1.msra.mxu0 0.0
      %950 = vmatprep.subr.mxu0 0.0
      %951 = vmatpush1.msra.mxu0 0.0
      %952 = vmatprep.subr.mxu0 0.0
      %953 = vmatpush1.msra.mxu0 0.0
      %954 = vmatprep.subr.mxu0 0.0
      %955 = vmatpush1.msra.mxu0 0.0
      %956 = vmatprep.subr.mxu0 0.0
      %957 = vmatpush1.msra.mxu0 0.0
      %958 = vmatprep.subr.mxu0 0.0
      %959 = vmatpush1.msra.mxu0 0.0
      %960 = vmatprep.subr.mxu0 0.0
      %961 = vmatpush1.msra.mxu0 0.0
      %962 = vmatprep.subr.mxu0 0.0
      %963 = vmatpush1.msra.mxu0 0.0
      %964 = vmatprep.subr.mxu0 0.0
      %965 = vmatpush1.msra.mxu0 0.0
      %966 = vmatprep.subr.mxu0 0.0
      %967 = vmatpush1.msra.mxu0 0.0
      %968 = vmatprep.subr.mxu0 0.0
      %969 = vmatpush1.msra.mxu0 0.0
      %970 = vmatprep.subr.mxu0 0.0
      %971 = vmatpush1.msra.mxu0 0.0
      %972 = vmatprep.subr.mxu0 0.0
      %973 = vmatpush1.msra.mxu0 0.0
      %974 = vmatprep.subr.mxu0 0.0
      %975 = vmatpush1.msra.mxu0 0.0
      %976 = vmatprep.subr.mxu0 0.0
      %977 = vmatpush1.msra.mxu0 0.0
      %978 = vmatprep.subr.mxu0 0.0
      %979 = vmatpush1.msra.mxu0 0.0
      %980 = vmatprep.subr.mxu0 0.0
      %981 = vmatpush1.msra.mxu0 0.0
      %982 = vmatprep.mubr.f32.mxu0 0.0
      %983 = vmatmul.mubr.f32.gmra.mrb[0].mxu0 %v839
      %v984 = vpop.f32.mrb[0].mxu0
      %v985 = vadd.f32 0.0, %v984
      %v986 = vpop.f32.mrb[0].mxu0
      %987 = vdwg.mxu0
      %v988 = vadd.f32 %v821, %v914
      %v989 = vadd.f32 %v822, %v916
      %v990 = vadd.f32 %v823, %v985
      %s991 = scalar_lea.vmem %s1, 40
      %v992 = vld [vmem:[%s991] sm:$0xff]
      %993 = vrot.lane.b32.xlu0 %v167, 108
      %v994 = vpop.permute.xlu0 %993
      %995 = vrot.lane.b32.xlu0 %v174, 108
      %v996 = vpop.permute.xlu0 %995
      %997 = vrot.lane.b32.xlu0 %v168, 108
      %v998 = vpop.permute.xlu0 %997
      %999 = vrot.lane.b32.xlu0 %v175, 108
      %v1000 = vpop.permute.xlu0 %999
      %vm1001 = vcmask 883712
      %v1002 = vsel %vm1001, %v994, %v996
      %v1003 = vsel %vm1001, %v996, %v998
      %v1004 = vsel %vm1001, %v998, %v1000
      %v1006 = vsel %vm188, %v992, 0
      %v1008 = vsel %vm192, %v1002, 0
      %v1010 = vsel %vm192, %v1003, 0
      %v1012 = vsel %vm192, %v1004, 0
      %1014 = vmatprep.subr.mxu0 %v1010
      %1015 = vmatpush1.msra.mxu0 %v1008
      %1016 = vmatprep.subr.mxu0 0.0
      %1017 = vmatpush1.msra.mxu0 0.0
      %1018 = vmatprep.subr.mxu0 0.0
      %1019 = vmatpush1.msra.mxu0 0.0
      %1020 = vmatprep.subr.mxu0 0.0
      %1021 = vmatpush1.msra.mxu0 0.0
      %1022 = vmatprep.subr.mxu0 0.0
      %1023 = vmatpush1.msra.mxu0 0.0
      %1024 = vmatprep.subr.mxu0 0.0
      %1025 = vmatpush1.msra.mxu0 0.0
      %1026 = vmatprep.subr.mxu0 0.0
      %1027 = vmatpush1.msra.mxu0 0.0
      %1028 = vmatprep.subr.mxu0 0.0
      %1029 = vmatpush1.msra.mxu0 0.0
      %1030 = vmatprep.subr.mxu0 0.0
      %1031 = vmatpush1.msra.mxu0 0.0
      %1032 = vmatprep.subr.mxu0 0.0
      %1033 = vmatpush1.msra.mxu0 0.0
      %1034 = vmatprep.subr.mxu0 0.0
      %1035 = vmatpush1.msra.mxu0 0.0
      %1036 = vmatprep.subr.mxu0 0.0
      %1037 = vmatpush1.msra.mxu0 0.0
      %1038 = vmatprep.subr.mxu0 0.0
      %1039 = vmatpush1.msra.mxu0 0.0
      %1040 = vmatprep.subr.mxu0 0.0
      %1041 = vmatpush1.msra.mxu0 0.0
      %1042 = vmatprep.subr.mxu0 0.0
      %1043 = vmatpush1.msra.mxu0 0.0
      %1044 = vmatprep.subr.mxu0 0.0
      %1045 = vmatpush1.msra.mxu0 0.0
      %1046 = vmatprep.subr.mxu0 0.0
      %1047 = vmatpush1.msra.mxu0 0.0
      %1048 = vmatprep.subr.mxu0 0.0
      %1049 = vmatpush1.msra.mxu0 0.0
      %1050 = vmatprep.subr.mxu0 0.0
      %1051 = vmatpush1.msra.mxu0 0.0
      %1052 = vmatprep.subr.mxu0 0.0
      %1053 = vmatpush1.msra.mxu0 0.0
      %1054 = vmatprep.subr.mxu0 0.0
      %1055 = vmatpush1.msra.mxu0 0.0
      %1056 = vmatprep.subr.mxu0 0.0
      %1057 = vmatpush1.msra.mxu0 0.0
      %1058 = vmatprep.subr.mxu0 0.0
      %1059 = vmatpush1.msra.mxu0 0.0
      %1060 = vmatprep.subr.mxu0 0.0
      %1061 = vmatpush1.msra.mxu0 0.0
      %1062 = vmatprep.subr.mxu0 0.0
      %1063 = vmatpush1.msra.mxu0 0.0
      %1064 = vmatprep.subr.mxu0 0.0
      %1065 = vmatpush1.msra.mxu0 0.0
      %1066 = vmatprep.subr.mxu0 0.0
      %1067 = vmatpush1.msra.mxu0 0.0
      %1068 = vmatprep.subr.mxu0 0.0
      %1069 = vmatpush1.msra.mxu0 0.0
      %1070 = vmatprep.subr.mxu0 0.0
      %1071 = vmatpush1.msra.mxu0 0.0
      %1072 = vmatprep.subr.mxu0 0.0
      %1073 = vmatpush1.msra.mxu0 0.0
      %1074 = vmatprep.subr.mxu0 0.0
      %1075 = vmatpush1.msra.mxu0 0.0
      %1076 = vmatprep.subr.mxu0 0.0
      %1077 = vmatpush1.msra.mxu0 0.0
      %1078 = vmatprep.mubr.f32.mxu0 0.0
      %1079 = vmatmul.mubr.f32.gmra.mrb[0].mxu0 %v1006
      %v1080 = vpop.f32.mrb[0].mxu0
      %v1081 = vadd.f32 0.0, %v1080
      %v1082 = vpop.f32.mrb[0].mxu0
      %v1083 = vadd.f32 0.0, %v1082
      %1084 = vdwg.mxu0
      %1085 = vmatprep.subr.mxu0 0.0
      %1086 = vmatpush1.msra.mxu0 %v1012
      %1087 = vmatprep.subr.mxu0 0.0
      %1088 = vmatpush1.msra.mxu0 0.0
      %1089 = vmatprep.subr.mxu0 0.0
      %1090 = vmatpush1.msra.mxu0 0.0
      %1091 = vmatprep.subr.mxu0 0.0
      %1092 = vmatpush1.msra.mxu0 0.0
      %1093 = vmatprep.subr.mxu0 0.0
      %1094 = vmatpush1.msra.mxu0 0.0
      %1095 = vmatprep.subr.mxu0 0.0
      %1096 = vmatpush1.msra.mxu0 0.0
      %1097 = vmatprep.subr.mxu0 0.0
      %1098 = vmatpush1.msra.mxu0 0.0
      %1099 = vmatprep.subr.mxu0 0.0
      %1100 = vmatpush1.msra.mxu0 0.0
      %1101 = vmatprep.subr.mxu0 0.0
      %1102 = vmatpush1.msra.mxu0 0.0
      %1103 = vmatprep.subr.mxu0 0.0
      %1104 = vmatpush1.msra.mxu0 0.0
      %1105 = vmatprep.subr.mxu0 0.0
      %1106 = vmatpush1.msra.mxu0 0.0
      %1107 = vmatprep.subr.mxu0 0.0
      %1108 = vmatpush1.msra.mxu0 0.0
      %1109 = vmatprep.subr.mxu0 0.0
      %1110 = vmatpush1.msra.mxu0 0.0
      %1111 = vmatprep.subr.mxu0 0.0
      %1112 = vmatpush1.msra.mxu0 0.0
      %1113 = vmatprep.subr.mxu0 0.0
      %1114 = vmatpush1.msra.mxu0 0.0
      %1115 = vmatprep.subr.mxu0 0.0
      %1116 = vmatpush1.msra.mxu0 0.0
      %1117 = vmatprep.subr.mxu0 0.0
      %1118 = vmatpush1.msra.mxu0 0.0
      %1119 = vmatprep.subr.mxu0 0.0
      %1120 = vmatpush1.msra.mxu0 0.0
      %1121 = vmatprep.subr.mxu0 0.0
      %1122 = vmatpush1.msra.mxu0 0.0
      %1123 = vmatprep.subr.mxu0 0.0
      %1124 = vmatpush1.msra.mxu0 0.0
      %1125 = vmatprep.subr.mxu0 0.0
      %1126 = vmatpush1.msra.mxu0 0.0
      %1127 = vmatprep.subr.mxu0 0.0
      %1128 = vmatpush1.msra.mxu0 0.0
      %1129 = vmatprep.subr.mxu0 0.0
      %1130 = vmatpush1.msra.mxu0 0.0
      %1131 = vmatprep.subr.mxu0 0.0
      %1132 = vmatpush1.msra.mxu0 0.0
      %1133 = vmatprep.subr.mxu0 0.0
      %1134 = vmatpush1.msra.mxu0 0.0
      %1135 = vmatprep.subr.mxu0 0.0
      %1136 = vmatpush1.msra.mxu0 0.0
      %1137 = vmatprep.subr.mxu0 0.0
      %1138 = vmatpush1.msra.mxu0 0.0
      %1139 = vmatprep.subr.mxu0 0.0
      %1140 = vmatpush1.msra.mxu0 0.0
      %1141 = vmatprep.subr.mxu0 0.0
      %1142 = vmatpush1.msra.mxu0 0.0
      %1143 = vmatprep.subr.mxu0 0.0
      %1144 = vmatpush1.msra.mxu0 0.0
      %1145 = vmatprep.subr.mxu0 0.0
      %1146 = vmatpush1.msra.mxu0 0.0
      %1147 = vmatprep.subr.mxu0 0.0
      %1148 = vmatpush1.msra.mxu0 0.0
      %1149 = vmatprep.mubr.f32.mxu0 0.0
      %1150 = vmatmul.mubr.f32.gmra.mrb[0].mxu0 %v1006
      %v1151 = vpop.f32.mrb[0].mxu0
      %v1152 = vadd.f32 0.0, %v1151
      %v1153 = vpop.f32.mrb[0].mxu0
      %1154 = vdwg.mxu0
      %v1155 = vadd.f32 %v988, %v1081
      %v1156 = vadd.f32 %v989, %v1083
      %v1157 = vadd.f32 %v990, %v1152
      %s1158 = scalar_lea.vmem %s1, 48
      %v1159 = vld [vmem:[%s1158] sm:$0xff]
      %1160 = vrot.lane.b32.xlu0 %v167, 92
      %v1161 = vpop.permute.xlu0 %1160
      %1162 = vrot.lane.b32.xlu0 %v174, 92
      %v1163 = vpop.permute.xlu0 %1162
      %1164 = vrot.lane.b32.xlu0 %v168, 92
      %v1165 = vpop.permute.xlu0 %1164
      %1166 = vrot.lane.b32.xlu0 %v175, 92
      %v1167 = vpop.permute.xlu0 %1166
      %vm1168 = vcmask 752640
      %v1169 = vsel %vm1168, %v1161, %v1163
      %v1170 = vsel %vm1168, %v1163, %v1165
      %v1171 = vsel %vm1168, %v1165, %v1167
      %v1173 = vsel %vm188, %v1159, 0
      %v1175 = vsel %vm192, %v1169, 0
      %v1177 = vsel %vm192, %v1170, 0
      %v1179 = vsel %vm192, %v1171, 0
      %1181 = vmatprep.subr.mxu0 %v1177
      %1182 = vmatpush1.msra.mxu0 %v1175
      %1183 = vmatprep.subr.mxu0 0.0
      %1184 = vmatpush1.msra.mxu0 0.0
      %1185 = vmatprep.subr.mxu0 0.0
      %1186 = vmatpush1.msra.mxu0 0.0
      %1187 = vmatprep.subr.mxu0 0.0
      %1188 = vmatpush1.msra.mxu0 0.0
      %1189 = vmatprep.subr.mxu0 0.0
      %1190 = vmatpush1.msra.mxu0 0.0
      %1191 = vmatprep.subr.mxu0 0.0
      %1192 = vmatpush1.msra.mxu0 0.0
      %1193 = vmatprep.subr.mxu0 0.0
      %1194 = vmatpush1.msra.mxu0 0.0
      %1195 = vmatprep.subr.mxu0 0.0
      %1196 = vmatpush1.msra.mxu0 0.0
      %1197 = vmatprep.subr.mxu0 0.0
      %1198 = vmatpush1.msra.mxu0 0.0
      %1199 = vmatprep.subr.mxu0 0.0
      %1200 = vmatpush1.msra.mxu0 0.0
      %1201 = vmatprep.subr.mxu0 0.0
      %1202 = vmatpush1.msra.mxu0 0.0
      %1203 = vmatprep.subr.mxu0 0.0
      %1204 = vmatpush1.msra.mxu0 0.0
      %1205 = vmatprep.subr.mxu0 0.0
      %1206 = vmatpush1.msra.mxu0 0.0
      %1207 = vmatprep.subr.mxu0 0.0
      %1208 = vmatpush1.msra.mxu0 0.0
      %1209 = vmatprep.subr.mxu0 0.0
      %1210 = vmatpush1.msra.mxu0 0.0
      %1211 = vmatprep.subr.mxu0 0.0
      %1212 = vmatpush1.msra.mxu0 0.0
      %1213 = vmatprep.subr.mxu0 0.0
      %1214 = vmatpush1.msra.mxu0 0.0
      %1215 = vmatprep.subr.mxu0 0.0
      %1216 = vmatpush1.msra.mxu0 0.0
      %1217 = vmatprep.subr.mxu0 0.0
      %1218 = vmatpush1.msra.mxu0 0.0
      %1219 = vmatprep.subr.mxu0 0.0
      %1220 = vmatpush1.msra.mxu0 0.0
      %1221 = vmatprep.subr.mxu0 0.0
      %1222 = vmatpush1.msra.mxu0 0.0
      %1223 = vmatprep.subr.mxu0 0.0
      %1224 = vmatpush1.msra.mxu0 0.0
      %1225 = vmatprep.subr.mxu0 0.0
      %1226 = vmatpush1.msra.mxu0 0.0
      %1227 = vmatprep.subr.mxu0 0.0
      %1228 = vmatpush1.msra.mxu0 0.0
      %1229 = vmatprep.subr.mxu0 0.0
      %1230 = vmatpush1.msra.mxu0 0.0
      %1231 = vmatprep.subr.mxu0 0.0
      %1232 = vmatpush1.msra.mxu0 0.0
      %1233 = vmatprep.subr.mxu0 0.0
      %1234 = vmatpush1.msra.mxu0 0.0
      %1235 = vmatprep.subr.mxu0 0.0
      %1236 = vmatpush1.msra.mxu0 0.0
      %1237 = vmatprep.subr.mxu0 0.0
      %1238 = vmatpush1.msra.mxu0 0.0
      %1239 = vmatprep.subr.mxu0 0.0
      %1240 = vmatpush1.msra.mxu0 0.0
      %1241 = vmatprep.subr.mxu0 0.0
      %1242 = vmatpush1.msra.mxu0 0.0
      %1243 = vmatprep.subr.mxu0 0.0
      %1244 = vmatpush1.msra.mxu0 0.0
      %1245 = vmatprep.mubr.f32.mxu0 0.0
      %1246 = vmatmul.mubr.f32.gmra.mrb[0].mxu0 %v1173
      %v1247 = vpop.f32.mrb[0].mxu0
      %v1248 = vadd.f32 0.0, %v1247
      %v1249 = vpop.f32.mrb[0].mxu0
      %v1250 = vadd.f32 0.0, %v1249
      %1251 = vdwg.mxu0
      %1252 = vmatprep.subr.mxu0 0.0
      %1253 = vmatpush1.msra.mxu0 %v1179
      %1254 = vmatprep.subr.mxu0 0.0
      %1255 = vmatpush1.msra.mxu0 0.0
      %1256 = vmatprep.subr.mxu0 0.0
      %1257 = vmatpush1.msra.mxu0 0.0
      %1258 = vmatprep.subr.mxu0 0.0
      %1259 = vmatpush1.msra.mxu0 0.0
      %1260 = vmatprep.subr.mxu0 0.0
      %1261 = vmatpush1.msra.mxu0 0.0
      %1262 = vmatprep.subr.mxu0 0.0
      %1263 = vmatpush1.msra.mxu0 0.0
      %1264 = vmatprep.subr.mxu0 0.0
      %1265 = vmatpush1.msra.mxu0 0.0
      %1266 = vmatprep.subr.mxu0 0.0
      %1267 = vmatpush1.msra.mxu0 0.0
      %1268 = vmatprep.subr.mxu0 0.0
      %1269 = vmatpush1.msra.mxu0 0.0
      %1270 = vmatprep.subr.mxu0 0.0
      %1271 = vmatpush1.msra.mxu0 0.0
      %1272 = vmatprep.subr.mxu0 0.0
      %1273 = vmatpush1.msra.mxu0 0.0
      %1274 = vmatprep.subr.mxu0 0.0
      %1275 = vmatpush1.msra.mxu0 0.0
      %1276 = vmatprep.subr.mxu0 0.0
      %1277 = vmatpush1.msra.mxu0 0.0
      %1278 = vmatprep.subr.mxu0 0.0
      %1279 = vmatpush1.msra.mxu0 0.0
      %1280 = vmatprep.subr.mxu0 0.0
      %1281 = vmatpush1.msra.mxu0 0.0
      %1282 = vmatprep.subr.mxu0 0.0
      %1283 = vmatpush1.msra.mxu0 0.0
      %1284 = vmatprep.subr.mxu0 0.0
      %1285 = vmatpush1.msra.mxu0 0.0
      %1286 = vmatprep.subr.mxu0 0.0
      %1287 = vmatpush1.msra.mxu0 0.0
      %1288 = vmatprep.subr.mxu0 0.0
      %1289 = vmatpush1.msra.mxu0 0.0
      %1290 = vmatprep.subr.mxu0 0.0
      %1291 = vmatpush1.msra.mxu0 0.0
      %1292 = vmatprep.subr.mxu0 0.0
      %1293 = vmatpush1.msra.mxu0 0.0
      %1294 = vmatprep.subr.mxu0 0.0
      %1295 = vmatpush1.msra.mxu0 0.0
      %1296 = vmatprep.subr.mxu0 0.0
      %1297 = vmatpush1.msra.mxu0 0.0
      %1298 = vmatprep.subr.mxu0 0.0
      %1299 = vmatpush1.msra.mxu0 0.0
      %1300 = vmatprep.subr.mxu0 0.0
      %1301 = vmatpush1.msra.mxu0 0.0
      %1302 = vmatprep.subr.mxu0 0.0
      %1303 = vmatpush1.msra.mxu0 0.0
      %1304 = vmatprep.subr.mxu0 0.0
      %1305 = vmatpush1.msra.mxu0 0.0
      %1306 = vmatprep.subr.mxu0 0.0
      %1307 = vmatpush1.msra.mxu0 0.0
      %1308 = vmatprep.subr.mxu0 0.0
      %1309 = vmatpush1.msra.mxu0 0.0
      %1310 = vmatprep.subr.mxu0 0.0
      %1311 = vmatpush1.msra.mxu0 0.0
      %1312 = vmatprep.subr.mxu0 0.0
      %1313 = vmatpush1.msra.mxu0 0.0
      %1314 = vmatprep.subr.mxu0 0.0
      %1315 = vmatpush1.msra.mxu0 0.0
      %1316 = vmatprep.mubr.f32.mxu0 0.0
      %1317 = vmatmul.mubr.f32.gmra.mrb[0].mxu0 %v1173
      %v1318 = vpop.f32.mrb[0].mxu0
      %v1319 = vadd.f32 0.0, %v1318
      %v1320 = vpop.f32.mrb[0].mxu0
      %1321 = vdwg.mxu0
      %v1322 = vadd.f32 %v1155, %v1248
      %v1323 = vadd.f32 %v1156, %v1250
      %v1324 = vadd.f32 %v1157, %v1319
      %s1325 = scalar_lea.vmem %s1, 56
      %v1326 = vld [vmem:[%s1325] sm:$0xff]
      %1327 = vrot.lane.b32.xlu0 %v167, 91
      %v1328 = vpop.permute.xlu0 %1327
      %1329 = vrot.lane.b32.xlu0 %v174, 91
      %v1330 = vpop.permute.xlu0 %1329
      %1331 = vrot.lane.b32.xlu0 %v168, 91
      %v1332 = vpop.permute.xlu0 %1331
      %1333 = vrot.lane.b32.xlu0 %v175, 91
      %v1334 = vpop.permute.xlu0 %1333
      %vm1335 = vcmask 744448
      %v1336 = vsel %vm1335, %v1328, %v1330
      %v1337 = vsel %vm1335, %v1330, %v1332
      %v1338 = vsel %vm1335, %v1332, %v1334
      %v1340 = vsel %vm188, %v1326, 0
      %v1342 = vsel %vm192, %v1336, 0
      %v1344 = vsel %vm192, %v1337, 0
      %v1346 = vsel %vm192, %v1338, 0
      %1348 = vmatprep.subr.mxu0 %v1344
      %1349 = vmatpush1.msra.mxu0 %v1342
      %1350 = vmatprep.subr.mxu0 0.0
      %1351 = vmatpush1.msra.mxu0 0.0
      %1352 = vmatprep.subr.mxu0 0.0
      %1353 = vmatpush1.msra.mxu0 0.0
      %1354 = vmatprep.subr.mxu0 0.0
      %1355 = vmatpush1.msra.mxu0 0.0
      %1356 = vmatprep.subr.mxu0 0.0
      %1357 = vmatpush1.msra.mxu0 0.0
      %1358 = vmatprep.subr.mxu0 0.0
      %1359 = vmatpush1.msra.mxu0 0.0
      %1360 = vmatprep.subr.mxu0 0.0
      %1361 = vmatpush1.msra.mxu0 0.0
      %1362 = vmatprep.subr.mxu0 0.0
      %1363 = vmatpush1.msra.mxu0 0.0
      %1364 = vmatprep.subr.mxu0 0.0
      %1365 = vmatpush1.msra.mxu0 0.0
      %1366 = vmatprep.subr.mxu0 0.0
      %1367 = vmatpush1.msra.mxu0 0.0
      %1368 = vmatprep.subr.mxu0 0.0
      %1369 = vmatpush1.msra.mxu0 0.0
      %1370 = vmatprep.subr.mxu0 0.0
      %1371 = vmatpush1.msra.mxu0 0.0
      %1372 = vmatprep.subr.mxu0 0.0
      %1373 = vmatpush1.msra.mxu0 0.0
      %1374 = vmatprep.subr.mxu0 0.0
      %1375 = vmatpush1.msra.mxu0 0.0
      %1376 = vmatprep.subr.mxu0 0.0
      %1377 = vmatpush1.msra.mxu0 0.0
      %1378 = vmatprep.subr.mxu0 0.0
      %1379 = vmatpush1.msra.mxu0 0.0
      %1380 = vmatprep.subr.mxu0 0.0
      %1381 = vmatpush1.msra.mxu0 0.0
      %1382 = vmatprep.subr.mxu0 0.0
      %1383 = vmatpush1.msra.mxu0 0.0
      %1384 = vmatprep.subr.mxu0 0.0
      %1385 = vmatpush1.msra.mxu0 0.0
      %1386 = vmatprep.subr.mxu0 0.0
      %1387 = vmatpush1.msra.mxu0 0.0
      %1388 = vmatprep.subr.mxu0 0.0
      %1389 = vmatpush1.msra.mxu0 0.0
      %1390 = vmatprep.subr.mxu0 0.0
      %1391 = vmatpush1.msra.mxu0 0.0
      %1392 = vmatprep.subr.mxu0 0.0
      %1393 = vmatpush1.msra.mxu0 0.0
      %1394 = vmatprep.subr.mxu0 0.0
      %1395 = vmatpush1.msra.mxu0 0.0
      %1396 = vmatprep.subr.mxu0 0.0
      %1397 = vmatpush1.msra.mxu0 0.0
      %1398 = vmatprep.subr.mxu0 0.0
      %1399 = vmatpush1.msra.mxu0 0.0
      %1400 = vmatprep.subr.mxu0 0.0
      %1401 = vmatpush1.msra.mxu0 0.0
      %1402 = vmatprep.subr.mxu0 0.0
      %1403 = vmatpush1.msra.mxu0 0.0
      %1404 = vmatprep.subr.mxu0 0.0
      %1405 = vmatpush1.msra.mxu0 0.0
      %1406 = vmatprep.subr.mxu0 0.0
      %1407 = vmatpush1.msra.mxu0 0.0
      %1408 = vmatprep.subr.mxu0 0.0
      %1409 = vmatpush1.msra.mxu0 0.0
      %1410 = vmatprep.subr.mxu0 0.0
      %1411 = vmatpush1.msra.mxu0 0.0
      %1412 = vmatprep.mubr.f32.mxu0 0.0
      %1413 = vmatmul.mubr.f32.gmra.mrb[0].mxu0 %v1340
      %v1414 = vpop.f32.mrb[0].mxu0
      %v1415 = vadd.f32 0.0, %v1414
      %v1416 = vpop.f32.mrb[0].mxu0
      %v1417 = vadd.f32 0.0, %v1416
      %1418 = vdwg.mxu0
      %1419 = vmatprep.subr.mxu0 0.0
      %1420 = vmatpush1.msra.mxu0 %v1346
      %1421 = vmatprep.subr.mxu0 0.0
      %1422 = vmatpush1.msra.mxu0 0.0
      %1423 = vmatprep.subr.mxu0 0.0
      %1424 = vmatpush1.msra.mxu0 0.0
      %1425 = vmatprep.subr.mxu0 0.0
      %1426 = vmatpush1.msra.mxu0 0.0
      %1427 = vmatprep.subr.mxu0 0.0
      %1428 = vmatpush1.msra.mxu0 0.0
      %1429 = vmatprep.subr.mxu0 0.0
      %1430 = vmatpush1.msra.mxu0 0.0
      %1431 = vmatprep.subr.mxu0 0.0
      %1432 = vmatpush1.msra.mxu0 0.0
      %1433 = vmatprep.subr.mxu0 0.0
      %1434 = vmatpush1.msra.mxu0 0.0
      %1435 = vmatprep.subr.mxu0 0.0
      %1436 = vmatpush1.msra.mxu0 0.0
      %1437 = vmatprep.subr.mxu0 0.0
      %1438 = vmatpush1.msra.mxu0 0.0
      %1439 = vmatprep.subr.mxu0 0.0
      %1440 = vmatpush1.msra.mxu0 0.0
      %1441 = vmatprep.subr.mxu0 0.0
      %1442 = vmatpush1.msra.mxu0 0.0
      %1443 = vmatprep.subr.mxu0 0.0
      %1444 = vmatpush1.msra.mxu0 0.0
      %1445 = vmatprep.subr.mxu0 0.0
      %1446 = vmatpush1.msra.mxu0 0.0
      %1447 = vmatprep.subr.mxu0 0.0
      %1448 = vmatpush1.msra.mxu0 0.0
      %1449 = vmatprep.subr.mxu0 0.0
      %1450 = vmatpush1.msra.mxu0 0.0
      %1451 = vmatprep.subr.mxu0 0.0
      %1452 = vmatpush1.msra.mxu0 0.0
      %1453 = vmatprep.subr.mxu0 0.0
      %1454 = vmatpush1.msra.mxu0 0.0
      %1455 = vmatprep.subr.mxu0 0.0
      %1456 = vmatpush1.msra.mxu0 0.0
      %1457 = vmatprep.subr.mxu0 0.0
      %1458 = vmatpush1.msra.mxu0 0.0
      %1459 = vmatprep.subr.mxu0 0.0
      %1460 = vmatpush1.msra.mxu0 0.0
      %1461 = vmatprep.subr.mxu0 0.0
      %1462 = vmatpush1.msra.mxu0 0.0
      %1463 = vmatprep.subr.mxu0 0.0
      %1464 = vmatpush1.msra.mxu0 0.0
      %1465 = vmatprep.subr.mxu0 0.0
      %1466 = vmatpush1.msra.mxu0 0.0
      %1467 = vmatprep.subr.mxu0 0.0
      %1468 = vmatpush1.msra.mxu0 0.0
      %1469 = vmatprep.subr.mxu0 0.0
      %1470 = vmatpush1.msra.mxu0 0.0
      %1471 = vmatprep.subr.mxu0 0.0
      %1472 = vmatpush1.msra.mxu0 0.0
      %1473 = vmatprep.subr.mxu0 0.0
      %1474 = vmatpush1.msra.mxu0 0.0
      %1475 = vmatprep.subr.mxu0 0.0
      %1476 = vmatpush1.msra.mxu0 0.0
      %1477 = vmatprep.subr.mxu0 0.0
      %1478 = vmatpush1.msra.mxu0 0.0
      %1479 = vmatprep.subr.mxu0 0.0
      %1480 = vmatpush1.msra.mxu0 0.0
      %1481 = vmatprep.subr.mxu0 0.0
      %1482 = vmatpush1.msra.mxu0 0.0
      %1483 = vmatprep.mubr.f32.mxu0 0.0
      %1484 = vmatmul.mubr.f32.gmra.mrb[0].mxu0 %v1340
      %v1485 = vpop.f32.mrb[0].mxu0
      %v1486 = vadd.f32 0.0, %v1485
      %v1487 = vpop.f32.mrb[0].mxu0
      %1488 = vdwg.mxu0
      %v1489 = vadd.f32 %v1322, %v1415
      %v1490 = vadd.f32 %v1323, %v1417
      %v1491 = vadd.f32 %v1324, %v1486
      %s1492 = scalar_lea.vmem %s1, 64
      %v1493 = vld [vmem:[%s1492] sm:$0xff]
      %1494 = vrot.lane.b32.xlu0 %v167, 90
      %v1495 = vpop.permute.xlu0 %1494
      %1496 = vrot.lane.b32.xlu0 %v174, 90
      %v1497 = vpop.permute.xlu0 %1496
      %1498 = vrot.lane.b32.xlu0 %v168, 90
      %v1499 = vpop.permute.xlu0 %1498
      %1500 = vrot.lane.b32.xlu0 %v175, 90
      %v1501 = vpop.permute.xlu0 %1500
      %vm1502 = vcmask 736256
      %v1503 = vsel %vm1502, %v1495, %v1497
      %v1504 = vsel %vm1502, %v1497, %v1499
      %v1505 = vsel %vm1502, %v1499, %v1501
      %v1507 = vsel %vm188, %v1493, 0
      %v1509 = vsel %vm192, %v1503, 0
      %v1511 = vsel %vm192, %v1504, 0
      %v1513 = vsel %vm192, %v1505, 0
      %1515 = vmatprep.subr.mxu0 %v1511
      %1516 = vmatpush1.msra.mxu0 %v1509
      %1517 = vmatprep.subr.mxu0 0.0
      %1518 = vmatpush1.msra.mxu0 0.0
      %1519 = vmatprep.subr.mxu0 0.0
      %1520 = vmatpush1.msra.mxu0 0.0
      %1521 = vmatprep.subr.mxu0 0.0
      %1522 = vmatpush1.msra.mxu0 0.0
      %1523 = vmatprep.subr.mxu0 0.0
      %1524 = vmatpush1.msra.mxu0 0.0
      %1525 = vmatprep.subr.mxu0 0.0
      %1526 = vmatpush1.msra.mxu0 0.0
      %1527 = vmatprep.subr.mxu0 0.0
      %1528 = vmatpush1.msra.mxu0 0.0
      %1529 = vmatprep.subr.mxu0 0.0
      %1530 = vmatpush1.msra.mxu0 0.0
      %1531 = vmatprep.subr.mxu0 0.0
      %1532 = vmatpush1.msra.mxu0 0.0
      %1533 = vmatprep.subr.mxu0 0.0
      %1534 = vmatpush1.msra.mxu0 0.0
      %1535 = vmatprep.subr.mxu0 0.0
      %1536 = vmatpush1.msra.mxu0 0.0
      %1537 = vmatprep.subr.mxu0 0.0
      %1538 = vmatpush1.msra.mxu0 0.0
      %1539 = vmatprep.subr.mxu0 0.0
      %1540 = vmatpush1.msra.mxu0 0.0
      %1541 = vmatprep.subr.mxu0 0.0
      %1542 = vmatpush1.msra.mxu0 0.0
      %1543 = vmatprep.subr.mxu0 0.0
      %1544 = vmatpush1.msra.mxu0 0.0
      %1545 = vmatprep.subr.mxu0 0.0
      %1546 = vmatpush1.msra.mxu0 0.0
      %1547 = vmatprep.subr.mxu0 0.0
      %1548 = vmatpush1.msra.mxu0 0.0
      %1549 = vmatprep.subr.mxu0 0.0
      %1550 = vmatpush1.msra.mxu0 0.0
      %1551 = vmatprep.subr.mxu0 0.0
      %1552 = vmatpush1.msra.mxu0 0.0
      %1553 = vmatprep.subr.mxu0 0.0
      %1554 = vmatpush1.msra.mxu0 0.0
      %1555 = vmatprep.subr.mxu0 0.0
      %1556 = vmatpush1.msra.mxu0 0.0
      %1557 = vmatprep.subr.mxu0 0.0
      %1558 = vmatpush1.msra.mxu0 0.0
      %1559 = vmatprep.subr.mxu0 0.0
      %1560 = vmatpush1.msra.mxu0 0.0
      %1561 = vmatprep.subr.mxu0 0.0
      %1562 = vmatpush1.msra.mxu0 0.0
      %1563 = vmatprep.subr.mxu0 0.0
      %1564 = vmatpush1.msra.mxu0 0.0
      %1565 = vmatprep.subr.mxu0 0.0
      %1566 = vmatpush1.msra.mxu0 0.0
      %1567 = vmatprep.subr.mxu0 0.0
      %1568 = vmatpush1.msra.mxu0 0.0
      %1569 = vmatprep.subr.mxu0 0.0
      %1570 = vmatpush1.msra.mxu0 0.0
      %1571 = vmatprep.subr.mxu0 0.0
      %1572 = vmatpush1.msra.mxu0 0.0
      %1573 = vmatprep.subr.mxu0 0.0
      %1574 = vmatpush1.msra.mxu0 0.0
      %1575 = vmatprep.subr.mxu0 0.0
      %1576 = vmatpush1.msra.mxu0 0.0
      %1577 = vmatprep.subr.mxu0 0.0
      %1578 = vmatpush1.msra.mxu0 0.0
      %1579 = vmatprep.mubr.f32.mxu0 0.0
      %1580 = vmatmul.mubr.f32.gmra.mrb[0].mxu0 %v1507
      %v1581 = vpop.f32.mrb[0].mxu0
      %v1582 = vadd.f32 0.0, %v1581
      %v1583 = vpop.f32.mrb[0].mxu0
      %v1584 = vadd.f32 0.0, %v1583
      %1585 = vdwg.mxu0
      %1586 = vmatprep.subr.mxu0 0.0
      %1587 = vmatpush1.msra.mxu0 %v1513
      %1588 = vmatprep.subr.mxu0 0.0
      %1589 = vmatpush1.msra.mxu0 0.0
      %1590 = vmatprep.subr.mxu0 0.0
      %1591 = vmatpush1.msra.mxu0 0.0
      %1592 = vmatprep.subr.mxu0 0.0
      %1593 = vmatpush1.msra.mxu0 0.0
      %1594 = vmatprep.subr.mxu0 0.0
      %1595 = vmatpush1.msra.mxu0 0.0
      %1596 = vmatprep.subr.mxu0 0.0
      %1597 = vmatpush1.msra.mxu0 0.0
      %1598 = vmatprep.subr.mxu0 0.0
      %1599 = vmatpush1.msra.mxu0 0.0
      %1600 = vmatprep.subr.mxu0 0.0
      %1601 = vmatpush1.msra.mxu0 0.0
      %1602 = vmatprep.subr.mxu0 0.0
      %1603 = vmatpush1.msra.mxu0 0.0
      %1604 = vmatprep.subr.mxu0 0.0
      %1605 = vmatpush1.msra.mxu0 0.0
      %1606 = vmatprep.subr.mxu0 0.0
      %1607 = vmatpush1.msra.mxu0 0.0
      %1608 = vmatprep.subr.mxu0 0.0
      %1609 = vmatpush1.msra.mxu0 0.0
      %1610 = vmatprep.subr.mxu0 0.0
      %1611 = vmatpush1.msra.mxu0 0.0
      %1612 = vmatprep.subr.mxu0 0.0
      %1613 = vmatpush1.msra.mxu0 0.0
      %1614 = vmatprep.subr.mxu0 0.0
      %1615 = vmatpush1.msra.mxu0 0.0
      %1616 = vmatprep.subr.mxu0 0.0
      %1617 = vmatpush1.msra.mxu0 0.0
      %1618 = vmatprep.subr.mxu0 0.0
      %1619 = vmatpush1.msra.mxu0 0.0
      %1620 = vmatprep.subr.mxu0 0.0
      %1621 = vmatpush1.msra.mxu0 0.0
      %1622 = vmatprep.subr.mxu0 0.0
      %1623 = vmatpush1.msra.mxu0 0.0
      %1624 = vmatprep.subr.mxu0 0.0
      %1625 = vmatpush1.msra.mxu0 0.0
      %1626 = vmatprep.subr.mxu0 0.0
      %1627 = vmatpush1.msra.mxu0 0.0
      %1628 = vmatprep.subr.mxu0 0.0
      %1629 = vmatpush1.msra.mxu0 0.0
      %1630 = vmatprep.subr.mxu0 0.0
      %1631 = vmatpush1.msra.mxu0 0.0
      %1632 = vmatprep.subr.mxu0 0.0
      %1633 = vmatpush1.msra.mxu0 0.0
      %1634 = vmatprep.subr.mxu0 0.0
      %1635 = vmatpush1.msra.mxu0 0.0
      %1636 = vmatprep.subr.mxu0 0.0
      %1637 = vmatpush1.msra.mxu0 0.0
      %1638 = vmatprep.subr.mxu0 0.0
      %1639 = vmatpush1.msra.mxu0 0.0
      %1640 = vmatprep.subr.mxu0 0.0
      %1641 = vmatpush1.msra.mxu0 0.0
      %1642 = vmatprep.subr.mxu0 0.0
      %1643 = vmatpush1.msra.mxu0 0.0
      %1644 = vmatprep.subr.mxu0 0.0
      %1645 = vmatpush1.msra.mxu0 0.0
      %1646 = vmatprep.subr.mxu0 0.0
      %1647 = vmatpush1.msra.mxu0 0.0
      %1648 = vmatprep.subr.mxu0 0.0
      %1649 = vmatpush1.msra.mxu0 0.0
      %1650 = vmatprep.mubr.f32.mxu0 0.0
      %1651 = vmatmul.mubr.f32.gmra.mrb[0].mxu0 %v1507
      %v1652 = vpop.f32.mrb[0].mxu0
      %v1653 = vadd.f32 0.0, %v1652
      %v1654 = vpop.f32.mrb[0].mxu0
      %1655 = vdwg.mxu0
      %v1656 = vadd.f32 %v1489, %v1582
      %v1657 = vadd.f32 %v1490, %v1584
      %v1658 = vadd.f32 %v1491, %v1653
      %1659 = vst [vmem:[%s165] sm:$0xff] %v1656
      %1660 = vst [vmem:[%s165 + $0x8] sm:$0xff] %v1657
      %1661 = vst [vmem:[%s165 + $0x10] sm:$0xff] %v1658
      %s1662 = smul.u32 3, %s18
      %p1663 = scmp.lt.s32.totalorder %s17, 1
      %s1664 = scalar_select %p1663, %s17, 1
      %p1665 = scmp.lt.s32.totalorder %s1662, 2
      %s1666 = scalar_select %p1665, %s1662, 2
      %s1667 = smul.addr %s1664, 3
      %s1668 = sadd.s32 %s1666, %s1667
      %s1669 = smul.addr %s1668, 8
      %s1670 = scalar_lea.vmem %s2, %s1669
      // Predicated region
      $region29: #{_lambda_.3} parent=27 // pred_check
        %p1671 = pneg %p92
      $region30: #{_lambda_.3} parent=27 // pred_check_branch
        %1673 = sbr.rel (%p1671) target = $region32
      $region31: #{_lambda_.3} parent=27 // pred_region
        %s1674 = smul.u32 3, %s18
      $region32: #{_lambda_.3} parent=27 // pred_fallthru
        _
    $region28: #{_lambda_.3} parent=5 // pred_fallthru
      _
    %p1675 = scmp.le.s32.totalorder 2, %s8
    // Predicated region
    $region33: #{_lambda_.3} parent=5 // pred_check
      %p1676 = pneg %p1675
    $region34: #{_lambda_.3} parent=5 // pred_check_branch
      %1678 = sbr.rel (%p1676) target = $region36
    $region35: #{_lambda_.3} parent=5 // pred_region
      %s1679 = ssub.s32 %s8, 2
      // Predicated region
      $region37: #{_lambda_.3} parent=35 // pred_check
        %p1680 = pneg %p98
      $region38: #{_lambda_.3} parent=35 // pred_check_branch
        %1682 = sbr.rel (%p1680) target = $region40
      $region39: #{_lambda_.3} parent=35 // pred_region
        %s1683 = smul.u32 3, %s20
        %p1684 = scmp.lt.s32.totalorder %s19, 1
        %s1685 = scalar_select %p1684, %s19, 1
        %p1686 = scmp.lt.s32.totalorder %s1683, 2
        %s1687 = scalar_select %p1686, %s1683, 2
        %s1688 = smul.addr %s1685, 3
        %s1689 = sadd.s32 %s1687, %s1688
        %s1690 = smul.addr %s1689, 8
        %s1691 = scalar_lea.vmem %s2, %s1690
      $region40: #{_lambda_.3} parent=35 // pred_fallthru
        _
    $region36: #{_lambda_.3} parent=5 // pred_fallthru
      _
  $region6: #{_lambda_.3} parent=0 // loop_footer
    %s12 = sadd.s32 1, %s8
  $region7: #{_lambda_.3} parent=0 // loop_footer_branch
    %7 = sbr.rel target = $region3
  $region8: #{_lambda_.3} parent=0 // loop_exit
    _

</llo_original>
